<compile_context>
chip_gen: v7x
topology: tpu7x:2x2x1
jax: 0.10.0
libtpu: 0.0.40
codegen_flags: <defaults>
</compile_context>

<pallas_src>
import functools

import jax
import jax.numpy as jnp
from jax import lax
from jax.experimental import pallas as pl
from jax.experimental.pallas import tpu as pltpu

EPS = 1e-5
LANE = 128


def _round_up(x, m):
    return (x + m - 1) // m * m


def _basic_block_kernel(p1_ref, w1s_ref, w2_ref, b1_ref, bc_ref, out_ref, *, H, W):
    # p1_ref:  (1, M, K1p)   bf16  host-side im2col of x (9 taps * Cin cols, padded to K1p)
    # w1s_ref: (K1p, 2*Cp)   bf16  [conv1 (bn1-scale folded) | 1x1 shortcut (bnS-scale folded)]
    # w2_ref:  (9, Cp, Cp)   bf16  conv2 taps, bn2 scale folded in
    # b1_ref:  (1, Cp)       f32   bn1 bias
    # bc_ref:  (1, Cp)       f32   bn2 bias + bnS bias
    # out_ref: (1, M, Cp)    f32
    M = H * W
    Cp = out_ref.shape[-1]

    # ---- conv1 + projection shortcut: one dense-K MXU matmul ----
    x = p1_ref[0]                                                   # (M, K1p) bf16
    z = jnp.dot(x, w1s_ref[...], preferred_element_type=jnp.float32)  # (M, 2*Cp) f32
    y1 = jnp.maximum(z[:, :Cp] + b1_ref[...], 0.0)                  # conv1 + bn1 + ReLU
    acc = z[:, Cp:]                                                 # shortcut (scale folded)

    # ---- conv2: 9 accumulated dots over aligned spatially-shifted taps ----
    # column index of each flattened pixel (p % W), built without int div/mod
    colv = lax.broadcasted_iota(jnp.int32, (H, W, Cp), 1).reshape(M, Cp)
    fz = jnp.zeros_like(y1)
    # column shifts (dj): roll by +-1 pixel along the sublane axis (XLU), mask image edges
    base_l = jnp.where(colv >= 1, pltpu.roll(y1, shift=1, axis=0), fz)       # reads col j-1
    base_r = jnp.where(colv <= W - 2, pltpu.roll(y1, shift=M - 1, axis=0), fz)  # reads col j+1
    bases = (base_l.astype(jnp.bfloat16),
             y1.astype(jnp.bfloat16),
             base_r.astype(jnp.bfloat16))
    zrow = jnp.zeros((W, Cp), jnp.bfloat16)

    for di in range(3):
        for dj in range(3):
            t = bases[dj]
            if di == 0:        # reads row i-1: shift rows down, zero-fill top (aligned concat)
                t = jnp.concatenate([zrow, t[:M - W, :]], axis=0)
            elif di == 2:      # reads row i+1: shift rows up, zero-fill bottom
                t = jnp.concatenate([t[W:, :], zrow], axis=0)
            acc = acc + jnp.dot(t, w2_ref[3 * di + dj],
                                preferred_element_type=jnp.float32)

    out_ref[0] = jnp.maximum(acc + bc_ref[...], 0.0)                # bn2+bnS bias, +sc, ReLU


def _fold_bn(gamma, beta, mean, var, eps=EPS):
    scale = gamma / jnp.sqrt(var + eps)
    bias = beta - mean * scale
    return scale, bias


@jax.jit
def basic_block_pallas(x_nchw, p):
    x = jnp.transpose(x_nchw, (0, 2, 3, 1)).astype(jnp.float32)     # NHWC
    N, H, W, Cin = x.shape
    Cout = p["w1"].shape[-1]
    Cp = _round_up(Cout, LANE)
    K1 = 9 * Cin
    K1p = _round_up(K1, LANE)
    M = H * W

    s1, b1 = _fold_bn(p["g1"], p["beta1"], p["m1"], p["v1"])
    s2, b2 = _fold_bn(p["g2"], p["beta2"], p["m2"], p["v2"])
    ss, bs = _fold_bn(p["gs"], p["betas"], p["ms"], p["vs"])

    # BN scales folded into conv weights; padded channels/rows are zero so extra lanes
    # stay exactly zero through ReLU/add and are sliced off at the end.
    w1f = (p["w1"] * s1).reshape(K1, Cout)                           # im2col row order
    w2f = (p["w2"] * s2).reshape(9, Cout, Cout)
    wsf = p["ws"] * ss                                               # (Cin, Cout)

    # conv1 and shortcut share the same im2col slab: shortcut uses the centre tap's rows.
    w1s = jnp.zeros((K1p, 2 * Cp), jnp.float32)
    w1s = w1s.at[:K1, :Cout].set(w1f)
    w1s = w1s.at[4 * Cin:5 * Cin, Cp:Cp + Cout].set(wsf)
    w1s = w1s.astype(jnp.bfloat16)

    w2p = (jnp.zeros((9, Cp, Cp), jnp.float32)
           .at[:, :Cout, :Cout].set(w2f).astype(jnp.bfloat16))
    b1p = jnp.zeros((1, Cp), jnp.float32).at[0, :Cout].set(b1)
    bcp = jnp.zeros((1, Cp), jnp.float32).at[0, :Cout].set(b2 + bs)

    # Host-side im2col: dense K (9*Cin real columns), padded once to the 128-lane width.
    xpad = jnp.pad(x, ((0, 0), (1, 1), (1, 1), (0, 0)))
    taps = [xpad[:, di:di + H, dj:dj + W, :] for di in range(3) for dj in range(3)]
    p1 = jnp.concatenate(taps, axis=-1).reshape(N, M, K1)
    p1 = jnp.pad(p1, ((0, 0), (0, 0), (0, K1p - K1))).astype(jnp.bfloat16)

    out_flat = pl.pallas_call(
        functools.partial(_basic_block_kernel, H=H, W=W),
        out_shape=jax.ShapeDtypeStruct((N, M, Cp), jnp.float32),
        grid=(N,),
        in_specs=[
            pl.BlockSpec((1, M, K1p), lambda n: (n, 0, 0)),
            pl.BlockSpec((K1p, 2 * Cp), lambda n: (0, 0)),
            pl.BlockSpec((9, Cp, Cp), lambda n: (0, 0, 0)),
            pl.BlockSpec((1, Cp), lambda n: (0, 0)),
            pl.BlockSpec((1, Cp), lambda n: (0, 0)),
        ],
        out_specs=pl.BlockSpec((1, M, Cp), lambda n: (n, 0, 0)),
        compiler_params=pltpu.CompilerParams(
            dimension_semantics=("parallel",)),
    )(p1, w1s, w2p, b1p, bcp)

    out = out_flat.reshape(N, H, W, Cp)[..., :Cout]                  # drop padded channels
    return jnp.transpose(out, (0, 3, 1, 2))                          # back to NCHW


def basic_block_ref(x_nchw, p):
    """Pure-JAX f32 reference mirroring the PyTorch forward (inference-mode BN)."""
    x = jnp.transpose(x_nchw, (0, 2, 3, 1)).astype(jnp.float32)
    dn = ("NHWC", "HWIO", "NHWC")
    hi = lax.Precision.HIGHEST

    def bn(t, g, b, m, v):
        return (t - m) / jnp.sqrt(v + EPS) * g + b

    o = lax.conv_general_dilated(x, p["w1"], (1, 1), ((1, 1), (1, 1)),
                                 dimension_numbers=dn, precision=hi)
    o = jax.nn.relu(bn(o, p["g1"], p["beta1"], p["m1"], p["v1"]))
    o = lax.conv_general_dilated(o, p["w2"], (1, 1), ((1, 1), (1, 1)),
                                 dimension_numbers=dn, precision=hi)
    o = bn(o, p["g2"], p["beta2"], p["m2"], p["v2"])
    sc = lax.conv_general_dilated(x, p["ws"].reshape(1, 1, *p["ws"].shape),
                                  (1, 1), ((0, 0), (0, 0)),
                                  dimension_numbers=dn, precision=hi)
    sc = bn(sc, p["gs"], p["betas"], p["ms"], p["vs"])
    o = jax.nn.relu(o + sc)
    return jnp.transpose(o, (0, 3, 1, 2))


def make_params(key, cin, cout):
    ks = jax.random.split(key, 15)
    f = jnp.float32
    return {
        "w1": (0.1 * jax.random.normal(ks[0], (3, 3, cin, cout))).astype(f),
        "g1": (1.0 + 0.1 * jax.random.normal(ks[1], (cout,))).astype(f),
        "beta1": (0.1 * jax.random.normal(ks[2], (cout,))).astype(f),
        "m1": (0.05 * jax.random.normal(ks[3], (cout,))).astype(f),
        "v1": (1.0 + 0.1 * jnp.abs(jax.random.normal(ks[4], (cout,)))).astype(f),
        "w2": (0.1 * jax.random.normal(ks[5], (3, 3, cout, cout))).astype(f),
        "g2": (1.0 + 0.1 * jax.random.normal(ks[6], (cout,))).astype(f),
        "beta2": (0.1 * jax.random.normal(ks[7], (cout,))).astype(f),
        "m2": (0.05 * jax.random.normal(ks[8], (cout,))).astype(f),
        "v2": (1.0 + 0.1 * jnp.abs(jax.random.normal(ks[9], (cout,)))).astype(f),
        "ws": (0.1 * jax.random.normal(ks[10], (cin, cout))).astype(f),
        "gs": (1.0 + 0.1 * jax.random.normal(ks[11], (cout,))).astype(f),
        "betas": (0.1 * jax.random.normal(ks[12], (cout,))).astype(f),
        "ms": (0.05 * jax.random.normal(ks[13], (cout,))).astype(f),
        "vs": (1.0 + 0.1 * jnp.abs(jax.random.normal(ks[14], (cout,)))).astype(f),
    }


if __name__ == "__main__":
    key = jax.random.PRNGKey(0)
    k_x, k_p = jax.random.split(key)

    N, Cin, Cout, H, W = 2, 4, 8, 16, 16
    x = jax.random.normal(k_x, (N, Cin, H, W), jnp.float32)          # NCHW like PyTorch
    params = make_params(k_p, Cin, Cout)

    out = jax.block_until_ready(basic_block_pallas(x, params))
    ref = jax.block_until_ready(basic_block_ref(x, params))

    assert out.shape == (N, Cout, H, W), out.shape
    # bf16 MXU operands (f32 accumulation) -> loosened tolerance per review.
    max_err = float(jnp.max(jnp.abs(out - ref)))
    assert jnp.allclose(out, ref, atol=5e-2, rtol=5e-2), max_err
    print("KERNEL_OK")
</pallas_src>

<mosaic_0001>
module attributes {stable_mosaic.version = 11 : i64} {
  func.func @_basic_block_kernel(%arg0: i32, %arg1: memref<1x256x128xbf16, #tpu.memory_space<vmem>>, %arg2: memref<128x256xbf16, #tpu.memory_space<vmem>>, %arg3: memref<9x128x128xbf16, #tpu.memory_space<vmem>>, %arg4: memref<1x128xf32, #tpu.memory_space<vmem>>, %arg5: memref<1x128xf32, #tpu.memory_space<vmem>>, %arg6: memref<1x256x128xf32, #tpu.memory_space<vmem>>) attributes {dimension_semantics = [#tpu.dimension_semantics<parallel>], iteration_bounds = array<i64: 2>, scalar_prefetch = 0 : i64, scratch_operands = 0 : i64, tpu.core_type = #tpu.core_type<tc>, window_params = [{transform_indices = @transform_0, window_bounds = array<i64: 1, 256, 128>}, {pipeline_mode = #tpu.pipeline_mode<synchronous>, transform_indices = @transform_1, window_bounds = array<i64: 128, 256>}, {pipeline_mode = #tpu.pipeline_mode<synchronous>, transform_indices = @transform_2, window_bounds = array<i64: 9, 128, 128>}, {pipeline_mode = #tpu.pipeline_mode<synchronous>, transform_indices = @transform_3, window_bounds = array<i64: 1, 128>}, {pipeline_mode = #tpu.pipeline_mode<synchronous>, transform_indices = @transform_4, window_bounds = array<i64: 1, 128>}, {transform_indices = @transform_5, window_bounds = array<i64: 1, 256, 128>}]} {
    %c0 = arith.constant 0 : index
    %c0_0 = arith.constant 0 : index
    %c0_1 = arith.constant 0 : index
    %0 = vector.load %arg1[%c0, %c0_0, %c0_1] : memref<1x256x128xbf16, #tpu.memory_space<vmem>>, vector<1x256x128xbf16>
    %1 = vector.shape_cast %0 : vector<1x256x128xbf16> to vector<256x128xbf16>
    %c0_2 = arith.constant 0 : index
    %c0_3 = arith.constant 0 : index
    %2 = vector.load %arg2[%c0_2, %c0_3] : memref<128x256xbf16, #tpu.memory_space<vmem>>, vector<128x256xbf16>
    %cst = arith.constant dense<0.000000e+00> : vector<256x256xf32>
    %3 = tpu.matmul %1, %2, %cst {dimension_numbers = #tpu.dot_dimension_numbers<[1], [0], [0], [1], [0, 0, 1, 1], [], []>} : vector<256x128xbf16>, vector<128x256xbf16>, vector<256x256xf32> -> vector<256x256xf32>
    %4 = vector.extract_strided_slice %3 {offsets = [0, 0], sizes = [256, 128], strides = [1, 1]} : vector<256x256xf32> to vector<256x128xf32>
    %c0_4 = arith.constant 0 : index
    %c0_5 = arith.constant 0 : index
    %5 = vector.load %arg4[%c0_4, %c0_5] : memref<1x128xf32, #tpu.memory_space<vmem>>, vector<1x128xf32>
    %6 = vector.broadcast %5 : vector<1x128xf32> to vector<256x128xf32>
    %7 = arith.addf %4, %6 : vector<256x128xf32>
    %cst_6 = arith.constant 0.000000e+00 : f32
    %8 = vector.broadcast %cst_6 : f32 to vector<256x128xf32>
    %9 = arith.maximumf %7, %8 : vector<256x128xf32>
    %10 = vector.extract_strided_slice %3 {offsets = [0, 128], sizes = [256, 128], strides = [1, 1]} : vector<256x256xf32> to vector<256x128xf32>
    %11 = tpu.iota {dimensions = array<i32: 1>} : vector<16x16x128xi32>
    %12 = vector.shape_cast %11 : vector<16x16x128xi32> to vector<256x128xi32>
    %cst_7 = arith.constant 0.000000e+00 : f32
    %13 = vector.broadcast %cst_7 : f32 to vector<256x128xf32>
    %c1_i32 = arith.constant 1 : i32
    %14 = vector.broadcast %c1_i32 : i32 to vector<256x128xi32>
    %15 = arith.cmpi sge, %12, %14 : vector<256x128xi32>
    %c1_i32_8 = arith.constant 1 : i32
    %16 = tpu.dynamic_rotate %9 by %c1_i32_8 dim 0 : vector<256x128xf32>, i32 -> vector<256x128xf32>
    %17 = arith.select %15, %16, %13 : vector<256x128xi1>, vector<256x128xf32>
    %c14_i32 = arith.constant 14 : i32
    %18 = vector.broadcast %c14_i32 : i32 to vector<256x128xi32>
    %19 = arith.cmpi sle, %12, %18 : vector<256x128xi32>
    %c255_i32 = arith.constant 255 : i32
    %20 = tpu.dynamic_rotate %9 by %c255_i32 dim 0 : vector<256x128xf32>, i32 -> vector<256x128xf32>
    %21 = arith.select %19, %20, %13 : vector<256x128xi1>, vector<256x128xf32>
    %22 = arith.truncf %17 : vector<256x128xf32> to vector<256x128xbf16>
    %23 = arith.truncf %9 : vector<256x128xf32> to vector<256x128xbf16>
    %24 = arith.truncf %21 : vector<256x128xf32> to vector<256x128xbf16>
    %cst_9 = arith.constant 0.000000e+00 : bf16
    %25 = vector.broadcast %cst_9 : bf16 to vector<16x128xbf16>
    %26 = vector.extract_strided_slice %22 {offsets = [0, 0], sizes = [240, 128], strides = [1, 1]} : vector<256x128xbf16> to vector<240x128xbf16>
    %27 = tpu.concatenate %25, %26 in 0 : vector<16x128xbf16>, vector<240x128xbf16> -> vector<256x128xbf16>
    %c0_10 = arith.constant 0 : index
    %c0_11 = arith.constant 0 : index
    %c0_12 = arith.constant 0 : index
    %28 = vector.load %arg3[%c0_10, %c0_11, %c0_12] : memref<9x128x128xbf16, #tpu.memory_space<vmem>>, vector<1x128x128xbf16>
    %29 = vector.shape_cast %28 : vector<1x128x128xbf16> to vector<128x128xbf16>
    %cst_13 = arith.constant dense<0.000000e+00> : vector<256x128xf32>
    %30 = tpu.matmul %27, %29, %cst_13 {dimension_numbers = #tpu.dot_dimension_numbers<[1], [0], [0], [1], [0, 0, 1, 1], [], []>} : vector<256x128xbf16>, vector<128x128xbf16>, vector<256x128xf32> -> vector<256x128xf32>
    %31 = arith.addf %10, %30 : vector<256x128xf32>
    %32 = vector.extract_strided_slice %23 {offsets = [0, 0], sizes = [240, 128], strides = [1, 1]} : vector<256x128xbf16> to vector<240x128xbf16>
    %33 = tpu.concatenate %25, %32 in 0 : vector<16x128xbf16>, vector<240x128xbf16> -> vector<256x128xbf16>
    %c1 = arith.constant 1 : index
    %c0_14 = arith.constant 0 : index
    %c0_15 = arith.constant 0 : index
    %34 = vector.load %arg3[%c1, %c0_14, %c0_15] : memref<9x128x128xbf16, #tpu.memory_space<vmem>>, vector<1x128x128xbf16>
    %35 = vector.shape_cast %34 : vector<1x128x128xbf16> to vector<128x128xbf16>
    %cst_16 = arith.constant dense<0.000000e+00> : vector<256x128xf32>
    %36 = tpu.matmul %33, %35, %cst_16 {dimension_numbers = #tpu.dot_dimension_numbers<[1], [0], [0], [1], [0, 0, 1, 1], [], []>} : vector<256x128xbf16>, vector<128x128xbf16>, vector<256x128xf32> -> vector<256x128xf32>
    %37 = arith.addf %31, %36 : vector<256x128xf32>
    %38 = vector.extract_strided_slice %24 {offsets = [0, 0], sizes = [240, 128], strides = [1, 1]} : vector<256x128xbf16> to vector<240x128xbf16>
    %39 = tpu.concatenate %25, %38 in 0 : vector<16x128xbf16>, vector<240x128xbf16> -> vector<256x128xbf16>
    %c2 = arith.constant 2 : index
    %c0_17 = arith.constant 0 : index
    %c0_18 = arith.constant 0 : index
    %40 = vector.load %arg3[%c2, %c0_17, %c0_18] : memref<9x128x128xbf16, #tpu.memory_space<vmem>>, vector<1x128x128xbf16>
    %41 = vector.shape_cast %40 : vector<1x128x128xbf16> to vector<128x128xbf16>
    %cst_19 = arith.constant dense<0.000000e+00> : vector<256x128xf32>
    %42 = tpu.matmul %39, %41, %cst_19 {dimension_numbers = #tpu.dot_dimension_numbers<[1], [0], [0], [1], [0, 0, 1, 1], [], []>} : vector<256x128xbf16>, vector<128x128xbf16>, vector<256x128xf32> -> vector<256x128xf32>
    %43 = arith.addf %37, %42 : vector<256x128xf32>
    %c3 = arith.constant 3 : index
    %c0_20 = arith.constant 0 : index
    %c0_21 = arith.constant 0 : index
    %44 = vector.load %arg3[%c3, %c0_20, %c0_21] : memref<9x128x128xbf16, #tpu.memory_space<vmem>>, vector<1x128x128xbf16>
    %45 = vector.shape_cast %44 : vector<1x128x128xbf16> to vector<128x128xbf16>
    %cst_22 = arith.constant dense<0.000000e+00> : vector<256x128xf32>
    %46 = tpu.matmul %22, %45, %cst_22 {dimension_numbers = #tpu.dot_dimension_numbers<[1], [0], [0], [1], [0, 0, 1, 1], [], []>} : vector<256x128xbf16>, vector<128x128xbf16>, vector<256x128xf32> -> vector<256x128xf32>
    %47 = arith.addf %43, %46 : vector<256x128xf32>
    %c4 = arith.constant 4 : index
    %c0_23 = arith.constant 0 : index
    %c0_24 = arith.constant 0 : index
    %48 = vector.load %arg3[%c4, %c0_23, %c0_24] : memref<9x128x128xbf16, #tpu.memory_space<vmem>>, vector<1x128x128xbf16>
    %49 = vector.shape_cast %48 : vector<1x128x128xbf16> to vector<128x128xbf16>
    %cst_25 = arith.constant dense<0.000000e+00> : vector<256x128xf32>
    %50 = tpu.matmul %23, %49, %cst_25 {dimension_numbers = #tpu.dot_dimension_numbers<[1], [0], [0], [1], [0, 0, 1, 1], [], []>} : vector<256x128xbf16>, vector<128x128xbf16>, vector<256x128xf32> -> vector<256x128xf32>
    %51 = arith.addf %47, %50 : vector<256x128xf32>
    %c5 = arith.constant 5 : index
    %c0_26 = arith.constant 0 : index
    %c0_27 = arith.constant 0 : index
    %52 = vector.load %arg3[%c5, %c0_26, %c0_27] : memref<9x128x128xbf16, #tpu.memory_space<vmem>>, vector<1x128x128xbf16>
    %53 = vector.shape_cast %52 : vector<1x128x128xbf16> to vector<128x128xbf16>
    %cst_28 = arith.constant dense<0.000000e+00> : vector<256x128xf32>
    %54 = tpu.matmul %24, %53, %cst_28 {dimension_numbers = #tpu.dot_dimension_numbers<[1], [0], [0], [1], [0, 0, 1, 1], [], []>} : vector<256x128xbf16>, vector<128x128xbf16>, vector<256x128xf32> -> vector<256x128xf32>
    %55 = arith.addf %51, %54 : vector<256x128xf32>
    %56 = vector.extract_strided_slice %22 {offsets = [16, 0], sizes = [240, 128], strides = [1, 1]} : vector<256x128xbf16> to vector<240x128xbf16>
    %57 = tpu.concatenate %56, %25 in 0 : vector<240x128xbf16>, vector<16x128xbf16> -> vector<256x128xbf16>
    %c6 = arith.constant 6 : index
    %c0_29 = arith.constant 0 : index
    %c0_30 = arith.constant 0 : index
    %58 = vector.load %arg3[%c6, %c0_29, %c0_30] : memref<9x128x128xbf16, #tpu.memory_space<vmem>>, vector<1x128x128xbf16>
    %59 = vector.shape_cast %58 : vector<1x128x128xbf16> to vector<128x128xbf16>
    %cst_31 = arith.constant dense<0.000000e+00> : vector<256x128xf32>
    %60 = tpu.matmul %57, %59, %cst_31 {dimension_numbers = #tpu.dot_dimension_numbers<[1], [0], [0], [1], [0, 0, 1, 1], [], []>} : vector<256x128xbf16>, vector<128x128xbf16>, vector<256x128xf32> -> vector<256x128xf32>
    %61 = arith.addf %55, %60 : vector<256x128xf32>
    %62 = vector.extract_strided_slice %23 {offsets = [16, 0], sizes = [240, 128], strides = [1, 1]} : vector<256x128xbf16> to vector<240x128xbf16>
    %63 = tpu.concatenate %62, %25 in 0 : vector<240x128xbf16>, vector<16x128xbf16> -> vector<256x128xbf16>
    %c7 = arith.constant 7 : index
    %c0_32 = arith.constant 0 : index
    %c0_33 = arith.constant 0 : index
    %64 = vector.load %arg3[%c7, %c0_32, %c0_33] : memref<9x128x128xbf16, #tpu.memory_space<vmem>>, vector<1x128x128xbf16>
    %65 = vector.shape_cast %64 : vector<1x128x128xbf16> to vector<128x128xbf16>
    %cst_34 = arith.constant dense<0.000000e+00> : vector<256x128xf32>
    %66 = tpu.matmul %63, %65, %cst_34 {dimension_numbers = #tpu.dot_dimension_numbers<[1], [0], [0], [1], [0, 0, 1, 1], [], []>} : vector<256x128xbf16>, vector<128x128xbf16>, vector<256x128xf32> -> vector<256x128xf32>
    %67 = arith.addf %61, %66 : vector<256x128xf32>
    %68 = vector.extract_strided_slice %24 {offsets = [16, 0], sizes = [240, 128], strides = [1, 1]} : vector<256x128xbf16> to vector<240x128xbf16>
    %69 = tpu.concatenate %68, %25 in 0 : vector<240x128xbf16>, vector<16x128xbf16> -> vector<256x128xbf16>
    %c8 = arith.constant 8 : index
    %c0_35 = arith.constant 0 : index
    %c0_36 = arith.constant 0 : index
    %70 = vector.load %arg3[%c8, %c0_35, %c0_36] : memref<9x128x128xbf16, #tpu.memory_space<vmem>>, vector<1x128x128xbf16>
    %71 = vector.shape_cast %70 : vector<1x128x128xbf16> to vector<128x128xbf16>
    %cst_37 = arith.constant dense<0.000000e+00> : vector<256x128xf32>
    %72 = tpu.matmul %69, %71, %cst_37 {dimension_numbers = #tpu.dot_dimension_numbers<[1], [0], [0], [1], [0, 0, 1, 1], [], []>} : vector<256x128xbf16>, vector<128x128xbf16>, vector<256x128xf32> -> vector<256x128xf32>
    %73 = arith.addf %67, %72 : vector<256x128xf32>
    %c0_38 = arith.constant 0 : index
    %c0_39 = arith.constant 0 : index
    %74 = vector.load %arg5[%c0_38, %c0_39] : memref<1x128xf32, #tpu.memory_space<vmem>>, vector<1x128xf32>
    %75 = vector.broadcast %74 : vector<1x128xf32> to vector<256x128xf32>
    %76 = arith.addf %73, %75 : vector<256x128xf32>
    %cst_40 = arith.constant 0.000000e+00 : f32
    %77 = vector.broadcast %cst_40 : f32 to vector<256x128xf32>
    %78 = arith.maximumf %76, %77 : vector<256x128xf32>
    %c0_41 = arith.constant 0 : index
    %c0_42 = arith.constant 0 : index
    %c0_43 = arith.constant 0 : index
    %79 = vector.load %arg6[%c0_41, %c0_42, %c0_43] : memref<1x256x128xf32, #tpu.memory_space<vmem>>, vector<1x256x128xf32>
    %80 = vector.shape_cast %79 : vector<1x256x128xf32> to vector<256x128xf32>
    %81 = vector.shape_cast %78 : vector<256x128xf32> to vector<1x256x128xf32>
    tpu.vector_store %arg6[%c0_41, %c0_42, %c0_43], %81 {strides = array<i32>} : memref<1x256x128xf32, #tpu.memory_space<vmem>>, vector<1x256x128xf32>,
    return
  }
  func.func @transform_0(%arg0: i32) -> (i32, i32, i32) {
    %c0_i32 = arith.constant 0 : i32
    %c0_i32_0 = arith.constant 0 : i32
    %c0_i32_1 = arith.constant 0 : i32
    return %arg0, %c0_i32, %c0_i32_0 : i32, i32, i32
  }
  func.func @transform_1(%arg0: i32) -> (i32, i32) {
    %c0_i32 = arith.constant 0 : i32
    %c0_i32_0 = arith.constant 0 : i32
    %c0_i32_1 = arith.constant 0 : i32
    return %c0_i32, %c0_i32_0 : i32, i32
  }
  func.func @transform_2(%arg0: i32) -> (i32, i32, i32) {
    %c0_i32 = arith.constant 0 : i32
    %c0_i32_0 = arith.constant 0 : i32
    %c0_i32_1 = arith.constant 0 : i32
    %c0_i32_2 = arith.constant 0 : i32
    return %c0_i32, %c0_i32_0, %c0_i32_1 : i32, i32, i32
  }
  func.func @transform_3(%arg0: i32) -> (i32, i32) {
    %c0_i32 = arith.constant 0 : i32
    %c0_i32_0 = arith.constant 0 : i32
    %c0_i32_1 = arith.constant 0 : i32
    return %c0_i32, %c0_i32_0 : i32, i32
  }
  func.func @transform_4(%arg0: i32) -> (i32, i32) {
    %c0_i32 = arith.constant 0 : i32
    %c0_i32_0 = arith.constant 0 : i32
    %c0_i32_1 = arith.constant 0 : i32
    return %c0_i32, %c0_i32_0 : i32, i32
  }
  func.func @transform_5(%arg0: i32) -> (i32, i32, i32) {
    %c0_i32 = arith.constant 0 : i32
    %c0_i32_0 = arith.constant 0 : i32
    %c0_i32_1 = arith.constant 0 : i32
    return %arg0, %c0_i32, %c0_i32_0 : i32, i32, i32
  }
}

</mosaic_0001>

<llo_original>
// kernel: basic_block_pallas.1
$region0: #{basic_block_pallas.1}
  #allocation0 [shape = 'u32[]', space=smem, size = 0x4, offset = 0x4, fixed_abs, tag = 'smem constant byte address 0x4 - core index']
  #allocation1 [shape = 'u32[144,128]{1,0:T(1,128)}', space=vmem, size = 0x12000, scoped, tag = 'internal scratch']
  %s0 = inlined_call_operand.vmem [shape: bf16[2,256,128], index: 0, kind: input, shape index: {}]
  %s1 = inlined_call_operand.vmem [shape: bf16[128,256], index: 1, kind: input, shape index: {}]
  %s2 = inlined_call_operand.vmem [shape: bf16[9,128,128], index: 2, kind: input, shape index: {}]
  %s3 = inlined_call_operand.vmem [shape: f32[1,128], index: 3, kind: input, shape index: {}]
  %s4 = inlined_call_operand.vmem [shape: f32[1,128], index: 4, kind: input, shape index: {}]
  %s5 = inlined_call_operand.vmem [shape: f32[2,256,128], index: 5, kind: output, shape index: {}]
  %s6 = sld [smem:[#allocation0]]
  $region53: #{basic_block_pallas.1} parent=0
    _
  %s8 = ssub.s32 1, %s6
  %s9 = scalar_select 0, %s8, %s6
  loop: start=0, step=1, limit=4
  $region2: #{basic_block_pallas.1} parent=0 // loop_pre_header
    _
  $region3: #{basic_block_pallas.1} parent=0 // loop_header
    %s11 = sphi 0, %s15
    %p12 = scmp.ge.s32.totalorder %s11, 4
    %s21 = sphi 0, %s23
    %s24 = sphi 0, %s21
    %s25 = sphi 0, %s24
    %s41 = sphi 0, %s25
    %s45 = sphi 0, %s45
    %s47 = sphi 0, %s45
    %s48 = sphi 0, %s47
    %s62 = sphi 0, %s48
    %s66 = sphi 0, %s66
    %s68 = sphi 0, %s66
    %s69 = sphi 0, %s68
    %s83 = sphi 0, %s69
    %s87 = sphi 0, %s87
    %s89 = sphi 0, %s87
    %s90 = sphi 0, %s89
    %s104 = sphi 0, %s90
    %s108 = sphi 0, %s108
    %s110 = sphi 0, %s108
    %s111 = sphi 0, %s110
    %s125 = sphi 0, %s111
    %s131 = sphi 0, %s133
    %s134 = sphi 0, %s131
    %s135 = sphi 0, %s134
    %s151 = sphi 0, %s135
  $region4: #{basic_block_pallas.1} parent=0 // loop_header_branch
    %14 = sbr.rel (%p12) target = $region8
  $region5: #{basic_block_pallas.1} parent=0 // loop_body
    %s16 = ssub.s32 %s11, 1
    %s17 = ssub.s32 %s11, 2
    %s18 = sadd.s32 %s11, 1
    %s19 = ssub.s32 %s11, %s18
    %p20 = scmp.eq.s32.totalorder %s19, 0
    %s22 = sadd.s32 %s21, 1
    %s23 = scalar_select %p20, %s21, %s22
    %p26 = pneg %p20
    %p27 = scmp.eq.s32.totalorder %s11, 1
    %p28 = por %p26, %p27
    %p29 = scmp.ne.s32.totalorder %s21, %s24
    %p30 = scmp.eq.s32.totalorder %s11, 0
    %p31 = por %p29, %p30
    %p32 = scmp.ne.s32.totalorder %s21, %s24
    %p33 = scmp.eq.s32.totalorder %s16, 1
    %p34 = por %p32, %p33
    %p35 = scmp.ne.s32.totalorder %s24, %s25
    %p36 = scmp.eq.s32.totalorder %s16, 0
    %p37 = por %p35, %p36
    %p38 = scmp.ne.s32.totalorder %s24, %s25
    %p39 = scmp.eq.s32.totalorder %s17, 1
    %p40 = por %p38, %p39
    %p42 = scmp.ne.s32.totalorder %s25, %s41
    %p43 = scmp.eq.s32.totalorder %s17, 0
    %p44 = por %p42, %p43
    %s46 = sadd.s32 %s45, 1
    %p49 = scmp.eq.s32.totalorder %s11, 1
    %p50 = scmp.ne.s32.totalorder %s45, %s47
    %p51 = scmp.eq.s32.totalorder %s11, 0
    %p52 = por %p50, %p51
    %p53 = scmp.ne.s32.totalorder %s45, %s47
    %p54 = scmp.eq.s32.totalorder %s16, 1
    %p55 = por %p53, %p54
    %p56 = scmp.ne.s32.totalorder %s47, %s48
    %p57 = scmp.eq.s32.totalorder %s16, 0
    %p58 = por %p56, %p57
    %p59 = scmp.ne.s32.totalorder %s47, %s48
    %p60 = scmp.eq.s32.totalorder %s17, 1
    %p61 = por %p59, %p60
    %p63 = scmp.ne.s32.totalorder %s48, %s62
    %p64 = scmp.eq.s32.totalorder %s17, 0
    %p65 = por %p63, %p64
    %s67 = sadd.s32 %s66, 1
    %p70 = scmp.eq.s32.totalorder %s11, 1
    %p71 = scmp.ne.s32.totalorder %s66, %s68
    %p72 = scmp.eq.s32.totalorder %s11, 0
    %p73 = por %p71, %p72
    %p74 = scmp.ne.s32.totalorder %s66, %s68
    %p75 = scmp.eq.s32.totalorder %s16, 1
    %p76 = por %p74, %p75
    %p77 = scmp.ne.s32.totalorder %s68, %s69
    %p78 = scmp.eq.s32.totalorder %s16, 0
    %p79 = por %p77, %p78
    %p80 = scmp.ne.s32.totalorder %s68, %s69
    %p81 = scmp.eq.s32.totalorder %s17, 1
    %p82 = por %p80, %p81
    %p84 = scmp.ne.s32.totalorder %s69, %s83
    %p85 = scmp.eq.s32.totalorder %s17, 0
    %p86 = por %p84, %p85
    %s88 = sadd.s32 %s87, 1
    %p91 = scmp.eq.s32.totalorder %s11, 1
    %p92 = scmp.ne.s32.totalorder %s87, %s89
    %p93 = scmp.eq.s32.totalorder %s11, 0
    %p94 = por %p92, %p93
    %p95 = scmp.ne.s32.totalorder %s87, %s89
    %p96 = scmp.eq.s32.totalorder %s16, 1
    %p97 = por %p95, %p96
    %p98 = scmp.ne.s32.totalorder %s89, %s90
    %p99 = scmp.eq.s32.totalorder %s16, 0
    %p100 = por %p98, %p99
    %p101 = scmp.ne.s32.totalorder %s89, %s90
    %p102 = scmp.eq.s32.totalorder %s17, 1
    %p103 = por %p101, %p102
    %p105 = scmp.ne.s32.totalorder %s90, %s104
    %p106 = scmp.eq.s32.totalorder %s17, 0
    %p107 = por %p105, %p106
    %s109 = sadd.s32 %s108, 1
    %p112 = scmp.eq.s32.totalorder %s11, 1
    %p113 = scmp.ne.s32.totalorder %s108, %s110
    %p114 = scmp.eq.s32.totalorder %s11, 0
    %p115 = por %p113, %p114
    %p116 = scmp.ne.s32.totalorder %s108, %s110
    %p117 = scmp.eq.s32.totalorder %s16, 1
    %p118 = por %p116, %p117
    %p119 = scmp.ne.s32.totalorder %s110, %s111
    %p120 = scmp.eq.s32.totalorder %s16, 0
    %p121 = por %p119, %p120
    %p122 = scmp.ne.s32.totalorder %s110, %s111
    %p123 = scmp.eq.s32.totalorder %s17, 1
    %p124 = por %p122, %p123
    %p126 = scmp.ne.s32.totalorder %s111, %s125
    %p127 = scmp.eq.s32.totalorder %s17, 0
    %p128 = por %p126, %p127
    %s129 = ssub.s32 %s11, %s18
    %p130 = scmp.eq.s32.totalorder %s129, 0
    %s132 = sadd.s32 %s131, 1
    %s133 = scalar_select %p130, %s131, %s132
    %p136 = pneg %p130
    %p137 = scmp.eq.s32.totalorder %s11, 1
    %p138 = por %p136, %p137
    %p139 = scmp.ne.s32.totalorder %s131, %s134
    %p140 = scmp.eq.s32.totalorder %s11, 0
    %p141 = por %p139, %p140
    %p142 = scmp.ne.s32.totalorder %s131, %s134
    %p143 = scmp.eq.s32.totalorder %s16, 1
    %p144 = por %p142, %p143
    %p145 = scmp.ne.s32.totalorder %s134, %s135
    %p146 = scmp.eq.s32.totalorder %s16, 0
    %p147 = por %p145, %p146
    %p148 = scmp.ne.s32.totalorder %s134, %s135
    %p149 = scmp.eq.s32.totalorder %s17, 1
    %p150 = por %p148, %p149
    %p152 = scmp.ne.s32.totalorder %s135, %s151
    %p153 = scmp.eq.s32.totalorder %s17, 0
    %p154 = por %p152, %p153
    %p155 = scmp.le.s32.totalorder 1, %s11
    %p156 = scmp.lt.s32.totalorder %s11, 3
    %p157 = pnand %p155, %p156
    %p158 = pneg %p157
    // Predicated region
    $region9: #{basic_block_pallas.1} parent=5 // pred_check
      _
    $region10: #{basic_block_pallas.1} parent=5 // pred_check_branch
      %160 = sbr.rel (%p157) target = $region12
    $region11: #{basic_block_pallas.1} parent=5 // pred_region
      %s161 = ssub.s32 %s11, 1
      // Predicated region
      $region13: #{basic_block_pallas.1} parent=11 // pred_check
        %p162 = pneg %p58
      $region14: #{basic_block_pallas.1} parent=11 // pred_check_branch
        %164 = sbr.rel (%p162) target = $region16
      $region15: #{basic_block_pallas.1} parent=11 // pred_region
        _
      $region16: #{basic_block_pallas.1} parent=11 // pred_fallthru
        _
      // Predicated region
      $region17: #{basic_block_pallas.1} parent=11 // pred_check
        %p165 = pneg %p79
      $region18: #{basic_block_pallas.1} parent=11 // pred_check_branch
        %167 = sbr.rel (%p165) target = $region20
      $region19: #{basic_block_pallas.1} parent=11 // pred_region
        _
      $region20: #{basic_block_pallas.1} parent=11 // pred_fallthru
        _
      // Predicated region
      $region21: #{basic_block_pallas.1} parent=11 // pred_check
        %p168 = pneg %p100
      $region22: #{basic_block_pallas.1} parent=11 // pred_check_branch
        %170 = sbr.rel (%p168) target = $region24
      $region23: #{basic_block_pallas.1} parent=11 // pred_region
        _
      $region24: #{basic_block_pallas.1} parent=11 // pred_fallthru
        _
      // Predicated region
      $region25: #{basic_block_pallas.1} parent=11 // pred_check
        %p171 = pneg %p121
      $region26: #{basic_block_pallas.1} parent=11 // pred_check_branch
        %173 = sbr.rel (%p171) target = $region28
      $region27: #{basic_block_pallas.1} parent=11 // pred_region
        _
      $region28: #{basic_block_pallas.1} parent=11 // pred_fallthru
        _
    $region12: #{basic_block_pallas.1} parent=5 // pred_fallthru
      _
    %p174 = scmp.lt.s32.totalorder %s11, 2
    // Predicated region
    $region29: #{basic_block_pallas.1} parent=5 // pred_check
      %p175 = pneg %p174
    $region30: #{basic_block_pallas.1} parent=5 // pred_check_branch
      %177 = sbr.rel (%p175) target = $region32
    $region31: #{basic_block_pallas.1} parent=5 // pred_region
      // Predicated region
      $region33: #{basic_block_pallas.1} parent=31 // pred_check
        %p178 = pneg %p31
      $region34: #{basic_block_pallas.1} parent=31 // pred_check_branch
        %180 = sbr.rel (%p178) target = $region36
      $region35: #{basic_block_pallas.1} parent=31 // pred_region
        %p181 = scmp.lt.s32.totalorder %s11, 1
        %s182 = scalar_select %p181, %s11, 1
        %s183 = smul.addr %s182, 32
        %s184 = smul.addr %s183, 4
        %s185 = scalar_lea.vmem %s0, %s184
      $region36: #{basic_block_pallas.1} parent=31 // pred_fallthru
        _
    $region32: #{basic_block_pallas.1} parent=5 // pred_fallthru
      _
    %p186 = scmp.le.s32.totalorder 1, %s11
    %p187 = scmp.lt.s32.totalorder %s11, 3
    %p188 = pnand %p186, %p187
    %p189 = pneg %p188
    // Predicated region
    $region37: #{basic_block_pallas.1} parent=5 // pred_check
      _
    $region38: #{basic_block_pallas.1} parent=5 // pred_check_branch
      %191 = sbr.rel (%p188) target = $region40
    $region39: #{basic_block_pallas.1} parent=5 // pred_region
      %s192 = ssub.s32 %s11, 1
      %p193 = scmp.lt.s32.totalorder %s16, 1
      %s194 = scalar_select %p193, %s16, 1
      %s195 = smul.addr %s194, 32
      %s196 = smul.addr %s195, 4
      %s197 = scalar_lea.vmem %s0, %s196
      %p198 = pneg %p37
      %p199 = pneg %p34
      %p200 = pneg %p58
      %p201 = pneg %p55
      %p202 = pneg %p79
      %p203 = pneg %p76
      %p204 = pneg %p100
      %p205 = pneg %p97
      %p206 = pneg %p121
      %p207 = pneg %p118
      %p208 = pneg %p147
      %p209 = pneg %p144
      %p210 = scmp.lt.s32.totalorder %s16, 1
      %s211 = scalar_select %p210, %s16, 1
      %s212 = smul.addr %s211, 32
      %s213 = smul.addr %s212, 8
      %s214 = scalar_lea.vmem %s5, %s213
      %p215 = scmp.lt.s32.totalorder %s16, 1
      %s216 = scalar_select %p215, %s16, 1
      %s217 = smul.addr %s216, 32
      %s218 = smul.addr %s217, 4
      %s219 = scalar_lea.vmem %s0, %s218
      %p220 = scmp.lt.s32.totalorder %s16, 1
      %s221 = scalar_select %p220, %s16, 1
      %s222 = smul.addr %s221, 32
      %s223 = smul.addr %s222, 8
      %s224 = scalar_lea.vmem %s5, %s223
      %v226 = vld [vmem:[%s219] sm:$0xf]
      %v227 = vld [vmem:[%s219 + $0x4] sm:$0xf]
      %v228 = vld [vmem:[%s219 + $0x8] sm:$0xf]
      %v229 = vld [vmem:[%s219 + $0xc] sm:$0xf]
      %v230 = vld [vmem:[%s219 + $0x10] sm:$0xf]
      %v231 = vld [vmem:[%s219 + $0x14] sm:$0xf]
      %v232 = vld [vmem:[%s219 + $0x18] sm:$0xf]
      %v233 = vld [vmem:[%s219 + $0x1c] sm:$0xf]
      %v234 = vld [vmem:[%s219 + $0x20] sm:$0xf]
      %v235 = vld [vmem:[%s219 + $0x24] sm:$0xf]
      %v236 = vld [vmem:[%s219 + $0x28] sm:$0xf]
      %v237 = vld [vmem:[%s219 + $0x2c] sm:$0xf]
      %v238 = vld [vmem:[%s219 + $0x30] sm:$0xf]
      %v239 = vld [vmem:[%s219 + $0x34] sm:$0xf]
      %v240 = vld [vmem:[%s219 + $0x38] sm:$0xf]
      %v241 = vld [vmem:[%s219 + $0x3c] sm:$0xf]
      %v242 = vld [vmem:[%s219 + $0x40] sm:$0xf]
      %v243 = vld [vmem:[%s219 + $0x44] sm:$0xf]
      %v244 = vld [vmem:[%s219 + $0x48] sm:$0xf]
      %v245 = vld [vmem:[%s219 + $0x4c] sm:$0xf]
      %v246 = vld [vmem:[%s219 + $0x50] sm:$0xf]
      %v247 = vld [vmem:[%s219 + $0x54] sm:$0xf]
      %v248 = vld [vmem:[%s219 + $0x58] sm:$0xf]
      %v249 = vld [vmem:[%s219 + $0x5c] sm:$0xf]
      %v250 = vld [vmem:[%s219 + $0x60] sm:$0xf]
      %v251 = vld [vmem:[%s219 + $0x64] sm:$0xf]
      %v252 = vld [vmem:[%s219 + $0x68] sm:$0xf]
      %v253 = vld [vmem:[%s219 + $0x6c] sm:$0xf]
      %v254 = vld [vmem:[%s219 + $0x70] sm:$0xf]
      %v255 = vld [vmem:[%s219 + $0x74] sm:$0xf]
      %v256 = vld [vmem:[%s219 + $0x78] sm:$0xf]
      %v257 = vld [vmem:[%s219 + $0x7c] sm:$0xf]
      %v258 = vld [vmem:[%s1] sm:$0xff]
      %v259 = vld [vmem:[%s1 + $0x8] sm:$0xff]
      %v260 = vld [vmem:[%s1 + $0x10] sm:$0xff]
      %v261 = vld [vmem:[%s1 + $0x18] sm:$0xff]
      %v262 = vld [vmem:[%s1 + $0x20] sm:$0xff]
      %v263 = vld [vmem:[%s1 + $0x28] sm:$0xff]
      %v264 = vld [vmem:[%s1 + $0x30] sm:$0xff]
      %v265 = vld [vmem:[%s1 + $0x38] sm:$0xff]
      %v266 = vld [vmem:[%s1 + $0x40] sm:$0xff]
      %v267 = vld [vmem:[%s1 + $0x48] sm:$0xff]
      %v268 = vld [vmem:[%s1 + $0x50] sm:$0xff]
      %v269 = vld [vmem:[%s1 + $0x58] sm:$0xff]
      %v270 = vld [vmem:[%s1 + $0x60] sm:$0xff]
      %v271 = vld [vmem:[%s1 + $0x68] sm:$0xff]
      %v272 = vld [vmem:[%s1 + $0x70] sm:$0xff]
      %v273 = vld [vmem:[%s1 + $0x78] sm:$0xff]
      %v306 = vunpack.c.l.b16 %v226
      %v307 = vunpack.c.l.b16 %v227
      %v308 = vunpack.c.l.b16 %v228
      %v309 = vunpack.c.l.b16 %v229
      %v310 = vunpack.c.l.b16 %v230
      %v311 = vunpack.c.l.b16 %v231
      %v312 = vunpack.c.l.b16 %v232
      %v313 = vunpack.c.l.b16 %v233
      %v314 = vunpack.c.l.b16 %v234
      %v315 = vunpack.c.l.b16 %v235
      %v316 = vunpack.c.l.b16 %v236
      %v317 = vunpack.c.l.b16 %v237
      %v318 = vunpack.c.l.b16 %v238
      %v319 = vunpack.c.l.b16 %v239
      %v320 = vunpack.c.l.b16 %v240
      %v321 = vunpack.c.l.b16 %v241
      %v322 = vunpack.c.l.b16 %v242
      %v323 = vunpack.c.l.b16 %v243
      %v324 = vunpack.c.l.b16 %v244
      %v325 = vunpack.c.l.b16 %v245
      %v326 = vunpack.c.l.b16 %v246
      %v327 = vunpack.c.l.b16 %v247
      %v328 = vunpack.c.l.b16 %v248
      %v329 = vunpack.c.l.b16 %v249
      %v330 = vunpack.c.l.b16 %v250
      %v331 = vunpack.c.l.b16 %v251
      %v332 = vunpack.c.l.b16 %v252
      %v333 = vunpack.c.l.b16 %v253
      %v334 = vunpack.c.l.b16 %v254
      %v335 = vunpack.c.l.b16 %v255
      %v336 = vunpack.c.l.b16 %v256
      %v337 = vunpack.c.l.b16 %v257
      %v338 = vpack.c.b16 %v307, %v306
      %v339 = vpack.c.b16 %v309, %v308
      %v340 = vpack.c.b16 %v311, %v310
      %v341 = vpack.c.b16 %v313, %v312
      %v342 = vpack.c.b16 %v315, %v314
      %v343 = vpack.c.b16 %v317, %v316
      %v344 = vpack.c.b16 %v319, %v318
      %v345 = vpack.c.b16 %v321, %v320
      %v346 = vpack.c.b16 %v323, %v322
      %v347 = vpack.c.b16 %v325, %v324
      %v348 = vpack.c.b16 %v327, %v326
      %v349 = vpack.c.b16 %v329, %v328
      %v350 = vpack.c.b16 %v331, %v330
      %v351 = vpack.c.b16 %v333, %v332
      %v352 = vpack.c.b16 %v335, %v334
      %v353 = vpack.c.b16 %v337, %v336
      %v386 = vunpack.c.l.b16 %v258
      %v387 = vunpack.c.h.b16 %v258
      %v388 = vunpack.c.l.b16 %v259
      %v389 = vunpack.c.h.b16 %v259
      %v390 = vunpack.c.l.b16 %v260
      %v391 = vunpack.c.h.b16 %v260
      %v392 = vunpack.c.l.b16 %v261
      %v393 = vunpack.c.h.b16 %v261
      %v394 = vunpack.c.l.b16 %v262
      %v395 = vunpack.c.h.b16 %v262
      %v396 = vunpack.c.l.b16 %v263
      %v397 = vunpack.c.h.b16 %v263
      %v398 = vunpack.c.l.b16 %v264
      %v399 = vunpack.c.h.b16 %v264
      %v400 = vunpack.c.l.b16 %v265
      %v401 = vunpack.c.h.b16 %v265
      %v402 = vunpack.c.l.b16 %v266
      %v403 = vunpack.c.h.b16 %v266
      %v404 = vunpack.c.l.b16 %v267
      %v405 = vunpack.c.h.b16 %v267
      %v406 = vunpack.c.l.b16 %v268
      %v407 = vunpack.c.h.b16 %v268
      %v408 = vunpack.c.l.b16 %v269
      %v409 = vunpack.c.h.b16 %v269
      %v410 = vunpack.c.l.b16 %v270
      %v411 = vunpack.c.h.b16 %v270
      %v412 = vunpack.c.l.b16 %v271
      %v413 = vunpack.c.h.b16 %v271
      %v414 = vunpack.c.l.b16 %v272
      %v415 = vunpack.c.h.b16 %v272
      %v416 = vunpack.c.l.b16 %v273
      %v417 = vunpack.c.h.b16 %v273
      %v418 = vpack.c.b16 %v388, %v386
      %v419 = vpack.c.b16 %v389, %v387
      %v420 = vpack.c.b16 %v392, %v390
      %v421 = vpack.c.b16 %v393, %v391
      %v422 = vpack.c.b16 %v396, %v394
      %v423 = vpack.c.b16 %v397, %v395
      %v424 = vpack.c.b16 %v400, %v398
      %v425 = vpack.c.b16 %v401, %v399
      %v426 = vpack.c.b16 %v404, %v402
      %v427 = vpack.c.b16 %v405, %v403
      %v428 = vpack.c.b16 %v408, %v406
      %v429 = vpack.c.b16 %v409, %v407
      %v430 = vpack.c.b16 %v412, %v410
      %v431 = vpack.c.b16 %v413, %v411
      %v432 = vpack.c.b16 %v416, %v414
      %v433 = vpack.c.b16 %v417, %v415
      %450 = vmatprep.subr.bf16.mxu0 %v419
      %451 = vmatpush1.bf16.msra.mxu0 %v418
      %452 = vmatprep.subr.bf16.mxu0 %v421
      %453 = vmatpush1.bf16.msra.mxu0 %v420
      %454 = vmatprep.subr.bf16.mxu0 %v423
      %455 = vmatpush1.bf16.msra.mxu0 %v422
      %456 = vmatprep.subr.bf16.mxu0 %v425
      %457 = vmatpush1.bf16.msra.mxu0 %v424
      %458 = vmatprep.subr.bf16.mxu0 %v427
      %459 = vmatpush1.bf16.msra.mxu0 %v426
      %460 = vmatprep.subr.bf16.mxu0 %v429
      %461 = vmatpush1.bf16.msra.mxu0 %v428
      %462 = vmatprep.subr.bf16.mxu0 %v431
      %463 = vmatpush1.bf16.msra.mxu0 %v430
      %464 = vmatprep.subr.bf16.mxu0 %v433
      %465 = vmatpush1.bf16.msra.mxu0 %v432
      %466 = vmatprep.subr.bf16.mxu0 0
      %467 = vmatpush1.bf16.msra.mxu0 0
      %468 = vmatprep.subr.bf16.mxu0 0
      %469 = vmatpush1.bf16.msra.mxu0 0
      %470 = vmatprep.subr.bf16.mxu0 0
      %471 = vmatpush1.bf16.msra.mxu0 0
      %472 = vmatprep.subr.bf16.mxu0 0
      %473 = vmatpush1.bf16.msra.mxu0 0
      %474 = vmatprep.subr.bf16.mxu0 0
      %475 = vmatpush1.bf16.msra.mxu0 0
      %476 = vmatprep.subr.bf16.mxu0 0
      %477 = vmatpush1.bf16.msra.mxu0 0
      %478 = vmatprep.subr.bf16.mxu0 0
      %479 = vmatpush1.bf16.msra.mxu0 0
      %480 = vmatprep.subr.bf16.mxu0 0
      %481 = vmatpush1.bf16.msra.mxu0 0
      %482 = vmatprep.mubr.bf16.mxu0 0
      %483 = vmatmul.mubr.bf16.gmra.mrb[0].mxu0 %v338
      %v484 = vpop.f32.mrb[0].mxu0
      %v485 = vadd.f32 0.0, %v484
      %v486 = vpop.f32.mrb[0].mxu0
      %v487 = vadd.f32 0.0, %v486
      %v488 = vpop.f32.mrb[0].mxu0
      %v489 = vadd.f32 0.0, %v488
      %v490 = vpop.f32.mrb[0].mxu0
      %v491 = vadd.f32 0.0, %v490
      %492 = vmatprep.mubr.bf16.mxu0 0
      %493 = vmatmul.mubr.bf16.gmra.mrb[0].mxu0 %v339
      %v494 = vpop.f32.mrb[0].mxu0
      %v495 = vadd.f32 0.0, %v494
      %v496 = vpop.f32.mrb[0].mxu0
      %v497 = vadd.f32 0.0, %v496
      %v498 = vpop.f32.mrb[0].mxu0
      %v499 = vadd.f32 0.0, %v498
      %v500 = vpop.f32.mrb[0].mxu0
      %v501 = vadd.f32 0.0, %v500
      %502 = vmatprep.mubr.bf16.mxu0 0
      %503 = vmatmul.mubr.bf16.gmra.mrb[0].mxu0 %v340
      %v504 = vpop.f32.mrb[0].mxu0
      %v505 = vadd.f32 0.0, %v504
      %v506 = vpop.f32.mrb[0].mxu0
      %v507 = vadd.f32 0.0, %v506
      %v508 = vpop.f32.mrb[0].mxu0
      %v509 = vadd.f32 0.0, %v508
      %v510 = vpop.f32.mrb[0].mxu0
      %v511 = vadd.f32 0.0, %v510
      %512 = vmatprep.mubr.bf16.mxu0 0
      %513 = vmatmul.mubr.bf16.gmra.mrb[0].mxu0 %v341
      %v514 = vpop.f32.mrb[0].mxu0
      %v515 = vadd.f32 0.0, %v514
      %v516 = vpop.f32.mrb[0].mxu0
      %v517 = vadd.f32 0.0, %v516
      %v518 = vpop.f32.mrb[0].mxu0
      %v519 = vadd.f32 0.0, %v518
      %v520 = vpop.f32.mrb[0].mxu0
      %v521 = vadd.f32 0.0, %v520
      %522 = vmatprep.mubr.bf16.mxu0 0
      %523 = vmatmul.mubr.bf16.gmra.mrb[0].mxu0 %v342
      %v524 = vpop.f32.mrb[0].mxu0
      %v525 = vadd.f32 0.0, %v524
      %v526 = vpop.f32.mrb[0].mxu0
      %v527 = vadd.f32 0.0, %v526
      %v528 = vpop.f32.mrb[0].mxu0
      %v529 = vadd.f32 0.0, %v528
      %v530 = vpop.f32.mrb[0].mxu0
      %v531 = vadd.f32 0.0, %v530
      %532 = vmatprep.mubr.bf16.mxu0 0
      %533 = vmatmul.mubr.bf16.gmra.mrb[0].mxu0 %v343
      %v534 = vpop.f32.mrb[0].mxu0
      %v535 = vadd.f32 0.0, %v534
      %v536 = vpop.f32.mrb[0].mxu0
      %v537 = vadd.f32 0.0, %v536
      %v538 = vpop.f32.mrb[0].mxu0
      %v539 = vadd.f32 0.0, %v538
      %v540 = vpop.f32.mrb[0].mxu0
      %v541 = vadd.f32 0.0, %v540
      %542 = vmatprep.mubr.bf16.mxu0 0
      %543 = vmatmul.mubr.bf16.gmra.mrb[0].mxu0 %v344
      %v544 = vpop.f32.mrb[0].mxu0
      %v545 = vadd.f32 0.0, %v544
      %v546 = vpop.f32.mrb[0].mxu0
      %v547 = vadd.f32 0.0, %v546
      %v548 = vpop.f32.mrb[0].mxu0
      %v549 = vadd.f32 0.0, %v548
      %v550 = vpop.f32.mrb[0].mxu0
      %v551 = vadd.f32 0.0, %v550
      %552 = vmatprep.mubr.bf16.mxu0 0
      %553 = vmatmul.mubr.bf16.gmra.mrb[0].mxu0 %v345
      %v554 = vpop.f32.mrb[0].mxu0
      %v555 = vadd.f32 0.0, %v554
      %v556 = vpop.f32.mrb[0].mxu0
      %v557 = vadd.f32 0.0, %v556
      %v558 = vpop.f32.mrb[0].mxu0
      %v559 = vadd.f32 0.0, %v558
      %v560 = vpop.f32.mrb[0].mxu0
      %v561 = vadd.f32 0.0, %v560
      %562 = vmatprep.mubr.bf16.mxu0 0
      %563 = vmatmul.mubr.bf16.gmra.mrb[0].mxu0 %v346
      %v564 = vpop.f32.mrb[0].mxu0
      %v565 = vadd.f32 0.0, %v564
      %v566 = vpop.f32.mrb[0].mxu0
      %v567 = vadd.f32 0.0, %v566
      %v568 = vpop.f32.mrb[0].mxu0
      %v569 = vadd.f32 0.0, %v568
      %v570 = vpop.f32.mrb[0].mxu0
      %v571 = vadd.f32 0.0, %v570
      %572 = vmatprep.mubr.bf16.mxu0 0
      %573 = vmatmul.mubr.bf16.gmra.mrb[0].mxu0 %v347
      %v574 = vpop.f32.mrb[0].mxu0
      %v575 = vadd.f32 0.0, %v574
      %v576 = vpop.f32.mrb[0].mxu0
      %v577 = vadd.f32 0.0, %v576
      %v578 = vpop.f32.mrb[0].mxu0
      %v579 = vadd.f32 0.0, %v578
      %v580 = vpop.f32.mrb[0].mxu0
      %v581 = vadd.f32 0.0, %v580
      %582 = vmatprep.mubr.bf16.mxu0 0
      %583 = vmatmul.mubr.bf16.gmra.mrb[0].mxu0 %v348
      %v584 = vpop.f32.mrb[0].mxu0
      %v585 = vadd.f32 0.0, %v584
      %v586 = vpop.f32.mrb[0].mxu0
      %v587 = vadd.f32 0.0, %v586
      %v588 = vpop.f32.mrb[0].mxu0
      %v589 = vadd.f32 0.0, %v588
      %v590 = vpop.f32.mrb[0].mxu0
      %v591 = vadd.f32 0.0, %v590
      %592 = vmatprep.mubr.bf16.mxu0 0
      %593 = vmatmul.mubr.bf16.gmra.mrb[0].mxu0 %v349
      %v594 = vpop.f32.mrb[0].mxu0
      %v595 = vadd.f32 0.0, %v594
      %v596 = vpop.f32.mrb[0].mxu0
      %v597 = vadd.f32 0.0, %v596
      %v598 = vpop.f32.mrb[0].mxu0
      %v599 = vadd.f32 0.0, %v598
      %v600 = vpop.f32.mrb[0].mxu0
      %v601 = vadd.f32 0.0, %v600
      %602 = vmatprep.mubr.bf16.mxu0 0
      %603 = vmatmul.mubr.bf16.gmra.mrb[0].mxu0 %v350
      %v604 = vpop.f32.mrb[0].mxu0
      %v605 = vadd.f32 0.0, %v604
      %v606 = vpop.f32.mrb[0].mxu0
      %v607 = vadd.f32 0.0, %v606
      %v608 = vpop.f32.mrb[0].mxu0
      %v609 = vadd.f32 0.0, %v608
      %v610 = vpop.f32.mrb[0].mxu0
      %v611 = vadd.f32 0.0, %v610
      %612 = vmatprep.mubr.bf16.mxu0 0
      %613 = vmatmul.mubr.bf16.gmra.mrb[0].mxu0 %v351
      %v614 = vpop.f32.mrb[0].mxu0
      %v615 = vadd.f32 0.0, %v614
      %v616 = vpop.f32.mrb[0].mxu0
      %v617 = vadd.f32 0.0, %v616
      %v618 = vpop.f32.mrb[0].mxu0
      %v619 = vadd.f32 0.0, %v618
      %v620 = vpop.f32.mrb[0].mxu0
      %v621 = vadd.f32 0.0, %v620
      %622 = vmatprep.mubr.bf16.mxu0 0
      %623 = vmatmul.mubr.bf16.gmra.mrb[0].mxu0 %v352
      %v624 = vpop.f32.mrb[0].mxu0
      %v625 = vadd.f32 0.0, %v624
      %v626 = vpop.f32.mrb[0].mxu0
      %v627 = vadd.f32 0.0, %v626
      %v628 = vpop.f32.mrb[0].mxu0
      %v629 = vadd.f32 0.0, %v628
      %v630 = vpop.f32.mrb[0].mxu0
      %v631 = vadd.f32 0.0, %v630
      %632 = vmatprep.mubr.bf16.mxu0 0
      %633 = vmatmul.mubr.bf16.gmra.mrb[0].mxu0 %v353
      %v634 = vpop.f32.mrb[0].mxu0
      %v635 = vadd.f32 0.0, %v634
      %v636 = vpop.f32.mrb[0].mxu0
      %v637 = vadd.f32 0.0, %v636
      %v638 = vpop.f32.mrb[0].mxu0
      %v639 = vadd.f32 0.0, %v638
      %v640 = vpop.f32.mrb[0].mxu0
      %v641 = vadd.f32 0.0, %v640
      %642 = vdwg.mxu0
      %v643 = vld [vmem:[%s3] sm:$0x1]
      %v645 = vlaneseq
      %v646 = vshrl.u32 %v645, 7
      %v647 = vsub.s32 0, %v646
      %v648 = vrot.slane %v643, %v647
      %v650 = vadd.f32 %v485, %v648
      %v651 = vadd.f32 %v489, %v648
      %v652 = vadd.f32 %v495, %v648
      %v653 = vadd.f32 %v499, %v648
      %v654 = vadd.f32 %v505, %v648
      %v655 = vadd.f32 %v509, %v648
      %v656 = vadd.f32 %v515, %v648
      %v657 = vadd.f32 %v519, %v648
      %v658 = vadd.f32 %v525, %v648
      %v659 = vadd.f32 %v529, %v648
      %v660 = vadd.f32 %v535, %v648
      %v661 = vadd.f32 %v539, %v648
      %v662 = vadd.f32 %v545, %v648
      %v663 = vadd.f32 %v549, %v648
      %v664 = vadd.f32 %v555, %v648
      %v665 = vadd.f32 %v559, %v648
      %v666 = vadd.f32 %v565, %v648
      %v667 = vadd.f32 %v569, %v648
      %v668 = vadd.f32 %v575, %v648
      %v669 = vadd.f32 %v579, %v648
      %v670 = vadd.f32 %v585, %v648
      %v671 = vadd.f32 %v589, %v648
      %v672 = vadd.f32 %v595, %v648
      %v673 = vadd.f32 %v599, %v648
      %v674 = vadd.f32 %v605, %v648
      %v675 = vadd.f32 %v609, %v648
      %v676 = vadd.f32 %v615, %v648
      %v677 = vadd.f32 %v619, %v648
      %v678 = vadd.f32 %v625, %v648
      %v679 = vadd.f32 %v629, %v648
      %v680 = vadd.f32 %v635, %v648
      %v681 = vadd.f32 %v639, %v648
      %v682 = vmax.f32 %v650, 0.0
      %v683 = vmax.f32 %v651, 0.0
      %v684 = vmax.f32 %v652, 0.0
      %v685 = vmax.f32 %v653, 0.0
      %v686 = vmax.f32 %v654, 0.0
      %v687 = vmax.f32 %v655, 0.0
      %v688 = vmax.f32 %v656, 0.0
      %v689 = vmax.f32 %v657, 0.0
      %v690 = vmax.f32 %v658, 0.0
      %v691 = vmax.f32 %v659, 0.0
      %v692 = vmax.f32 %v660, 0.0
      %v693 = vmax.f32 %v661, 0.0
      %v694 = vmax.f32 %v662, 0.0
      %v695 = vmax.f32 %v663, 0.0
      %v696 = vmax.f32 %v664, 0.0
      %v697 = vmax.f32 %v665, 0.0
      %v698 = vmax.f32 %v666, 0.0
      %v699 = vmax.f32 %v667, 0.0
      %v700 = vmax.f32 %v668, 0.0
      %v701 = vmax.f32 %v669, 0.0
      %v702 = vmax.f32 %v670, 0.0
      %v703 = vmax.f32 %v671, 0.0
      %v704 = vmax.f32 %v672, 0.0
      %v705 = vmax.f32 %v673, 0.0
      %v706 = vmax.f32 %v674, 0.0
      %v707 = vmax.f32 %v675, 0.0
      %v708 = vmax.f32 %v676, 0.0
      %v709 = vmax.f32 %v677, 0.0
      %v710 = vmax.f32 %v678, 0.0
      %v711 = vmax.f32 %v679, 0.0
      %v712 = vmax.f32 %v680, 0.0
      %v713 = vmax.f32 %v681, 0.0
      %v714 = vlaneseq
      %v715 = vshrl.u32 %v714, 7
      %v716 = vadd.s32 %v715, 8
      %vm717 = vcmp.ge.s32.totalorder %v715, 1
      %vm718 = vcmp.ge.s32.totalorder %v716, 1
      %v719 = vrot.slane %v682, 7
      %v720 = vrot.slane %v683, 7
      %v721 = vrot.slane %v684, 7
      %v722 = vrot.slane %v685, 7
      %v723 = vrot.slane %v686, 7
      %v724 = vrot.slane %v687, 7
      %v725 = vrot.slane %v688, 7
      %v726 = vrot.slane %v689, 7
      %v727 = vrot.slane %v690, 7
      %v728 = vrot.slane %v691, 7
      %v729 = vrot.slane %v692, 7
      %v730 = vrot.slane %v693, 7
      %v731 = vrot.slane %v694, 7
      %v732 = vrot.slane %v695, 7
      %v733 = vrot.slane %v696, 7
      %v734 = vrot.slane %v697, 7
      %v735 = vrot.slane %v698, 7
      %v736 = vrot.slane %v699, 7
      %v737 = vrot.slane %v700, 7
      %v738 = vrot.slane %v701, 7
      %v739 = vrot.slane %v702, 7
      %v740 = vrot.slane %v703, 7
      %v741 = vrot.slane %v704, 7
      %v742 = vrot.slane %v705, 7
      %v743 = vrot.slane %v706, 7
      %v744 = vrot.slane %v707, 7
      %v745 = vrot.slane %v708, 7
      %v746 = vrot.slane %v709, 7
      %v747 = vrot.slane %v710, 7
      %v748 = vrot.slane %v711, 7
      %v749 = vrot.slane %v712, 7
      %v750 = vrot.slane %v713, 7
      %vm751 = vcmp.lt.s32.totalorder %v715, 1
      %v752 = vsel %vm751, %v749, %v750
      %v753 = vsel %vm751, %v748, %v749
      %v754 = vsel %vm751, %v747, %v748
      %v755 = vsel %vm751, %v746, %v747
      %v756 = vsel %vm751, %v745, %v746
      %v757 = vsel %vm751, %v744, %v745
      %v758 = vsel %vm751, %v743, %v744
      %v759 = vsel %vm751, %v742, %v743
      %v760 = vsel %vm751, %v741, %v742
      %v761 = vsel %vm751, %v740, %v741
      %v762 = vsel %vm751, %v739, %v740
      %v763 = vsel %vm751, %v738, %v739
      %v764 = vsel %vm751, %v737, %v738
      %v765 = vsel %vm751, %v736, %v737
      %v766 = vsel %vm751, %v735, %v736
      %v767 = vsel %vm751, %v734, %v735
      %v768 = vsel %vm751, %v733, %v734
      %v769 = vsel %vm751, %v732, %v733
      %v770 = vsel %vm751, %v731, %v732
      %v771 = vsel %vm751, %v730, %v731
      %v772 = vsel %vm751, %v729, %v730
      %v773 = vsel %vm751, %v728, %v729
      %v774 = vsel %vm751, %v727, %v728
      %v775 = vsel %vm751, %v726, %v727
      %v776 = vsel %vm751, %v725, %v726
      %v777 = vsel %vm751, %v724, %v725
      %v778 = vsel %vm751, %v723, %v724
      %v779 = vsel %vm751, %v722, %v723
      %v780 = vsel %vm751, %v721, %v722
      %v781 = vsel %vm751, %v720, %v721
      %v782 = vsel %vm751, %v719, %v720
      %v783 = vsel %vm751, %v750, %v719
      %v784 = vsel %vm717, %v783, 0.0
      %v785 = vsel %vm718, %v782, 0.0
      %v786 = vsel %vm717, %v781, 0.0
      %v787 = vsel %vm718, %v780, 0.0
      %v788 = vsel %vm717, %v779, 0.0
      %v789 = vsel %vm718, %v778, 0.0
      %v790 = vsel %vm717, %v777, 0.0
      %v791 = vsel %vm718, %v776, 0.0
      %v792 = vsel %vm717, %v775, 0.0
      %v793 = vsel %vm718, %v774, 0.0
      %v794 = vsel %vm717, %v773, 0.0
      %v795 = vsel %vm718, %v772, 0.0
      %v796 = vsel %vm717, %v771, 0.0
      %v797 = vsel %vm718, %v770, 0.0
      %v798 = vsel %vm717, %v769, 0.0
      %v799 = vsel %vm718, %v768, 0.0
      %v800 = vsel %vm717, %v767, 0.0
      %v801 = vsel %vm718, %v766, 0.0
      %v802 = vsel %vm717, %v765, 0.0
      %v803 = vsel %vm718, %v764, 0.0
      %v804 = vsel %vm717, %v763, 0.0
      %v805 = vsel %vm718, %v762, 0.0
      %v806 = vsel %vm717, %v761, 0.0
      %v807 = vsel %vm718, %v760, 0.0
      %v808 = vsel %vm717, %v759, 0.0
      %v809 = vsel %vm718, %v758, 0.0
      %v810 = vsel %vm717, %v757, 0.0
      %v811 = vsel %vm718, %v756, 0.0
      %v812 = vsel %vm717, %v755, 0.0
      %v813 = vsel %vm718, %v754, 0.0
      %v814 = vsel %vm717, %v753, 0.0
      %v815 = vsel %vm718, %v752, 0.0
      %vm816 = vcmp.le.s32.totalorder %v715, 14
      %vm817 = vcmp.le.s32.totalorder %v716, 14
      %v818 = vrot.slane %v682, 1
      %v819 = vrot.slane %v683, 1
      %v820 = vrot.slane %v684, 1
      %v821 = vrot.slane %v685, 1
      %v822 = vrot.slane %v686, 1
      %v823 = vrot.slane %v687, 1
      %v824 = vrot.slane %v688, 1
      %v825 = vrot.slane %v689, 1
      %v826 = vrot.slane %v690, 1
      %v827 = vrot.slane %v691, 1
      %v828 = vrot.slane %v692, 1
      %v829 = vrot.slane %v693, 1
      %v830 = vrot.slane %v694, 1
      %v831 = vrot.slane %v695, 1
      %v832 = vrot.slane %v696, 1
      %v833 = vrot.slane %v697, 1
      %v834 = vrot.slane %v698, 1
      %v835 = vrot.slane %v699, 1
      %v836 = vrot.slane %v700, 1
      %v837 = vrot.slane %v701, 1
      %v838 = vrot.slane %v702, 1
      %v839 = vrot.slane %v703, 1
      %v840 = vrot.slane %v704, 1
      %v841 = vrot.slane %v705, 1
      %v842 = vrot.slane %v706, 1
      %v843 = vrot.slane %v707, 1
      %v844 = vrot.slane %v708, 1
      %v845 = vrot.slane %v709, 1
      %v846 = vrot.slane %v710, 1
      %v847 = vrot.slane %v711, 1
      %v848 = vrot.slane %v712, 1
      %v849 = vrot.slane %v713, 1
      %vm850 = vcmp.lt.s32.totalorder %v715, 7
      %v851 = vsel %vm850, %v848, %v849
      %v852 = vsel %vm850, %v847, %v848
      %v853 = vsel %vm850, %v846, %v847
      %v854 = vsel %vm850, %v845, %v846
      %v855 = vsel %vm850, %v844, %v845
      %v856 = vsel %vm850, %v843, %v844
      %v857 = vsel %vm850, %v842, %v843
      %v858 = vsel %vm850, %v841, %v842
      %v859 = vsel %vm850, %v840, %v841
      %v860 = vsel %vm850, %v839, %v840
      %v861 = vsel %vm850, %v838, %v839
      %v862 = vsel %vm850, %v837, %v838
      %v863 = vsel %vm850, %v836, %v837
      %v864 = vsel %vm850, %v835, %v836
      %v865 = vsel %vm850, %v834, %v835
      %v866 = vsel %vm850, %v833, %v834
      %v867 = vsel %vm850, %v832, %v833
      %v868 = vsel %vm850, %v831, %v832
      %v869 = vsel %vm850, %v830, %v831
      %v870 = vsel %vm850, %v829, %v830
      %v871 = vsel %vm850, %v828, %v829
      %v872 = vsel %vm850, %v827, %v828
      %v873 = vsel %vm850, %v826, %v827
      %v874 = vsel %vm850, %v825, %v826
      %v875 = vsel %vm850, %v824, %v825
      %v876 = vsel %vm850, %v823, %v824
      %v877 = vsel %vm850, %v822, %v823
      %v878 = vsel %vm850, %v821, %v822
      %v879 = vsel %vm850, %v820, %v821
      %v880 = vsel %vm850, %v819, %v820
      %v881 = vsel %vm850, %v818, %v819
      %v882 = vsel %vm850, %v849, %v818
      %v883 = vsel %vm816, %v881, 0.0
      %v884 = vsel %vm817, %v880, 0.0
      %v885 = vsel %vm816, %v879, 0.0
      %v886 = vsel %vm817, %v878, 0.0
      %v887 = vsel %vm816, %v877, 0.0
      %v888 = vsel %vm817, %v876, 0.0
      %v889 = vsel %vm816, %v875, 0.0
      %v890 = vsel %vm817, %v874, 0.0
      %v891 = vsel %vm816, %v873, 0.0
      %v892 = vsel %vm817, %v872, 0.0
      %v893 = vsel %vm816, %v871, 0.0
      %v894 = vsel %vm817, %v870, 0.0
      %v895 = vsel %vm816, %v869, 0.0
      %v896 = vsel %vm817, %v868, 0.0
      %v897 = vsel %vm816, %v867, 0.0
      %v898 = vsel %vm817, %v866, 0.0
      %v899 = vsel %vm816, %v865, 0.0
      %v900 = vsel %vm817, %v864, 0.0
      %v901 = vsel %vm816, %v863, 0.0
      %v902 = vsel %vm817, %v862, 0.0
      %v903 = vsel %vm816, %v861, 0.0
      %v904 = vsel %vm817, %v860, 0.0
      %v905 = vsel %vm816, %v859, 0.0
      %v906 = vsel %vm817, %v858, 0.0
      %v907 = vsel %vm816, %v857, 0.0
      %v908 = vsel %vm817, %v856, 0.0
      %v909 = vsel %vm816, %v855, 0.0
      %v910 = vsel %vm817, %v854, 0.0
      %v911 = vsel %vm816, %v853, 0.0
      %v912 = vsel %vm817, %v852, 0.0
      %v913 = vsel %vm816, %v851, 0.0
      %v914 = vsel %vm817, %v882, 0.0
      %v915 = vpack.c.bf16 %v785, %v784
      %v916 = vpack.c.bf16 %v787, %v786
      %v917 = vpack.c.bf16 %v789, %v788
      %v918 = vpack.c.bf16 %v791, %v790
      %v919 = vpack.c.bf16 %v793, %v792
      %v920 = vpack.c.bf16 %v795, %v794
      %v921 = vpack.c.bf16 %v797, %v796
      %v922 = vpack.c.bf16 %v799, %v798
      %v923 = vpack.c.bf16 %v801, %v800
      %v924 = vpack.c.bf16 %v803, %v802
      %v925 = vpack.c.bf16 %v805, %v804
      %v926 = vpack.c.bf16 %v807, %v806
      %v927 = vpack.c.bf16 %v809, %v808
      %v928 = vpack.c.bf16 %v811, %v810
      %v929 = vpack.c.bf16 %v813, %v812
      %v930 = vpack.c.bf16 %v815, %v814
      %v931 = vpack.c.bf16 %v683, %v682
      %v932 = vpack.c.bf16 %v685, %v684
      %v933 = vpack.c.bf16 %v687, %v686
      %v934 = vpack.c.bf16 %v689, %v688
      %v935 = vpack.c.bf16 %v691, %v690
      %v936 = vpack.c.bf16 %v693, %v692
      %v937 = vpack.c.bf16 %v695, %v694
      %v938 = vpack.c.bf16 %v697, %v696
      %v939 = vpack.c.bf16 %v699, %v698
      %v940 = vpack.c.bf16 %v701, %v700
      %v941 = vpack.c.bf16 %v703, %v702
      %v942 = vpack.c.bf16 %v705, %v704
      %v943 = vpack.c.bf16 %v707, %v706
      %v944 = vpack.c.bf16 %v709, %v708
      %v945 = vpack.c.bf16 %v711, %v710
      %v946 = vpack.c.bf16 %v713, %v712
      %v947 = vpack.c.bf16 %v884, %v883
      %v948 = vpack.c.bf16 %v886, %v885
      %v949 = vpack.c.bf16 %v888, %v887
      %v950 = vpack.c.bf16 %v890, %v889
      %v951 = vpack.c.bf16 %v892, %v891
      %v952 = vpack.c.bf16 %v894, %v893
      %v953 = vpack.c.bf16 %v896, %v895
      %v954 = vpack.c.bf16 %v898, %v897
      %v955 = vpack.c.bf16 %v900, %v899
      %v956 = vpack.c.bf16 %v902, %v901
      %v957 = vpack.c.bf16 %v904, %v903
      %v958 = vpack.c.bf16 %v906, %v905
      %v959 = vpack.c.bf16 %v908, %v907
      %v960 = vpack.c.bf16 %v910, %v909
      %v961 = vpack.c.bf16 %v912, %v911
      %v962 = vpack.c.bf16 %v914, %v913
      %v963 = vld [vmem:[%s2] sm:$0xf]
      %v964 = vld [vmem:[%s2 + $0x4] sm:$0xf]
      %v965 = vld [vmem:[%s2 + $0x8] sm:$0xf]
      %v966 = vld [vmem:[%s2 + $0xc] sm:$0xf]
      %v967 = vld [vmem:[%s2 + $0x10] sm:$0xf]
      %v968 = vld [vmem:[%s2 + $0x14] sm:$0xf]
      %v969 = vld [vmem:[%s2 + $0x18] sm:$0xf]
      %v970 = vld [vmem:[%s2 + $0x1c] sm:$0xf]
      %v971 = vld [vmem:[%s2 + $0x20] sm:$0xf]
      %v972 = vld [vmem:[%s2 + $0x24] sm:$0xf]
      %v973 = vld [vmem:[%s2 + $0x28] sm:$0xf]
      %v974 = vld [vmem:[%s2 + $0x2c] sm:$0xf]
      %v975 = vld [vmem:[%s2 + $0x30] sm:$0xf]
      %v976 = vld [vmem:[%s2 + $0x34] sm:$0xf]
      %v977 = vld [vmem:[%s2 + $0x38] sm:$0xf]
      %v978 = vld [vmem:[%s2 + $0x3c] sm:$0xf]
      %v995 = vunpack.c.l.b16 %v963
      %v996 = vunpack.c.l.b16 %v964
      %v997 = vunpack.c.l.b16 %v965
      %v998 = vunpack.c.l.b16 %v966
      %v999 = vunpack.c.l.b16 %v967
      %v1000 = vunpack.c.l.b16 %v968
      %v1001 = vunpack.c.l.b16 %v969
      %v1002 = vunpack.c.l.b16 %v970
      %v1003 = vunpack.c.l.b16 %v971
      %v1004 = vunpack.c.l.b16 %v972
      %v1005 = vunpack.c.l.b16 %v973
      %v1006 = vunpack.c.l.b16 %v974
      %v1007 = vunpack.c.l.b16 %v975
      %v1008 = vunpack.c.l.b16 %v976
      %v1009 = vunpack.c.l.b16 %v977
      %v1010 = vunpack.c.l.b16 %v978
      %v1011 = vpack.c.b16 %v996, %v995
      %v1012 = vpack.c.b16 %v998, %v997
      %v1013 = vpack.c.b16 %v1000, %v999
      %v1014 = vpack.c.b16 %v1002, %v1001
      %v1015 = vpack.c.b16 %v1004, %v1003
      %v1016 = vpack.c.b16 %v1006, %v1005
      %v1017 = vpack.c.b16 %v1008, %v1007
      %v1018 = vpack.c.b16 %v1010, %v1009
      %1027 = vmatprep.subr.bf16.mxu0 0
      %1028 = vmatpush1.bf16.msra.mxu0 %v1011
      %1029 = vmatprep.subr.bf16.mxu0 0
      %1030 = vmatpush1.bf16.msra.mxu0 %v1012
      %1031 = vmatprep.subr.bf16.mxu0 0
      %1032 = vmatpush1.bf16.msra.mxu0 %v1013
      %1033 = vmatprep.subr.bf16.mxu0 0
      %1034 = vmatpush1.bf16.msra.mxu0 %v1014
      %1035 = vmatprep.subr.bf16.mxu0 0
      %1036 = vmatpush1.bf16.msra.mxu0 %v1015
      %1037 = vmatprep.subr.bf16.mxu0 0
      %1038 = vmatpush1.bf16.msra.mxu0 %v1016
      %1039 = vmatprep.subr.bf16.mxu0 0
      %1040 = vmatpush1.bf16.msra.mxu0 %v1017
      %1041 = vmatprep.subr.bf16.mxu0 0
      %1042 = vmatpush1.bf16.msra.mxu0 %v1018
      %1043 = vmatprep.subr.bf16.mxu0 0
      %1044 = vmatpush1.bf16.msra.mxu0 0
      %1045 = vmatprep.subr.bf16.mxu0 0
      %1046 = vmatpush1.bf16.msra.mxu0 0
      %1047 = vmatprep.subr.bf16.mxu0 0
      %1048 = vmatpush1.bf16.msra.mxu0 0
      %1049 = vmatprep.subr.bf16.mxu0 0
      %1050 = vmatpush1.bf16.msra.mxu0 0
      %1051 = vmatprep.subr.bf16.mxu0 0
      %1052 = vmatpush1.bf16.msra.mxu0 0
      %1053 = vmatprep.subr.bf16.mxu0 0
      %1054 = vmatpush1.bf16.msra.mxu0 0
      %1055 = vmatprep.subr.bf16.mxu0 0
      %1056 = vmatpush1.bf16.msra.mxu0 0
      %1057 = vmatprep.subr.bf16.mxu0 0
      %1058 = vmatpush1.bf16.msra.mxu0 0
      %1059 = vmatprep.mubr.bf16.mxu0 0
      %1060 = vmatmul.mubr.bf16.gmra.mrb[0].mxu0 0
      %v1061 = vpop.f32.mrb[0].mxu0
      %v1062 = vadd.f32 0.0, %v1061
      %v1063 = vpop.f32.mrb[0].mxu0
      %v1064 = vpop.f32.mrb[0].mxu0
      %v1065 = vadd.f32 0.0, %v1064
      %v1066 = vpop.f32.mrb[0].mxu0
      %1067 = vmatprep.mubr.bf16.mxu0 0
      %1068 = vmatmul.mubr.bf16.gmra.mrb[0].mxu0 %v915
      %v1069 = vpop.f32.mrb[0].mxu0
      %v1070 = vadd.f32 0.0, %v1069
      %v1071 = vpop.f32.mrb[0].mxu0
      %v1072 = vpop.f32.mrb[0].mxu0
      %v1073 = vadd.f32 0.0, %v1072
      %v1074 = vpop.f32.mrb[0].mxu0
      %1075 = vmatprep.mubr.bf16.mxu0 0
      %1076 = vmatmul.mubr.bf16.gmra.mrb[0].mxu0 %v916
      %v1077 = vpop.f32.mrb[0].mxu0
      %v1078 = vadd.f32 0.0, %v1077
      %v1079 = vpop.f32.mrb[0].mxu0
      %v1080 = vpop.f32.mrb[0].mxu0
      %v1081 = vadd.f32 0.0, %v1080
      %v1082 = vpop.f32.mrb[0].mxu0
      %1083 = vmatprep.mubr.bf16.mxu0 0
      %1084 = vmatmul.mubr.bf16.gmra.mrb[0].mxu0 %v917
      %v1085 = vpop.f32.mrb[0].mxu0
      %v1086 = vadd.f32 0.0, %v1085
      %v1087 = vpop.f32.mrb[0].mxu0
      %v1088 = vpop.f32.mrb[0].mxu0
      %v1089 = vadd.f32 0.0, %v1088
      %v1090 = vpop.f32.mrb[0].mxu0
      %1091 = vmatprep.mubr.bf16.mxu0 0
      %1092 = vmatmul.mubr.bf16.gmra.mrb[0].mxu0 %v918
      %v1093 = vpop.f32.mrb[0].mxu0
      %v1094 = vadd.f32 0.0, %v1093
      %v1095 = vpop.f32.mrb[0].mxu0
      %v1096 = vpop.f32.mrb[0].mxu0
      %v1097 = vadd.f32 0.0, %v1096
      %v1098 = vpop.f32.mrb[0].mxu0
      %1099 = vmatprep.mubr.bf16.mxu0 0
      %1100 = vmatmul.mubr.bf16.gmra.mrb[0].mxu0 %v919
      %v1101 = vpop.f32.mrb[0].mxu0
      %v1102 = vadd.f32 0.0, %v1101
      %v1103 = vpop.f32.mrb[0].mxu0
      %v1104 = vpop.f32.mrb[0].mxu0
      %v1105 = vadd.f32 0.0, %v1104
      %v1106 = vpop.f32.mrb[0].mxu0
      %1107 = vmatprep.mubr.bf16.mxu0 0
      %1108 = vmatmul.mubr.bf16.gmra.mrb[0].mxu0 %v920
      %v1109 = vpop.f32.mrb[0].mxu0
      %v1110 = vadd.f32 0.0, %v1109
      %v1111 = vpop.f32.mrb[0].mxu0
      %v1112 = vpop.f32.mrb[0].mxu0
      %v1113 = vadd.f32 0.0, %v1112
      %v1114 = vpop.f32.mrb[0].mxu0
      %1115 = vmatprep.mubr.bf16.mxu0 0
      %1116 = vmatmul.mubr.bf16.gmra.mrb[0].mxu0 %v921
      %v1117 = vpop.f32.mrb[0].mxu0
      %v1118 = vadd.f32 0.0, %v1117
      %v1119 = vpop.f32.mrb[0].mxu0
      %v1120 = vpop.f32.mrb[0].mxu0
      %v1121 = vadd.f32 0.0, %v1120
      %v1122 = vpop.f32.mrb[0].mxu0
      %1123 = vmatprep.mubr.bf16.mxu0 0
      %1124 = vmatmul.mubr.bf16.gmra.mrb[0].mxu0 %v922
      %v1125 = vpop.f32.mrb[0].mxu0
      %v1126 = vadd.f32 0.0, %v1125
      %v1127 = vpop.f32.mrb[0].mxu0
      %v1128 = vpop.f32.mrb[0].mxu0
      %v1129 = vadd.f32 0.0, %v1128
      %v1130 = vpop.f32.mrb[0].mxu0
      %1131 = vmatprep.mubr.bf16.mxu0 0
      %1132 = vmatmul.mubr.bf16.gmra.mrb[0].mxu0 %v923
      %v1133 = vpop.f32.mrb[0].mxu0
      %v1134 = vadd.f32 0.0, %v1133
      %v1135 = vpop.f32.mrb[0].mxu0
      %v1136 = vpop.f32.mrb[0].mxu0
      %v1137 = vadd.f32 0.0, %v1136
      %v1138 = vpop.f32.mrb[0].mxu0
      %1139 = vmatprep.mubr.bf16.mxu0 0
      %1140 = vmatmul.mubr.bf16.gmra.mrb[0].mxu0 %v924
      %v1141 = vpop.f32.mrb[0].mxu0
      %v1142 = vadd.f32 0.0, %v1141
      %v1143 = vpop.f32.mrb[0].mxu0
      %v1144 = vpop.f32.mrb[0].mxu0
      %v1145 = vadd.f32 0.0, %v1144
      %v1146 = vpop.f32.mrb[0].mxu0
      %1147 = vmatprep.mubr.bf16.mxu0 0
      %1148 = vmatmul.mubr.bf16.gmra.mrb[0].mxu0 %v925
      %v1149 = vpop.f32.mrb[0].mxu0
      %v1150 = vadd.f32 0.0, %v1149
      %v1151 = vpop.f32.mrb[0].mxu0
      %v1152 = vpop.f32.mrb[0].mxu0
      %v1153 = vadd.f32 0.0, %v1152
      %v1154 = vpop.f32.mrb[0].mxu0
      %1155 = vmatprep.mubr.bf16.mxu0 0
      %1156 = vmatmul.mubr.bf16.gmra.mrb[0].mxu0 %v926
      %v1157 = vpop.f32.mrb[0].mxu0
      %v1158 = vadd.f32 0.0, %v1157
      %v1159 = vpop.f32.mrb[0].mxu0
      %v1160 = vpop.f32.mrb[0].mxu0
      %v1161 = vadd.f32 0.0, %v1160
      %v1162 = vpop.f32.mrb[0].mxu0
      %1163 = vmatprep.mubr.bf16.mxu0 0
      %1164 = vmatmul.mubr.bf16.gmra.mrb[0].mxu0 %v927
      %v1165 = vpop.f32.mrb[0].mxu0
      %v1166 = vadd.f32 0.0, %v1165
      %v1167 = vpop.f32.mrb[0].mxu0
      %v1168 = vpop.f32.mrb[0].mxu0
      %v1169 = vadd.f32 0.0, %v1168
      %v1170 = vpop.f32.mrb[0].mxu0
      %1171 = vmatprep.mubr.bf16.mxu0 0
      %1172 = vmatmul.mubr.bf16.gmra.mrb[0].mxu0 %v928
      %v1173 = vpop.f32.mrb[0].mxu0
      %v1174 = vadd.f32 0.0, %v1173
      %v1175 = vpop.f32.mrb[0].mxu0
      %v1176 = vpop.f32.mrb[0].mxu0
      %v1177 = vadd.f32 0.0, %v1176
      %v1178 = vpop.f32.mrb[0].mxu0
      %1179 = vmatprep.mubr.bf16.mxu0 0
      %1180 = vmatmul.mubr.bf16.gmra.mrb[0].mxu0 %v929
      %v1181 = vpop.f32.mrb[0].mxu0
      %v1182 = vadd.f32 0.0, %v1181
      %v1183 = vpop.f32.mrb[0].mxu0
      %v1184 = vpop.f32.mrb[0].mxu0
      %v1185 = vadd.f32 0.0, %v1184
      %v1186 = vpop.f32.mrb[0].mxu0
      %1187 = vdwg.mxu0
      %v1188 = vadd.f32 %v487, %v1062
      %v1189 = vadd.f32 %v491, %v1065
      %v1190 = vadd.f32 %v497, %v1070
      %v1191 = vadd.f32 %v501, %v1073
      %v1192 = vadd.f32 %v507, %v1078
      %v1193 = vadd.f32 %v511, %v1081
      %v1194 = vadd.f32 %v517, %v1086
      %v1195 = vadd.f32 %v521, %v1089
      %v1196 = vadd.f32 %v527, %v1094
      %v1197 = vadd.f32 %v531, %v1097
      %v1198 = vadd.f32 %v537, %v1102
      %v1199 = vadd.f32 %v541, %v1105
      %v1200 = vadd.f32 %v547, %v1110
      %v1201 = vadd.f32 %v551, %v1113
      %v1202 = vadd.f32 %v557, %v1118
      %v1203 = vadd.f32 %v561, %v1121
      %v1204 = vadd.f32 %v567, %v1126
      %v1205 = vadd.f32 %v571, %v1129
      %v1206 = vadd.f32 %v577, %v1134
      %v1207 = vadd.f32 %v581, %v1137
      %v1208 = vadd.f32 %v587, %v1142
      %v1209 = vadd.f32 %v591, %v1145
      %v1210 = vadd.f32 %v597, %v1150
      %v1211 = vadd.f32 %v601, %v1153
      %v1212 = vadd.f32 %v607, %v1158
      %v1213 = vadd.f32 %v611, %v1161
      %v1214 = vadd.f32 %v617, %v1166
      %v1215 = vadd.f32 %v621, %v1169
      %v1216 = vadd.f32 %v627, %v1174
      %v1217 = vadd.f32 %v631, %v1177
      %v1218 = vadd.f32 %v637, %v1182
      %v1219 = vadd.f32 %v641, %v1185
      %s1220 = scalar_lea.vmem %s2, 64
      %v1221 = vld [vmem:[%s1220] sm:$0xf]
      %v1222 = vld [vmem:[%s1220 + $0x4] sm:$0xf]
      %v1223 = vld [vmem:[%s1220 + $0x8] sm:$0xf]
      %v1224 = vld [vmem:[%s1220 + $0xc] sm:$0xf]
      %v1225 = vld [vmem:[%s1220 + $0x10] sm:$0xf]
      %v1226 = vld [vmem:[%s1220 + $0x14] sm:$0xf]
      %v1227 = vld [vmem:[%s1220 + $0x18] sm:$0xf]
      %v1228 = vld [vmem:[%s1220 + $0x1c] sm:$0xf]
      %v1229 = vld [vmem:[%s1220 + $0x20] sm:$0xf]
      %v1230 = vld [vmem:[%s1220 + $0x24] sm:$0xf]
      %v1231 = vld [vmem:[%s1220 + $0x28] sm:$0xf]
      %v1232 = vld [vmem:[%s1220 + $0x2c] sm:$0xf]
      %v1233 = vld [vmem:[%s1220 + $0x30] sm:$0xf]
      %v1234 = vld [vmem:[%s1220 + $0x34] sm:$0xf]
      %v1235 = vld [vmem:[%s1220 + $0x38] sm:$0xf]
      %v1236 = vld [vmem:[%s1220 + $0x3c] sm:$0xf]
      %v1253 = vunpack.c.l.b16 %v1221
      %v1254 = vunpack.c.l.b16 %v1222
      %v1255 = vunpack.c.l.b16 %v1223
      %v1256 = vunpack.c.l.b16 %v1224
      %v1257 = vunpack.c.l.b16 %v1225
      %v1258 = vunpack.c.l.b16 %v1226
      %v1259 = vunpack.c.l.b16 %v1227
      %v1260 = vunpack.c.l.b16 %v1228
      %v1261 = vunpack.c.l.b16 %v1229
      %v1262 = vunpack.c.l.b16 %v1230
      %v1263 = vunpack.c.l.b16 %v1231
      %v1264 = vunpack.c.l.b16 %v1232
      %v1265 = vunpack.c.l.b16 %v1233
      %v1266 = vunpack.c.l.b16 %v1234
      %v1267 = vunpack.c.l.b16 %v1235
      %v1268 = vunpack.c.l.b16 %v1236
      %v1269 = vpack.c.b16 %v1254, %v1253
      %v1270 = vpack.c.b16 %v1256, %v1255
      %v1271 = vpack.c.b16 %v1258, %v1257
      %v1272 = vpack.c.b16 %v1260, %v1259
      %v1273 = vpack.c.b16 %v1262, %v1261
      %v1274 = vpack.c.b16 %v1264, %v1263
      %v1275 = vpack.c.b16 %v1266, %v1265
      %v1276 = vpack.c.b16 %v1268, %v1267
      %1285 = vmatprep.subr.bf16.mxu0 0
      %1286 = vmatpush1.bf16.msra.mxu0 %v1269
      %1287 = vmatprep.subr.bf16.mxu0 0
      %1288 = vmatpush1.bf16.msra.mxu0 %v1270
      %1289 = vmatprep.subr.bf16.mxu0 0
      %1290 = vmatpush1.bf16.msra.mxu0 %v1271
      %1291 = vmatprep.subr.bf16.mxu0 0
      %1292 = vmatpush1.bf16.msra.mxu0 %v1272
      %1293 = vmatprep.subr.bf16.mxu0 0
      %1294 = vmatpush1.bf16.msra.mxu0 %v1273
      %1295 = vmatprep.subr.bf16.mxu0 0
      %1296 = vmatpush1.bf16.msra.mxu0 %v1274
      %1297 = vmatprep.subr.bf16.mxu0 0
      %1298 = vmatpush1.bf16.msra.mxu0 %v1275
      %1299 = vmatprep.subr.bf16.mxu0 0
      %1300 = vmatpush1.bf16.msra.mxu0 %v1276
      %1301 = vmatprep.subr.bf16.mxu0 0
      %1302 = vmatpush1.bf16.msra.mxu0 0
      %1303 = vmatprep.subr.bf16.mxu0 0
      %1304 = vmatpush1.bf16.msra.mxu0 0
      %1305 = vmatprep.subr.bf16.mxu0 0
      %1306 = vmatpush1.bf16.msra.mxu0 0
      %1307 = vmatprep.subr.bf16.mxu0 0
      %1308 = vmatpush1.bf16.msra.mxu0 0
      %1309 = vmatprep.subr.bf16.mxu0 0
      %1310 = vmatpush1.bf16.msra.mxu0 0
      %1311 = vmatprep.subr.bf16.mxu0 0
      %1312 = vmatpush1.bf16.msra.mxu0 0
      %1313 = vmatprep.subr.bf16.mxu0 0
      %1314 = vmatpush1.bf16.msra.mxu0 0
      %1315 = vmatprep.subr.bf16.mxu0 0
      %1316 = vmatpush1.bf16.msra.mxu0 0
      %1317 = vmatprep.mubr.bf16.mxu0 0
      %1318 = vmatmul.mubr.bf16.gmra.mrb[0].mxu0 0
      %v1319 = vpop.f32.mrb[0].mxu0
      %v1320 = vadd.f32 0.0, %v1319
      %v1321 = vpop.f32.mrb[0].mxu0
      %v1322 = vpop.f32.mrb[0].mxu0
      %v1323 = vadd.f32 0.0, %v1322
      %v1324 = vpop.f32.mrb[0].mxu0
      %1325 = vmatprep.mubr.bf16.mxu0 0
      %1326 = vmatmul.mubr.bf16.gmra.mrb[0].mxu0 %v931
      %v1327 = vpop.f32.mrb[0].mxu0
      %v1328 = vadd.f32 0.0, %v1327
      %v1329 = vpop.f32.mrb[0].mxu0
      %v1330 = vpop.f32.mrb[0].mxu0
      %v1331 = vadd.f32 0.0, %v1330
      %v1332 = vpop.f32.mrb[0].mxu0
      %1333 = vmatprep.mubr.bf16.mxu0 0
      %1334 = vmatmul.mubr.bf16.gmra.mrb[0].mxu0 %v932
      %v1335 = vpop.f32.mrb[0].mxu0
      %v1336 = vadd.f32 0.0, %v1335
      %v1337 = vpop.f32.mrb[0].mxu0
      %v1338 = vpop.f32.mrb[0].mxu0
      %v1339 = vadd.f32 0.0, %v1338
      %v1340 = vpop.f32.mrb[0].mxu0
      %1341 = vmatprep.mubr.bf16.mxu0 0
      %1342 = vmatmul.mubr.bf16.gmra.mrb[0].mxu0 %v933
      %v1343 = vpop.f32.mrb[0].mxu0
      %v1344 = vadd.f32 0.0, %v1343
      %v1345 = vpop.f32.mrb[0].mxu0
      %v1346 = vpop.f32.mrb[0].mxu0
      %v1347 = vadd.f32 0.0, %v1346
      %v1348 = vpop.f32.mrb[0].mxu0
      %1349 = vmatprep.mubr.bf16.mxu0 0
      %1350 = vmatmul.mubr.bf16.gmra.mrb[0].mxu0 %v934
      %v1351 = vpop.f32.mrb[0].mxu0
      %v1352 = vadd.f32 0.0, %v1351
      %v1353 = vpop.f32.mrb[0].mxu0
      %v1354 = vpop.f32.mrb[0].mxu0
      %v1355 = vadd.f32 0.0, %v1354
      %v1356 = vpop.f32.mrb[0].mxu0
      %1357 = vmatprep.mubr.bf16.mxu0 0
      %1358 = vmatmul.mubr.bf16.gmra.mrb[0].mxu0 %v935
      %v1359 = vpop.f32.mrb[0].mxu0
      %v1360 = vadd.f32 0.0, %v1359
      %v1361 = vpop.f32.mrb[0].mxu0
      %v1362 = vpop.f32.mrb[0].mxu0
      %v1363 = vadd.f32 0.0, %v1362
      %v1364 = vpop.f32.mrb[0].mxu0
      %1365 = vmatprep.mubr.bf16.mxu0 0
      %1366 = vmatmul.mubr.bf16.gmra.mrb[0].mxu0 %v936
      %v1367 = vpop.f32.mrb[0].mxu0
      %v1368 = vadd.f32 0.0, %v1367
      %v1369 = vpop.f32.mrb[0].mxu0
      %v1370 = vpop.f32.mrb[0].mxu0
      %v1371 = vadd.f32 0.0, %v1370
      %v1372 = vpop.f32.mrb[0].mxu0
      %1373 = vmatprep.mubr.bf16.mxu0 0
      %1374 = vmatmul.mubr.bf16.gmra.mrb[0].mxu0 %v937
      %v1375 = vpop.f32.mrb[0].mxu0
      %v1376 = vadd.f32 0.0, %v1375
      %v1377 = vpop.f32.mrb[0].mxu0
      %v1378 = vpop.f32.mrb[0].mxu0
      %v1379 = vadd.f32 0.0, %v1378
      %v1380 = vpop.f32.mrb[0].mxu0
      %1381 = vmatprep.mubr.bf16.mxu0 0
      %1382 = vmatmul.mubr.bf16.gmra.mrb[0].mxu0 %v938
      %v1383 = vpop.f32.mrb[0].mxu0
      %v1384 = vadd.f32 0.0, %v1383
      %v1385 = vpop.f32.mrb[0].mxu0
      %v1386 = vpop.f32.mrb[0].mxu0
      %v1387 = vadd.f32 0.0, %v1386
      %v1388 = vpop.f32.mrb[0].mxu0
      %1389 = vmatprep.mubr.bf16.mxu0 0
      %1390 = vmatmul.mubr.bf16.gmra.mrb[0].mxu0 %v939
      %v1391 = vpop.f32.mrb[0].mxu0
      %v1392 = vadd.f32 0.0, %v1391
      %v1393 = vpop.f32.mrb[0].mxu0
      %v1394 = vpop.f32.mrb[0].mxu0
      %v1395 = vadd.f32 0.0, %v1394
      %v1396 = vpop.f32.mrb[0].mxu0
      %1397 = vmatprep.mubr.bf16.mxu0 0
      %1398 = vmatmul.mubr.bf16.gmra.mrb[0].mxu0 %v940
      %v1399 = vpop.f32.mrb[0].mxu0
      %v1400 = vadd.f32 0.0, %v1399
      %v1401 = vpop.f32.mrb[0].mxu0
      %v1402 = vpop.f32.mrb[0].mxu0
      %v1403 = vadd.f32 0.0, %v1402
      %v1404 = vpop.f32.mrb[0].mxu0
      %1405 = vmatprep.mubr.bf16.mxu0 0
      %1406 = vmatmul.mubr.bf16.gmra.mrb[0].mxu0 %v941
      %v1407 = vpop.f32.mrb[0].mxu0
      %v1408 = vadd.f32 0.0, %v1407
      %v1409 = vpop.f32.mrb[0].mxu0
      %v1410 = vpop.f32.mrb[0].mxu0
      %v1411 = vadd.f32 0.0, %v1410
      %v1412 = vpop.f32.mrb[0].mxu0
      %1413 = vmatprep.mubr.bf16.mxu0 0
      %1414 = vmatmul.mubr.bf16.gmra.mrb[0].mxu0 %v942
      %v1415 = vpop.f32.mrb[0].mxu0
      %v1416 = vadd.f32 0.0, %v1415
      %v1417 = vpop.f32.mrb[0].mxu0
      %v1418 = vpop.f32.mrb[0].mxu0
      %v1419 = vadd.f32 0.0, %v1418
      %v1420 = vpop.f32.mrb[0].mxu0
      %1421 = vmatprep.mubr.bf16.mxu0 0
      %1422 = vmatmul.mubr.bf16.gmra.mrb[0].mxu0 %v943
      %v1423 = vpop.f32.mrb[0].mxu0
      %v1424 = vadd.f32 0.0, %v1423
      %v1425 = vpop.f32.mrb[0].mxu0
      %v1426 = vpop.f32.mrb[0].mxu0
      %v1427 = vadd.f32 0.0, %v1426
      %v1428 = vpop.f32.mrb[0].mxu0
      %1429 = vmatprep.mubr.bf16.mxu0 0
      %1430 = vmatmul.mubr.bf16.gmra.mrb[0].mxu0 %v944
      %v1431 = vpop.f32.mrb[0].mxu0
      %v1432 = vadd.f32 0.0, %v1431
      %v1433 = vpop.f32.mrb[0].mxu0
      %v1434 = vpop.f32.mrb[0].mxu0
      %v1435 = vadd.f32 0.0, %v1434
      %v1436 = vpop.f32.mrb[0].mxu0
      %1437 = vmatprep.mubr.bf16.mxu0 0
      %1438 = vmatmul.mubr.bf16.gmra.mrb[0].mxu0 %v945
      %v1439 = vpop.f32.mrb[0].mxu0
      %v1440 = vadd.f32 0.0, %v1439
      %v1441 = vpop.f32.mrb[0].mxu0
      %v1442 = vpop.f32.mrb[0].mxu0
      %v1443 = vadd.f32 0.0, %v1442
      %v1444 = vpop.f32.mrb[0].mxu0
      %1445 = vdwg.mxu0
      %v1446 = vadd.f32 %v1188, %v1320
      %v1447 = vadd.f32 %v1189, %v1323
      %v1448 = vadd.f32 %v1190, %v1328
      %v1449 = vadd.f32 %v1191, %v1331
      %v1450 = vadd.f32 %v1192, %v1336
      %v1451 = vadd.f32 %v1193, %v1339
      %v1452 = vadd.f32 %v1194, %v1344
      %v1453 = vadd.f32 %v1195, %v1347
      %v1454 = vadd.f32 %v1196, %v1352
      %v1455 = vadd.f32 %v1197, %v1355
      %v1456 = vadd.f32 %v1198, %v1360
      %v1457 = vadd.f32 %v1199, %v1363
      %v1458 = vadd.f32 %v1200, %v1368
      %v1459 = vadd.f32 %v1201, %v1371
      %v1460 = vadd.f32 %v1202, %v1376
      %v1461 = vadd.f32 %v1203, %v1379
      %v1462 = vadd.f32 %v1204, %v1384
      %v1463 = vadd.f32 %v1205, %v1387
      %v1464 = vadd.f32 %v1206, %v1392
      %v1465 = vadd.f32 %v1207, %v1395
      %v1466 = vadd.f32 %v1208, %v1400
      %v1467 = vadd.f32 %v1209, %v1403
      %v1468 = vadd.f32 %v1210, %v1408
      %v1469 = vadd.f32 %v1211, %v1411
      %v1470 = vadd.f32 %v1212, %v1416
      %v1471 = vadd.f32 %v1213, %v1419
      %v1472 = vadd.f32 %v1214, %v1424
      %v1473 = vadd.f32 %v1215, %v1427
      %v1474 = vadd.f32 %v1216, %v1432
      %v1475 = vadd.f32 %v1217, %v1435
      %v1476 = vadd.f32 %v1218, %v1440
      %v1477 = vadd.f32 %v1219, %v1443
      %s1478 = scalar_lea.vmem %s2, 128
      %v1479 = vld [vmem:[%s1478] sm:$0xf]
      %v1480 = vld [vmem:[%s1478 + $0x4] sm:$0xf]
      %v1481 = vld [vmem:[%s1478 + $0x8] sm:$0xf]
      %v1482 = vld [vmem:[%s1478 + $0xc] sm:$0xf]
      %v1483 = vld [vmem:[%s1478 + $0x10] sm:$0xf]
      %v1484 = vld [vmem:[%s1478 + $0x14] sm:$0xf]
      %v1485 = vld [vmem:[%s1478 + $0x18] sm:$0xf]
      %v1486 = vld [vmem:[%s1478 + $0x1c] sm:$0xf]
      %v1487 = vld [vmem:[%s1478 + $0x20] sm:$0xf]
      %v1488 = vld [vmem:[%s1478 + $0x24] sm:$0xf]
      %v1489 = vld [vmem:[%s1478 + $0x28] sm:$0xf]
      %v1490 = vld [vmem:[%s1478 + $0x2c] sm:$0xf]
      %v1491 = vld [vmem:[%s1478 + $0x30] sm:$0xf]
      %v1492 = vld [vmem:[%s1478 + $0x34] sm:$0xf]
      %v1493 = vld [vmem:[%s1478 + $0x38] sm:$0xf]
      %v1494 = vld [vmem:[%s1478 + $0x3c] sm:$0xf]
      %v1511 = vunpack.c.l.b16 %v1479
      %v1512 = vunpack.c.l.b16 %v1480
      %v1513 = vunpack.c.l.b16 %v1481
      %v1514 = vunpack.c.l.b16 %v1482
      %v1515 = vunpack.c.l.b16 %v1483
      %v1516 = vunpack.c.l.b16 %v1484
      %v1517 = vunpack.c.l.b16 %v1485
      %v1518 = vunpack.c.l.b16 %v1486
      %v1519 = vunpack.c.l.b16 %v1487
      %v1520 = vunpack.c.l.b16 %v1488
      %v1521 = vunpack.c.l.b16 %v1489
      %v1522 = vunpack.c.l.b16 %v1490
      %v1523 = vunpack.c.l.b16 %v1491
      %v1524 = vunpack.c.l.b16 %v1492
      %v1525 = vunpack.c.l.b16 %v1493
      %v1526 = vunpack.c.l.b16 %v1494
      %v1527 = vpack.c.b16 %v1512, %v1511
      %v1528 = vpack.c.b16 %v1514, %v1513
      %v1529 = vpack.c.b16 %v1516, %v1515
      %v1530 = vpack.c.b16 %v1518, %v1517
      %v1531 = vpack.c.b16 %v1520, %v1519
      %v1532 = vpack.c.b16 %v1522, %v1521
      %v1533 = vpack.c.b16 %v1524, %v1523
      %v1534 = vpack.c.b16 %v1526, %v1525
      %1543 = vmatprep.subr.bf16.mxu0 0
      %1544 = vmatpush1.bf16.msra.mxu0 %v1527
      %1545 = vmatprep.subr.bf16.mxu0 0
      %1546 = vmatpush1.bf16.msra.mxu0 %v1528
      %1547 = vmatprep.subr.bf16.mxu0 0
      %1548 = vmatpush1.bf16.msra.mxu0 %v1529
      %1549 = vmatprep.subr.bf16.mxu0 0
      %1550 = vmatpush1.bf16.msra.mxu0 %v1530
      %1551 = vmatprep.subr.bf16.mxu0 0
      %1552 = vmatpush1.bf16.msra.mxu0 %v1531
      %1553 = vmatprep.subr.bf16.mxu0 0
      %1554 = vmatpush1.bf16.msra.mxu0 %v1532
      %1555 = vmatprep.subr.bf16.mxu0 0
      %1556 = vmatpush1.bf16.msra.mxu0 %v1533
      %1557 = vmatprep.subr.bf16.mxu0 0
      %1558 = vmatpush1.bf16.msra.mxu0 %v1534
      %1559 = vmatprep.subr.bf16.mxu0 0
      %1560 = vmatpush1.bf16.msra.mxu0 0
      %1561 = vmatprep.subr.bf16.mxu0 0
      %1562 = vmatpush1.bf16.msra.mxu0 0
      %1563 = vmatprep.subr.bf16.mxu0 0
      %1564 = vmatpush1.bf16.msra.mxu0 0
      %1565 = vmatprep.subr.bf16.mxu0 0
      %1566 = vmatpush1.bf16.msra.mxu0 0
      %1567 = vmatprep.subr.bf16.mxu0 0
      %1568 = vmatpush1.bf16.msra.mxu0 0
      %1569 = vmatprep.subr.bf16.mxu0 0
      %1570 = vmatpush1.bf16.msra.mxu0 0
      %1571 = vmatprep.subr.bf16.mxu0 0
      %1572 = vmatpush1.bf16.msra.mxu0 0
      %1573 = vmatprep.subr.bf16.mxu0 0
      %1574 = vmatpush1.bf16.msra.mxu0 0
      %1575 = vmatprep.mubr.bf16.mxu0 0
      %1576 = vmatmul.mubr.bf16.gmra.mrb[0].mxu0 0
      %v1577 = vpop.f32.mrb[0].mxu0
      %v1578 = vadd.f32 0.0, %v1577
      %v1579 = vpop.f32.mrb[0].mxu0
      %v1580 = vpop.f32.mrb[0].mxu0
      %v1581 = vadd.f32 0.0, %v1580
      %v1582 = vpop.f32.mrb[0].mxu0
      %1583 = vmatprep.mubr.bf16.mxu0 0
      %1584 = vmatmul.mubr.bf16.gmra.mrb[0].mxu0 %v947
      %v1585 = vpop.f32.mrb[0].mxu0
      %v1586 = vadd.f32 0.0, %v1585
      %v1587 = vpop.f32.mrb[0].mxu0
      %v1588 = vpop.f32.mrb[0].mxu0
      %v1589 = vadd.f32 0.0, %v1588
      %v1590 = vpop.f32.mrb[0].mxu0
      %1591 = vmatprep.mubr.bf16.mxu0 0
      %1592 = vmatmul.mubr.bf16.gmra.mrb[0].mxu0 %v948
      %v1593 = vpop.f32.mrb[0].mxu0
      %v1594 = vadd.f32 0.0, %v1593
      %v1595 = vpop.f32.mrb[0].mxu0
      %v1596 = vpop.f32.mrb[0].mxu0
      %v1597 = vadd.f32 0.0, %v1596
      %v1598 = vpop.f32.mrb[0].mxu0
      %1599 = vmatprep.mubr.bf16.mxu0 0
      %1600 = vmatmul.mubr.bf16.gmra.mrb[0].mxu0 %v949
      %v1601 = vpop.f32.mrb[0].mxu0
      %v1602 = vadd.f32 0.0, %v1601
      %v1603 = vpop.f32.mrb[0].mxu0
      %v1604 = vpop.f32.mrb[0].mxu0
      %v1605 = vadd.f32 0.0, %v1604
      %v1606 = vpop.f32.mrb[0].mxu0
      %1607 = vmatprep.mubr.bf16.mxu0 0
      %1608 = vmatmul.mubr.bf16.gmra.mrb[0].mxu0 %v950
      %v1609 = vpop.f32.mrb[0].mxu0
      %v1610 = vadd.f32 0.0, %v1609
      %v1611 = vpop.f32.mrb[0].mxu0
      %v1612 = vpop.f32.mrb[0].mxu0
      %v1613 = vadd.f32 0.0, %v1612
      %v1614 = vpop.f32.mrb[0].mxu0
      %1615 = vmatprep.mubr.bf16.mxu0 0
      %1616 = vmatmul.mubr.bf16.gmra.mrb[0].mxu0 %v951
      %v1617 = vpop.f32.mrb[0].mxu0
      %v1618 = vadd.f32 0.0, %v1617
      %v1619 = vpop.f32.mrb[0].mxu0
      %v1620 = vpop.f32.mrb[0].mxu0
      %v1621 = vadd.f32 0.0, %v1620
      %v1622 = vpop.f32.mrb[0].mxu0
      %1623 = vmatprep.mubr.bf16.mxu0 0
      %1624 = vmatmul.mubr.bf16.gmra.mrb[0].mxu0 %v952
      %v1625 = vpop.f32.mrb[0].mxu0
      %v1626 = vadd.f32 0.0, %v1625
      %v1627 = vpop.f32.mrb[0].mxu0
      %v1628 = vpop.f32.mrb[0].mxu0
      %v1629 = vadd.f32 0.0, %v1628
      %v1630 = vpop.f32.mrb[0].mxu0
      %1631 = vmatprep.mubr.bf16.mxu0 0
      %1632 = vmatmul.mubr.bf16.gmra.mrb[0].mxu0 %v953
      %v1633 = vpop.f32.mrb[0].mxu0
      %v1634 = vadd.f32 0.0, %v1633
      %v1635 = vpop.f32.mrb[0].mxu0
      %v1636 = vpop.f32.mrb[0].mxu0
      %v1637 = vadd.f32 0.0, %v1636
      %v1638 = vpop.f32.mrb[0].mxu0
      %1639 = vmatprep.mubr.bf16.mxu0 0
      %1640 = vmatmul.mubr.bf16.gmra.mrb[0].mxu0 %v954
      %v1641 = vpop.f32.mrb[0].mxu0
      %v1642 = vadd.f32 0.0, %v1641
      %v1643 = vpop.f32.mrb[0].mxu0
      %v1644 = vpop.f32.mrb[0].mxu0
      %v1645 = vadd.f32 0.0, %v1644
      %v1646 = vpop.f32.mrb[0].mxu0
      %1647 = vmatprep.mubr.bf16.mxu0 0
      %1648 = vmatmul.mubr.bf16.gmra.mrb[0].mxu0 %v955
      %v1649 = vpop.f32.mrb[0].mxu0
      %v1650 = vadd.f32 0.0, %v1649
      %v1651 = vpop.f32.mrb[0].mxu0
      %v1652 = vpop.f32.mrb[0].mxu0
      %v1653 = vadd.f32 0.0, %v1652
      %v1654 = vpop.f32.mrb[0].mxu0
      %1655 = vmatprep.mubr.bf16.mxu0 0
      %1656 = vmatmul.mubr.bf16.gmra.mrb[0].mxu0 %v956
      %v1657 = vpop.f32.mrb[0].mxu0
      %v1658 = vadd.f32 0.0, %v1657
      %v1659 = vpop.f32.mrb[0].mxu0
      %v1660 = vpop.f32.mrb[0].mxu0
      %v1661 = vadd.f32 0.0, %v1660
      %v1662 = vpop.f32.mrb[0].mxu0
      %1663 = vmatprep.mubr.bf16.mxu0 0
      %1664 = vmatmul.mubr.bf16.gmra.mrb[0].mxu0 %v957
      %v1665 = vpop.f32.mrb[0].mxu0
      %v1666 = vadd.f32 0.0, %v1665
      %v1667 = vpop.f32.mrb[0].mxu0
      %v1668 = vpop.f32.mrb[0].mxu0
      %v1669 = vadd.f32 0.0, %v1668
      %v1670 = vpop.f32.mrb[0].mxu0
      %1671 = vmatprep.mubr.bf16.mxu0 0
      %1672 = vmatmul.mubr.bf16.gmra.mrb[0].mxu0 %v958
      %v1673 = vpop.f32.mrb[0].mxu0
      %v1674 = vadd.f32 0.0, %v1673
      %v1675 = vpop.f32.mrb[0].mxu0
      %v1676 = vpop.f32.mrb[0].mxu0
      %v1677 = vadd.f32 0.0, %v1676
      %v1678 = vpop.f32.mrb[0].mxu0
      %1679 = vmatprep.mubr.bf16.mxu0 0
      %1680 = vmatmul.mubr.bf16.gmra.mrb[0].mxu0 %v959
      %v1681 = vpop.f32.mrb[0].mxu0
      %v1682 = vadd.f32 0.0, %v1681
      %v1683 = vpop.f32.mrb[0].mxu0
      %v1684 = vpop.f32.mrb[0].mxu0
      %v1685 = vadd.f32 0.0, %v1684
      %v1686 = vpop.f32.mrb[0].mxu0
      %1687 = vmatprep.mubr.bf16.mxu0 0
      %1688 = vmatmul.mubr.bf16.gmra.mrb[0].mxu0 %v960
      %v1689 = vpop.f32.mrb[0].mxu0
      %v1690 = vadd.f32 0.0, %v1689
      %v1691 = vpop.f32.mrb[0].mxu0
      %v1692 = vpop.f32.mrb[0].mxu0
      %v1693 = vadd.f32 0.0, %v1692
      %v1694 = vpop.f32.mrb[0].mxu0
      %1695 = vmatprep.mubr.bf16.mxu0 0
      %1696 = vmatmul.mubr.bf16.gmra.mrb[0].mxu0 %v961
      %v1697 = vpop.f32.mrb[0].mxu0
      %v1698 = vadd.f32 0.0, %v1697
      %v1699 = vpop.f32.mrb[0].mxu0
      %v1700 = vpop.f32.mrb[0].mxu0
      %v1701 = vadd.f32 0.0, %v1700
      %v1702 = vpop.f32.mrb[0].mxu0
      %1703 = vdwg.mxu0
      %v1704 = vadd.f32 %v1446, %v1578
      %v1705 = vadd.f32 %v1447, %v1581
      %v1706 = vadd.f32 %v1448, %v1586
      %v1707 = vadd.f32 %v1449, %v1589
      %v1708 = vadd.f32 %v1450, %v1594
      %v1709 = vadd.f32 %v1451, %v1597
      %v1710 = vadd.f32 %v1452, %v1602
      %v1711 = vadd.f32 %v1453, %v1605
      %v1712 = vadd.f32 %v1454, %v1610
      %v1713 = vadd.f32 %v1455, %v1613
      %v1714 = vadd.f32 %v1456, %v1618
      %v1715 = vadd.f32 %v1457, %v1621
      %v1716 = vadd.f32 %v1458, %v1626
      %v1717 = vadd.f32 %v1459, %v1629
      %v1718 = vadd.f32 %v1460, %v1634
      %v1719 = vadd.f32 %v1461, %v1637
      %v1720 = vadd.f32 %v1462, %v1642
      %v1721 = vadd.f32 %v1463, %v1645
      %v1722 = vadd.f32 %v1464, %v1650
      %v1723 = vadd.f32 %v1465, %v1653
      %v1724 = vadd.f32 %v1466, %v1658
      %v1725 = vadd.f32 %v1467, %v1661
      %v1726 = vadd.f32 %v1468, %v1666
      %v1727 = vadd.f32 %v1469, %v1669
      %v1728 = vadd.f32 %v1470, %v1674
      %v1729 = vadd.f32 %v1471, %v1677
      %v1730 = vadd.f32 %v1472, %v1682
      %v1731 = vadd.f32 %v1473, %v1685
      %v1732 = vadd.f32 %v1474, %v1690
      %v1733 = vadd.f32 %v1475, %v1693
      %v1734 = vadd.f32 %v1476, %v1698
      %v1735 = vadd.f32 %v1477, %v1701
      %s1736 = scalar_lea.vmem %s2, 192
      %v1737 = vld [vmem:[%s1736] sm:$0xf]
      %v1738 = vld [vmem:[%s1736 + $0x4] sm:$0xf]
      %v1739 = vld [vmem:[%s1736 + $0x8] sm:$0xf]
      %v1740 = vld [vmem:[%s1736 + $0xc] sm:$0xf]
      %v1741 = vld [vmem:[%s1736 + $0x10] sm:$0xf]
      %v1742 = vld [vmem:[%s1736 + $0x14] sm:$0xf]
      %v1743 = vld [vmem:[%s1736 + $0x18] sm:$0xf]
      %v1744 = vld [vmem:[%s1736 + $0x1c] sm:$0xf]
      %v1745 = vld [vmem:[%s1736 + $0x20] sm:$0xf]
      %v1746 = vld [vmem:[%s1736 + $0x24] sm:$0xf]
      %v1747 = vld [vmem:[%s1736 + $0x28] sm:$0xf]
      %v1748 = vld [vmem:[%s1736 + $0x2c] sm:$0xf]
      %v1749 = vld [vmem:[%s1736 + $0x30] sm:$0xf]
      %v1750 = vld [vmem:[%s1736 + $0x34] sm:$0xf]
      %v1751 = vld [vmem:[%s1736 + $0x38] sm:$0xf]
      %v1752 = vld [vmem:[%s1736 + $0x3c] sm:$0xf]
      %v1769 = vunpack.c.l.b16 %v1737
      %v1770 = vunpack.c.l.b16 %v1738
      %v1771 = vunpack.c.l.b16 %v1739
      %v1772 = vunpack.c.l.b16 %v1740
      %v1773 = vunpack.c.l.b16 %v1741
      %v1774 = vunpack.c.l.b16 %v1742
      %v1775 = vunpack.c.l.b16 %v1743
      %v1776 = vunpack.c.l.b16 %v1744
      %v1777 = vunpack.c.l.b16 %v1745
      %v1778 = vunpack.c.l.b16 %v1746
      %v1779 = vunpack.c.l.b16 %v1747
      %v1780 = vunpack.c.l.b16 %v1748
      %v1781 = vunpack.c.l.b16 %v1749
      %v1782 = vunpack.c.l.b16 %v1750
      %v1783 = vunpack.c.l.b16 %v1751
      %v1784 = vunpack.c.l.b16 %v1752
      %v1785 = vpack.c.b16 %v1770, %v1769
      %v1786 = vpack.c.b16 %v1772, %v1771
      %v1787 = vpack.c.b16 %v1774, %v1773
      %v1788 = vpack.c.b16 %v1776, %v1775
      %v1789 = vpack.c.b16 %v1778, %v1777
      %v1790 = vpack.c.b16 %v1780, %v1779
      %v1791 = vpack.c.b16 %v1782, %v1781
      %v1792 = vpack.c.b16 %v1784, %v1783
      %1801 = vmatprep.subr.bf16.mxu0 0
      %1802 = vmatpush1.bf16.msra.mxu0 %v1785
      %1803 = vmatprep.subr.bf16.mxu0 0
      %1804 = vmatpush1.bf16.msra.mxu0 %v1786
      %1805 = vmatprep.subr.bf16.mxu0 0
      %1806 = vmatpush1.bf16.msra.mxu0 %v1787
      %1807 = vmatprep.subr.bf16.mxu0 0
      %1808 = vmatpush1.bf16.msra.mxu0 %v1788
      %1809 = vmatprep.subr.bf16.mxu0 0
      %1810 = vmatpush1.bf16.msra.mxu0 %v1789
      %1811 = vmatprep.subr.bf16.mxu0 0
      %1812 = vmatpush1.bf16.msra.mxu0 %v1790
      %1813 = vmatprep.subr.bf16.mxu0 0
      %1814 = vmatpush1.bf16.msra.mxu0 %v1791
      %1815 = vmatprep.subr.bf16.mxu0 0
      %1816 = vmatpush1.bf16.msra.mxu0 %v1792
      %1817 = vmatprep.subr.bf16.mxu0 0
      %1818 = vmatpush1.bf16.msra.mxu0 0
      %1819 = vmatprep.subr.bf16.mxu0 0
      %1820 = vmatpush1.bf16.msra.mxu0 0
      %1821 = vmatprep.subr.bf16.mxu0 0
      %1822 = vmatpush1.bf16.msra.mxu0 0
      %1823 = vmatprep.subr.bf16.mxu0 0
      %1824 = vmatpush1.bf16.msra.mxu0 0
      %1825 = vmatprep.subr.bf16.mxu0 0
      %1826 = vmatpush1.bf16.msra.mxu0 0
      %1827 = vmatprep.subr.bf16.mxu0 0
      %1828 = vmatpush1.bf16.msra.mxu0 0
      %1829 = vmatprep.subr.bf16.mxu0 0
      %1830 = vmatpush1.bf16.msra.mxu0 0
      %1831 = vmatprep.subr.bf16.mxu0 0
      %1832 = vmatpush1.bf16.msra.mxu0 0
      %1833 = vmatprep.mubr.bf16.mxu0 0
      %1834 = vmatmul.mubr.bf16.gmra.mrb[0].mxu0 %v915
      %v1835 = vpop.f32.mrb[0].mxu0
      %v1836 = vadd.f32 0.0, %v1835
      %v1837 = vpop.f32.mrb[0].mxu0
      %v1838 = vpop.f32.mrb[0].mxu0
      %v1839 = vadd.f32 0.0, %v1838
      %v1840 = vpop.f32.mrb[0].mxu0
      %1841 = vmatprep.mubr.bf16.mxu0 0
      %1842 = vmatmul.mubr.bf16.gmra.mrb[0].mxu0 %v916
      %v1843 = vpop.f32.mrb[0].mxu0
      %v1844 = vadd.f32 0.0, %v1843
      %v1845 = vpop.f32.mrb[0].mxu0
      %v1846 = vpop.f32.mrb[0].mxu0
      %v1847 = vadd.f32 0.0, %v1846
      %v1848 = vpop.f32.mrb[0].mxu0
      %1849 = vmatprep.mubr.bf16.mxu0 0
      %1850 = vmatmul.mubr.bf16.gmra.mrb[0].mxu0 %v917
      %v1851 = vpop.f32.mrb[0].mxu0
      %v1852 = vadd.f32 0.0, %v1851
      %v1853 = vpop.f32.mrb[0].mxu0
      %v1854 = vpop.f32.mrb[0].mxu0
      %v1855 = vadd.f32 0.0, %v1854
      %v1856 = vpop.f32.mrb[0].mxu0
      %1857 = vmatprep.mubr.bf16.mxu0 0
      %1858 = vmatmul.mubr.bf16.gmra.mrb[0].mxu0 %v918
      %v1859 = vpop.f32.mrb[0].mxu0
      %v1860 = vadd.f32 0.0, %v1859
      %v1861 = vpop.f32.mrb[0].mxu0
      %v1862 = vpop.f32.mrb[0].mxu0
      %v1863 = vadd.f32 0.0, %v1862
      %v1864 = vpop.f32.mrb[0].mxu0
      %1865 = vmatprep.mubr.bf16.mxu0 0
      %1866 = vmatmul.mubr.bf16.gmra.mrb[0].mxu0 %v919
      %v1867 = vpop.f32.mrb[0].mxu0
      %v1868 = vadd.f32 0.0, %v1867
      %v1869 = vpop.f32.mrb[0].mxu0
      %v1870 = vpop.f32.mrb[0].mxu0
      %v1871 = vadd.f32 0.0, %v1870
      %v1872 = vpop.f32.mrb[0].mxu0
      %1873 = vmatprep.mubr.bf16.mxu0 0
      %1874 = vmatmul.mubr.bf16.gmra.mrb[0].mxu0 %v920
      %v1875 = vpop.f32.mrb[0].mxu0
      %v1876 = vadd.f32 0.0, %v1875
      %v1877 = vpop.f32.mrb[0].mxu0
      %v1878 = vpop.f32.mrb[0].mxu0
      %v1879 = vadd.f32 0.0, %v1878
      %v1880 = vpop.f32.mrb[0].mxu0
      %1881 = vmatprep.mubr.bf16.mxu0 0
      %1882 = vmatmul.mubr.bf16.gmra.mrb[0].mxu0 %v921
      %v1883 = vpop.f32.mrb[0].mxu0
      %v1884 = vadd.f32 0.0, %v1883
      %v1885 = vpop.f32.mrb[0].mxu0
      %v1886 = vpop.f32.mrb[0].mxu0
      %v1887 = vadd.f32 0.0, %v1886
      %v1888 = vpop.f32.mrb[0].mxu0
      %1889 = vmatprep.mubr.bf16.mxu0 0
      %1890 = vmatmul.mubr.bf16.gmra.mrb[0].mxu0 %v922
      %v1891 = vpop.f32.mrb[0].mxu0
      %v1892 = vadd.f32 0.0, %v1891
      %v1893 = vpop.f32.mrb[0].mxu0
      %v1894 = vpop.f32.mrb[0].mxu0
      %v1895 = vadd.f32 0.0, %v1894
      %v1896 = vpop.f32.mrb[0].mxu0
      %1897 = vmatprep.mubr.bf16.mxu0 0
      %1898 = vmatmul.mubr.bf16.gmra.mrb[0].mxu0 %v923
      %v1899 = vpop.f32.mrb[0].mxu0
      %v1900 = vadd.f32 0.0, %v1899
      %v1901 = vpop.f32.mrb[0].mxu0
      %v1902 = vpop.f32.mrb[0].mxu0
      %v1903 = vadd.f32 0.0, %v1902
      %v1904 = vpop.f32.mrb[0].mxu0
      %1905 = vmatprep.mubr.bf16.mxu0 0
      %1906 = vmatmul.mubr.bf16.gmra.mrb[0].mxu0 %v924
      %v1907 = vpop.f32.mrb[0].mxu0
      %v1908 = vadd.f32 0.0, %v1907
      %v1909 = vpop.f32.mrb[0].mxu0
      %v1910 = vpop.f32.mrb[0].mxu0
      %v1911 = vadd.f32 0.0, %v1910
      %v1912 = vpop.f32.mrb[0].mxu0
      %1913 = vmatprep.mubr.bf16.mxu0 0
      %1914 = vmatmul.mubr.bf16.gmra.mrb[0].mxu0 %v925
      %v1915 = vpop.f32.mrb[0].mxu0
      %v1916 = vadd.f32 0.0, %v1915
      %v1917 = vpop.f32.mrb[0].mxu0
      %v1918 = vpop.f32.mrb[0].mxu0
      %v1919 = vadd.f32 0.0, %v1918
      %v1920 = vpop.f32.mrb[0].mxu0
      %1921 = vmatprep.mubr.bf16.mxu0 0
      %1922 = vmatmul.mubr.bf16.gmra.mrb[0].mxu0 %v926
      %v1923 = vpop.f32.mrb[0].mxu0
      %v1924 = vadd.f32 0.0, %v1923
      %v1925 = vpop.f32.mrb[0].mxu0
      %v1926 = vpop.f32.mrb[0].mxu0
      %v1927 = vadd.f32 0.0, %v1926
      %v1928 = vpop.f32.mrb[0].mxu0
      %1929 = vmatprep.mubr.bf16.mxu0 0
      %1930 = vmatmul.mubr.bf16.gmra.mrb[0].mxu0 %v927
      %v1931 = vpop.f32.mrb[0].mxu0
      %v1932 = vadd.f32 0.0, %v1931
      %v1933 = vpop.f32.mrb[0].mxu0
      %v1934 = vpop.f32.mrb[0].mxu0
      %v1935 = vadd.f32 0.0, %v1934
      %v1936 = vpop.f32.mrb[0].mxu0
      %1937 = vmatprep.mubr.bf16.mxu0 0
      %1938 = vmatmul.mubr.bf16.gmra.mrb[0].mxu0 %v928
      %v1939 = vpop.f32.mrb[0].mxu0
      %v1940 = vadd.f32 0.0, %v1939
      %v1941 = vpop.f32.mrb[0].mxu0
      %v1942 = vpop.f32.mrb[0].mxu0
      %v1943 = vadd.f32 0.0, %v1942
      %v1944 = vpop.f32.mrb[0].mxu0
      %1945 = vmatprep.mubr.bf16.mxu0 0
      %1946 = vmatmul.mubr.bf16.gmra.mrb[0].mxu0 %v929
      %v1947 = vpop.f32.mrb[0].mxu0
      %v1948 = vadd.f32 0.0, %v1947
      %v1949 = vpop.f32.mrb[0].mxu0
      %v1950 = vpop.f32.mrb[0].mxu0
      %v1951 = vadd.f32 0.0, %v1950
      %v1952 = vpop.f32.mrb[0].mxu0
      %1953 = vmatprep.mubr.bf16.mxu0 0
      %1954 = vmatmul.mubr.bf16.gmra.mrb[0].mxu0 %v930
      %v1955 = vpop.f32.mrb[0].mxu0
      %v1956 = vadd.f32 0.0, %v1955
      %v1957 = vpop.f32.mrb[0].mxu0
      %v1958 = vpop.f32.mrb[0].mxu0
      %v1959 = vadd.f32 0.0, %v1958
      %v1960 = vpop.f32.mrb[0].mxu0
      %1961 = vdwg.mxu0
      %v1962 = vadd.f32 %v1704, %v1836
      %v1963 = vadd.f32 %v1705, %v1839
      %v1964 = vadd.f32 %v1706, %v1844
      %v1965 = vadd.f32 %v1707, %v1847
      %v1966 = vadd.f32 %v1708, %v1852
      %v1967 = vadd.f32 %v1709, %v1855
      %v1968 = vadd.f32 %v1710, %v1860
      %v1969 = vadd.f32 %v1711, %v1863
      %v1970 = vadd.f32 %v1712, %v1868
      %v1971 = vadd.f32 %v1713, %v1871
      %v1972 = vadd.f32 %v1714, %v1876
      %v1973 = vadd.f32 %v1715, %v1879
      %v1974 = vadd.f32 %v1716, %v1884
      %v1975 = vadd.f32 %v1717, %v1887
      %v1976 = vadd.f32 %v1718, %v1892
      %v1977 = vadd.f32 %v1719, %v1895
      %v1978 = vadd.f32 %v1720, %v1900
      %v1979 = vadd.f32 %v1721, %v1903
      %v1980 = vadd.f32 %v1722, %v1908
      %v1981 = vadd.f32 %v1723, %v1911
      %v1982 = vadd.f32 %v1724, %v1916
      %v1983 = vadd.f32 %v1725, %v1919
      %v1984 = vadd.f32 %v1726, %v1924
      %v1985 = vadd.f32 %v1727, %v1927
      %v1986 = vadd.f32 %v1728, %v1932
      %v1987 = vadd.f32 %v1729, %v1935
      %v1988 = vadd.f32 %v1730, %v1940
      %v1989 = vadd.f32 %v1731, %v1943
      %v1990 = vadd.f32 %v1732, %v1948
      %v1991 = vadd.f32 %v1733, %v1951
      %v1992 = vadd.f32 %v1734, %v1956
      %v1993 = vadd.f32 %v1735, %v1959
      %s1994 = scalar_lea.vmem %s2, 256
      %v1995 = vld [vmem:[%s1994] sm:$0xf]
      %v1996 = vld [vmem:[%s1994 + $0x4] sm:$0xf]
      %v1997 = vld [vmem:[%s1994 + $0x8] sm:$0xf]
      %v1998 = vld [vmem:[%s1994 + $0xc] sm:$0xf]
      %v1999 = vld [vmem:[%s1994 + $0x10] sm:$0xf]
      %v2000 = vld [vmem:[%s1994 + $0x14] sm:$0xf]
      %v2001 = vld [vmem:[%s1994 + $0x18] sm:$0xf]
      %v2002 = vld [vmem:[%s1994 + $0x1c] sm:$0xf]
      %v2003 = vld [vmem:[%s1994 + $0x20] sm:$0xf]
      %v2004 = vld [vmem:[%s1994 + $0x24] sm:$0xf]
      %v2005 = vld [vmem:[%s1994 + $0x28] sm:$0xf]
      %v2006 = vld [vmem:[%s1994 + $0x2c] sm:$0xf]
      %v2007 = vld [vmem:[%s1994 + $0x30] sm:$0xf]
      %v2008 = vld [vmem:[%s1994 + $0x34] sm:$0xf]
      %v2009 = vld [vmem:[%s1994 + $0x38] sm:$0xf]
      %v2010 = vld [vmem:[%s1994 + $0x3c] sm:$0xf]
      %v2027 = vunpack.c.l.b16 %v1995
      %v2028 = vunpack.c.l.b16 %v1996
      %v2029 = vunpack.c.l.b16 %v1997
      %v2030 = vunpack.c.l.b16 %v1998
      %v2031 = vunpack.c.l.b16 %v1999
      %v2032 = vunpack.c.l.b16 %v2000
      %v2033 = vunpack.c.l.b16 %v2001
      %v2034 = vunpack.c.l.b16 %v2002
      %v2035 = vunpack.c.l.b16 %v2003
      %v2036 = vunpack.c.l.b16 %v2004
      %v2037 = vunpack.c.l.b16 %v2005
      %v2038 = vunpack.c.l.b16 %v2006
      %v2039 = vunpack.c.l.b16 %v2007
      %v2040 = vunpack.c.l.b16 %v2008
      %v2041 = vunpack.c.l.b16 %v2009
      %v2042 = vunpack.c.l.b16 %v2010
      %v2043 = vpack.c.b16 %v2028, %v2027
      %v2044 = vpack.c.b16 %v2030, %v2029
      %v2045 = vpack.c.b16 %v2032, %v2031
      %v2046 = vpack.c.b16 %v2034, %v2033
      %v2047 = vpack.c.b16 %v2036, %v2035
      %v2048 = vpack.c.b16 %v2038, %v2037
      %v2049 = vpack.c.b16 %v2040, %v2039
      %v2050 = vpack.c.b16 %v2042, %v2041
      %2059 = vmatprep.subr.bf16.mxu0 0
      %2060 = vmatpush1.bf16.msra.mxu0 %v2043
      %2061 = vmatprep.subr.bf16.mxu0 0
      %2062 = vmatpush1.bf16.msra.mxu0 %v2044
      %2063 = vmatprep.subr.bf16.mxu0 0
      %2064 = vmatpush1.bf16.msra.mxu0 %v2045
      %2065 = vmatprep.subr.bf16.mxu0 0
      %2066 = vmatpush1.bf16.msra.mxu0 %v2046
      %2067 = vmatprep.subr.bf16.mxu0 0
      %2068 = vmatpush1.bf16.msra.mxu0 %v2047
      %2069 = vmatprep.subr.bf16.mxu0 0
      %2070 = vmatpush1.bf16.msra.mxu0 %v2048
      %2071 = vmatprep.subr.bf16.mxu0 0
      %2072 = vmatpush1.bf16.msra.mxu0 %v2049
      %2073 = vmatprep.subr.bf16.mxu0 0
      %2074 = vmatpush1.bf16.msra.mxu0 %v2050
      %2075 = vmatprep.subr.bf16.mxu0 0
      %2076 = vmatpush1.bf16.msra.mxu0 0
      %2077 = vmatprep.subr.bf16.mxu0 0
      %2078 = vmatpush1.bf16.msra.mxu0 0
      %2079 = vmatprep.subr.bf16.mxu0 0
      %2080 = vmatpush1.bf16.msra.mxu0 0
      %2081 = vmatprep.subr.bf16.mxu0 0
      %2082 = vmatpush1.bf16.msra.mxu0 0
      %2083 = vmatprep.subr.bf16.mxu0 0
      %2084 = vmatpush1.bf16.msra.mxu0 0
      %2085 = vmatprep.subr.bf16.mxu0 0
      %2086 = vmatpush1.bf16.msra.mxu0 0
      %2087 = vmatprep.subr.bf16.mxu0 0
      %2088 = vmatpush1.bf16.msra.mxu0 0
      %2089 = vmatprep.subr.bf16.mxu0 0
      %2090 = vmatpush1.bf16.msra.mxu0 0
      %2091 = vmatprep.mubr.bf16.mxu0 0
      %2092 = vmatmul.mubr.bf16.gmra.mrb[0].mxu0 %v931
      %v2093 = vpop.f32.mrb[0].mxu0
      %v2094 = vadd.f32 0.0, %v2093
      %v2095 = vpop.f32.mrb[0].mxu0
      %v2096 = vpop.f32.mrb[0].mxu0
      %v2097 = vadd.f32 0.0, %v2096
      %v2098 = vpop.f32.mrb[0].mxu0
      %2099 = vmatprep.mubr.bf16.mxu0 0
      %2100 = vmatmul.mubr.bf16.gmra.mrb[0].mxu0 %v932
      %v2101 = vpop.f32.mrb[0].mxu0
      %v2102 = vadd.f32 0.0, %v2101
      %v2103 = vpop.f32.mrb[0].mxu0
      %v2104 = vpop.f32.mrb[0].mxu0
      %v2105 = vadd.f32 0.0, %v2104
      %v2106 = vpop.f32.mrb[0].mxu0
      %2107 = vmatprep.mubr.bf16.mxu0 0
      %2108 = vmatmul.mubr.bf16.gmra.mrb[0].mxu0 %v933
      %v2109 = vpop.f32.mrb[0].mxu0
      %v2110 = vadd.f32 0.0, %v2109
      %v2111 = vpop.f32.mrb[0].mxu0
      %v2112 = vpop.f32.mrb[0].mxu0
      %v2113 = vadd.f32 0.0, %v2112
      %v2114 = vpop.f32.mrb[0].mxu0
      %2115 = vmatprep.mubr.bf16.mxu0 0
      %2116 = vmatmul.mubr.bf16.gmra.mrb[0].mxu0 %v934
      %v2117 = vpop.f32.mrb[0].mxu0
      %v2118 = vadd.f32 0.0, %v2117
      %v2119 = vpop.f32.mrb[0].mxu0
      %v2120 = vpop.f32.mrb[0].mxu0
      %v2121 = vadd.f32 0.0, %v2120
      %v2122 = vpop.f32.mrb[0].mxu0
      %2123 = vmatprep.mubr.bf16.mxu0 0
      %2124 = vmatmul.mubr.bf16.gmra.mrb[0].mxu0 %v935
      %v2125 = vpop.f32.mrb[0].mxu0
      %v2126 = vadd.f32 0.0, %v2125
      %v2127 = vpop.f32.mrb[0].mxu0
      %v2128 = vpop.f32.mrb[0].mxu0
      %v2129 = vadd.f32 0.0, %v2128
      %v2130 = vpop.f32.mrb[0].mxu0
      %2131 = vmatprep.mubr.bf16.mxu0 0
      %2132 = vmatmul.mubr.bf16.gmra.mrb[0].mxu0 %v936
      %v2133 = vpop.f32.mrb[0].mxu0
      %v2134 = vadd.f32 0.0, %v2133
      %v2135 = vpop.f32.mrb[0].mxu0
      %v2136 = vpop.f32.mrb[0].mxu0
      %v2137 = vadd.f32 0.0, %v2136
      %v2138 = vpop.f32.mrb[0].mxu0
      %2139 = vmatprep.mubr.bf16.mxu0 0
      %2140 = vmatmul.mubr.bf16.gmra.mrb[0].mxu0 %v937
      %v2141 = vpop.f32.mrb[0].mxu0
      %v2142 = vadd.f32 0.0, %v2141
      %v2143 = vpop.f32.mrb[0].mxu0
      %v2144 = vpop.f32.mrb[0].mxu0
      %v2145 = vadd.f32 0.0, %v2144
      %v2146 = vpop.f32.mrb[0].mxu0
      %2147 = vmatprep.mubr.bf16.mxu0 0
      %2148 = vmatmul.mubr.bf16.gmra.mrb[0].mxu0 %v938
      %v2149 = vpop.f32.mrb[0].mxu0
      %v2150 = vadd.f32 0.0, %v2149
      %v2151 = vpop.f32.mrb[0].mxu0
      %v2152 = vpop.f32.mrb[0].mxu0
      %v2153 = vadd.f32 0.0, %v2152
      %v2154 = vpop.f32.mrb[0].mxu0
      %2155 = vmatprep.mubr.bf16.mxu0 0
      %2156 = vmatmul.mubr.bf16.gmra.mrb[0].mxu0 %v939
      %v2157 = vpop.f32.mrb[0].mxu0
      %v2158 = vadd.f32 0.0, %v2157
      %v2159 = vpop.f32.mrb[0].mxu0
      %v2160 = vpop.f32.mrb[0].mxu0
      %v2161 = vadd.f32 0.0, %v2160
      %v2162 = vpop.f32.mrb[0].mxu0
      %2163 = vmatprep.mubr.bf16.mxu0 0
      %2164 = vmatmul.mubr.bf16.gmra.mrb[0].mxu0 %v940
      %v2165 = vpop.f32.mrb[0].mxu0
      %v2166 = vadd.f32 0.0, %v2165
      %v2167 = vpop.f32.mrb[0].mxu0
      %v2168 = vpop.f32.mrb[0].mxu0
      %v2169 = vadd.f32 0.0, %v2168
      %v2170 = vpop.f32.mrb[0].mxu0
      %2171 = vmatprep.mubr.bf16.mxu0 0
      %2172 = vmatmul.mubr.bf16.gmra.mrb[0].mxu0 %v941
      %v2173 = vpop.f32.mrb[0].mxu0
      %v2174 = vadd.f32 0.0, %v2173
      %v2175 = vpop.f32.mrb[0].mxu0
      %v2176 = vpop.f32.mrb[0].mxu0
      %v2177 = vadd.f32 0.0, %v2176
      %v2178 = vpop.f32.mrb[0].mxu0
      %2179 = vmatprep.mubr.bf16.mxu0 0
      %2180 = vmatmul.mubr.bf16.gmra.mrb[0].mxu0 %v942
      %v2181 = vpop.f32.mrb[0].mxu0
      %v2182 = vadd.f32 0.0, %v2181
      %v2183 = vpop.f32.mrb[0].mxu0
      %v2184 = vpop.f32.mrb[0].mxu0
      %v2185 = vadd.f32 0.0, %v2184
      %v2186 = vpop.f32.mrb[0].mxu0
      %2187 = vmatprep.mubr.bf16.mxu0 0
      %2188 = vmatmul.mubr.bf16.gmra.mrb[0].mxu0 %v943
      %v2189 = vpop.f32.mrb[0].mxu0
      %v2190 = vadd.f32 0.0, %v2189
      %v2191 = vpop.f32.mrb[0].mxu0
      %v2192 = vpop.f32.mrb[0].mxu0
      %v2193 = vadd.f32 0.0, %v2192
      %v2194 = vpop.f32.mrb[0].mxu0
      %2195 = vmatprep.mubr.bf16.mxu0 0
      %2196 = vmatmul.mubr.bf16.gmra.mrb[0].mxu0 %v944
      %v2197 = vpop.f32.mrb[0].mxu0
      %v2198 = vadd.f32 0.0, %v2197
      %v2199 = vpop.f32.mrb[0].mxu0
      %v2200 = vpop.f32.mrb[0].mxu0
      %v2201 = vadd.f32 0.0, %v2200
      %v2202 = vpop.f32.mrb[0].mxu0
      %2203 = vmatprep.mubr.bf16.mxu0 0
      %2204 = vmatmul.mubr.bf16.gmra.mrb[0].mxu0 %v945
      %v2205 = vpop.f32.mrb[0].mxu0
      %v2206 = vadd.f32 0.0, %v2205
      %v2207 = vpop.f32.mrb[0].mxu0
      %v2208 = vpop.f32.mrb[0].mxu0
      %v2209 = vadd.f32 0.0, %v2208
      %v2210 = vpop.f32.mrb[0].mxu0
      %2211 = vmatprep.mubr.bf16.mxu0 0
      %2212 = vmatmul.mubr.bf16.gmra.mrb[0].mxu0 %v946
      %v2213 = vpop.f32.mrb[0].mxu0
      %v2214 = vadd.f32 0.0, %v2213
      %v2215 = vpop.f32.mrb[0].mxu0
      %v2216 = vpop.f32.mrb[0].mxu0
      %v2217 = vadd.f32 0.0, %v2216
      %v2218 = vpop.f32.mrb[0].mxu0
      %2219 = vdwg.mxu0
      %v2220 = vadd.f32 %v1962, %v2094
      %v2221 = vadd.f32 %v1963, %v2097
      %v2222 = vadd.f32 %v1964, %v2102
      %v2223 = vadd.f32 %v1965, %v2105
      %v2224 = vadd.f32 %v1966, %v2110
      %v2225 = vadd.f32 %v1967, %v2113
      %v2226 = vadd.f32 %v1968, %v2118
      %v2227 = vadd.f32 %v1969, %v2121
      %v2228 = vadd.f32 %v1970, %v2126
      %v2229 = vadd.f32 %v1971, %v2129
      %v2230 = vadd.f32 %v1972, %v2134
      %v2231 = vadd.f32 %v1973, %v2137
      %v2232 = vadd.f32 %v1974, %v2142
      %v2233 = vadd.f32 %v1975, %v2145
      %v2234 = vadd.f32 %v1976, %v2150
      %v2235 = vadd.f32 %v1977, %v2153
      %v2236 = vadd.f32 %v1978, %v2158
      %v2237 = vadd.f32 %v1979, %v2161
      %v2238 = vadd.f32 %v1980, %v2166
      %v2239 = vadd.f32 %v1981, %v2169
      %v2240 = vadd.f32 %v1982, %v2174
      %v2241 = vadd.f32 %v1983, %v2177
      %v2242 = vadd.f32 %v1984, %v2182
      %v2243 = vadd.f32 %v1985, %v2185
      %v2244 = vadd.f32 %v1986, %v2190
      %v2245 = vadd.f32 %v1987, %v2193
      %v2246 = vadd.f32 %v1988, %v2198
      %v2247 = vadd.f32 %v1989, %v2201
      %v2248 = vadd.f32 %v1990, %v2206
      %v2249 = vadd.f32 %v1991, %v2209
      %v2250 = vadd.f32 %v1992, %v2214
      %v2251 = vadd.f32 %v1993, %v2217
      %s2252 = scalar_lea.vmem %s2, 320
      %v2253 = vld [vmem:[%s2252] sm:$0xf]
      %v2254 = vld [vmem:[%s2252 + $0x4] sm:$0xf]
      %v2255 = vld [vmem:[%s2252 + $0x8] sm:$0xf]
      %v2256 = vld [vmem:[%s2252 + $0xc] sm:$0xf]
      %v2257 = vld [vmem:[%s2252 + $0x10] sm:$0xf]
      %v2258 = vld [vmem:[%s2252 + $0x14] sm:$0xf]
      %v2259 = vld [vmem:[%s2252 + $0x18] sm:$0xf]
      %v2260 = vld [vmem:[%s2252 + $0x1c] sm:$0xf]
      %v2261 = vld [vmem:[%s2252 + $0x20] sm:$0xf]
      %v2262 = vld [vmem:[%s2252 + $0x24] sm:$0xf]
      %v2263 = vld [vmem:[%s2252 + $0x28] sm:$0xf]
      %v2264 = vld [vmem:[%s2252 + $0x2c] sm:$0xf]
      %v2265 = vld [vmem:[%s2252 + $0x30] sm:$0xf]
      %v2266 = vld [vmem:[%s2252 + $0x34] sm:$0xf]
      %v2267 = vld [vmem:[%s2252 + $0x38] sm:$0xf]
      %v2268 = vld [vmem:[%s2252 + $0x3c] sm:$0xf]
      %v2285 = vunpack.c.l.b16 %v2253
      %v2286 = vunpack.c.l.b16 %v2254
      %v2287 = vunpack.c.l.b16 %v2255
      %v2288 = vunpack.c.l.b16 %v2256
      %v2289 = vunpack.c.l.b16 %v2257
      %v2290 = vunpack.c.l.b16 %v2258
      %v2291 = vunpack.c.l.b16 %v2259
      %v2292 = vunpack.c.l.b16 %v2260
      %v2293 = vunpack.c.l.b16 %v2261
      %v2294 = vunpack.c.l.b16 %v2262
      %v2295 = vunpack.c.l.b16 %v2263
      %v2296 = vunpack.c.l.b16 %v2264
      %v2297 = vunpack.c.l.b16 %v2265
      %v2298 = vunpack.c.l.b16 %v2266
      %v2299 = vunpack.c.l.b16 %v2267
      %v2300 = vunpack.c.l.b16 %v2268
      %v2301 = vpack.c.b16 %v2286, %v2285
      %v2302 = vpack.c.b16 %v2288, %v2287
      %v2303 = vpack.c.b16 %v2290, %v2289
      %v2304 = vpack.c.b16 %v2292, %v2291
      %v2305 = vpack.c.b16 %v2294, %v2293
      %v2306 = vpack.c.b16 %v2296, %v2295
      %v2307 = vpack.c.b16 %v2298, %v2297
      %v2308 = vpack.c.b16 %v2300, %v2299
      %2317 = vmatprep.subr.bf16.mxu0 0
      %2318 = vmatpush1.bf16.msra.mxu0 %v2301
      %2319 = vmatprep.subr.bf16.mxu0 0
      %2320 = vmatpush1.bf16.msra.mxu0 %v2302
      %2321 = vmatprep.subr.bf16.mxu0 0
      %2322 = vmatpush1.bf16.msra.mxu0 %v2303
      %2323 = vmatprep.subr.bf16.mxu0 0
      %2324 = vmatpush1.bf16.msra.mxu0 %v2304
      %2325 = vmatprep.subr.bf16.mxu0 0
      %2326 = vmatpush1.bf16.msra.mxu0 %v2305
      %2327 = vmatprep.subr.bf16.mxu0 0
      %2328 = vmatpush1.bf16.msra.mxu0 %v2306
      %2329 = vmatprep.subr.bf16.mxu0 0
      %2330 = vmatpush1.bf16.msra.mxu0 %v2307
      %2331 = vmatprep.subr.bf16.mxu0 0
      %2332 = vmatpush1.bf16.msra.mxu0 %v2308
      %2333 = vmatprep.subr.bf16.mxu0 0
      %2334 = vmatpush1.bf16.msra.mxu0 0
      %2335 = vmatprep.subr.bf16.mxu0 0
      %2336 = vmatpush1.bf16.msra.mxu0 0
      %2337 = vmatprep.subr.bf16.mxu0 0
      %2338 = vmatpush1.bf16.msra.mxu0 0
      %2339 = vmatprep.subr.bf16.mxu0 0
      %2340 = vmatpush1.bf16.msra.mxu0 0
      %2341 = vmatprep.subr.bf16.mxu0 0
      %2342 = vmatpush1.bf16.msra.mxu0 0
      %2343 = vmatprep.subr.bf16.mxu0 0
      %2344 = vmatpush1.bf16.msra.mxu0 0
      %2345 = vmatprep.subr.bf16.mxu0 0
      %2346 = vmatpush1.bf16.msra.mxu0 0
      %2347 = vmatprep.subr.bf16.mxu0 0
      %2348 = vmatpush1.bf16.msra.mxu0 0
      %2349 = vmatprep.mubr.bf16.mxu0 0
      %2350 = vmatmul.mubr.bf16.gmra.mrb[0].mxu0 %v947
      %v2351 = vpop.f32.mrb[0].mxu0
      %v2352 = vadd.f32 0.0, %v2351
      %v2353 = vpop.f32.mrb[0].mxu0
      %v2354 = vpop.f32.mrb[0].mxu0
      %v2355 = vadd.f32 0.0, %v2354
      %v2356 = vpop.f32.mrb[0].mxu0
      %2357 = vmatprep.mubr.bf16.mxu0 0
      %2358 = vmatmul.mubr.bf16.gmra.mrb[0].mxu0 %v948
      %v2359 = vpop.f32.mrb[0].mxu0
      %v2360 = vadd.f32 0.0, %v2359
      %v2361 = vpop.f32.mrb[0].mxu0
      %v2362 = vpop.f32.mrb[0].mxu0
      %v2363 = vadd.f32 0.0, %v2362
      %v2364 = vpop.f32.mrb[0].mxu0
      %2365 = vmatprep.mubr.bf16.mxu0 0
      %2366 = vmatmul.mubr.bf16.gmra.mrb[0].mxu0 %v949
      %v2367 = vpop.f32.mrb[0].mxu0
      %v2368 = vadd.f32 0.0, %v2367
      %v2369 = vpop.f32.mrb[0].mxu0
      %v2370 = vpop.f32.mrb[0].mxu0
      %v2371 = vadd.f32 0.0, %v2370
      %v2372 = vpop.f32.mrb[0].mxu0
      %2373 = vmatprep.mubr.bf16.mxu0 0
      %2374 = vmatmul.mubr.bf16.gmra.mrb[0].mxu0 %v950
      %v2375 = vpop.f32.mrb[0].mxu0
      %v2376 = vadd.f32 0.0, %v2375
      %v2377 = vpop.f32.mrb[0].mxu0
      %v2378 = vpop.f32.mrb[0].mxu0
      %v2379 = vadd.f32 0.0, %v2378
      %v2380 = vpop.f32.mrb[0].mxu0
      %2381 = vmatprep.mubr.bf16.mxu0 0
      %2382 = vmatmul.mubr.bf16.gmra.mrb[0].mxu0 %v951
      %v2383 = vpop.f32.mrb[0].mxu0
      %v2384 = vadd.f32 0.0, %v2383
      %v2385 = vpop.f32.mrb[0].mxu0
      %v2386 = vpop.f32.mrb[0].mxu0
      %v2387 = vadd.f32 0.0, %v2386
      %v2388 = vpop.f32.mrb[0].mxu0
      %2389 = vmatprep.mubr.bf16.mxu0 0
      %2390 = vmatmul.mubr.bf16.gmra.mrb[0].mxu0 %v952
      %v2391 = vpop.f32.mrb[0].mxu0
      %v2392 = vadd.f32 0.0, %v2391
      %v2393 = vpop.f32.mrb[0].mxu0
      %v2394 = vpop.f32.mrb[0].mxu0
      %v2395 = vadd.f32 0.0, %v2394
      %v2396 = vpop.f32.mrb[0].mxu0
      %2397 = vmatprep.mubr.bf16.mxu0 0
      %2398 = vmatmul.mubr.bf16.gmra.mrb[0].mxu0 %v953
      %v2399 = vpop.f32.mrb[0].mxu0
      %v2400 = vadd.f32 0.0, %v2399
      %v2401 = vpop.f32.mrb[0].mxu0
      %v2402 = vpop.f32.mrb[0].mxu0
      %v2403 = vadd.f32 0.0, %v2402
      %v2404 = vpop.f32.mrb[0].mxu0
      %2405 = vmatprep.mubr.bf16.mxu0 0
      %2406 = vmatmul.mubr.bf16.gmra.mrb[0].mxu0 %v954
      %v2407 = vpop.f32.mrb[0].mxu0
      %v2408 = vadd.f32 0.0, %v2407
      %v2409 = vpop.f32.mrb[0].mxu0
      %v2410 = vpop.f32.mrb[0].mxu0
      %v2411 = vadd.f32 0.0, %v2410
      %v2412 = vpop.f32.mrb[0].mxu0
      %2413 = vmatprep.mubr.bf16.mxu0 0
      %2414 = vmatmul.mubr.bf16.gmra.mrb[0].mxu0 %v955
      %v2415 = vpop.f32.mrb[0].mxu0
      %v2416 = vadd.f32 0.0, %v2415
      %v2417 = vpop.f32.mrb[0].mxu0
      %v2418 = vpop.f32.mrb[0].mxu0
      %v2419 = vadd.f32 0.0, %v2418
      %v2420 = vpop.f32.mrb[0].mxu0
      %2421 = vmatprep.mubr.bf16.mxu0 0
      %2422 = vmatmul.mubr.bf16.gmra.mrb[0].mxu0 %v956
      %v2423 = vpop.f32.mrb[0].mxu0
      %v2424 = vadd.f32 0.0, %v2423
      %v2425 = vpop.f32.mrb[0].mxu0
      %v2426 = vpop.f32.mrb[0].mxu0
      %v2427 = vadd.f32 0.0, %v2426
      %v2428 = vpop.f32.mrb[0].mxu0
      %2429 = vmatprep.mubr.bf16.mxu0 0
      %2430 = vmatmul.mubr.bf16.gmra.mrb[0].mxu0 %v957
      %v2431 = vpop.f32.mrb[0].mxu0
      %v2432 = vadd.f32 0.0, %v2431
      %v2433 = vpop.f32.mrb[0].mxu0
      %v2434 = vpop.f32.mrb[0].mxu0
      %v2435 = vadd.f32 0.0, %v2434
      %v2436 = vpop.f32.mrb[0].mxu0
      %2437 = vmatprep.mubr.bf16.mxu0 0
      %2438 = vmatmul.mubr.bf16.gmra.mrb[0].mxu0 %v958
      %v2439 = vpop.f32.mrb[0].mxu0
      %v2440 = vadd.f32 0.0, %v2439
      %v2441 = vpop.f32.mrb[0].mxu0
      %v2442 = vpop.f32.mrb[0].mxu0
      %v2443 = vadd.f32 0.0, %v2442
      %v2444 = vpop.f32.mrb[0].mxu0
      %2445 = vmatprep.mubr.bf16.mxu0 0
      %2446 = vmatmul.mubr.bf16.gmra.mrb[0].mxu0 %v959
      %v2447 = vpop.f32.mrb[0].mxu0
      %v2448 = vadd.f32 0.0, %v2447
      %v2449 = vpop.f32.mrb[0].mxu0
      %v2450 = vpop.f32.mrb[0].mxu0
      %v2451 = vadd.f32 0.0, %v2450
      %v2452 = vpop.f32.mrb[0].mxu0
      %2453 = vmatprep.mubr.bf16.mxu0 0
      %2454 = vmatmul.mubr.bf16.gmra.mrb[0].mxu0 %v960
      %v2455 = vpop.f32.mrb[0].mxu0
      %v2456 = vadd.f32 0.0, %v2455
      %v2457 = vpop.f32.mrb[0].mxu0
      %v2458 = vpop.f32.mrb[0].mxu0
      %v2459 = vadd.f32 0.0, %v2458
      %v2460 = vpop.f32.mrb[0].mxu0
      %2461 = vmatprep.mubr.bf16.mxu0 0
      %2462 = vmatmul.mubr.bf16.gmra.mrb[0].mxu0 %v961
      %v2463 = vpop.f32.mrb[0].mxu0
      %v2464 = vadd.f32 0.0, %v2463
      %v2465 = vpop.f32.mrb[0].mxu0
      %v2466 = vpop.f32.mrb[0].mxu0
      %v2467 = vadd.f32 0.0, %v2466
      %v2468 = vpop.f32.mrb[0].mxu0
      %2469 = vmatprep.mubr.bf16.mxu0 0
      %2470 = vmatmul.mubr.bf16.gmra.mrb[0].mxu0 %v962
      %v2471 = vpop.f32.mrb[0].mxu0
      %v2472 = vadd.f32 0.0, %v2471
      %v2473 = vpop.f32.mrb[0].mxu0
      %v2474 = vpop.f32.mrb[0].mxu0
      %v2475 = vadd.f32 0.0, %v2474
      %v2476 = vpop.f32.mrb[0].mxu0
      %2477 = vdwg.mxu0
      %v2478 = vadd.f32 %v2220, %v2352
      %v2479 = vadd.f32 %v2221, %v2355
      %v2480 = vadd.f32 %v2222, %v2360
      %v2481 = vadd.f32 %v2223, %v2363
      %v2482 = vadd.f32 %v2224, %v2368
      %v2483 = vadd.f32 %v2225, %v2371
      %v2484 = vadd.f32 %v2226, %v2376
      %v2485 = vadd.f32 %v2227, %v2379
      %v2486 = vadd.f32 %v2228, %v2384
      %v2487 = vadd.f32 %v2229, %v2387
      %v2488 = vadd.f32 %v2230, %v2392
      %v2489 = vadd.f32 %v2231, %v2395
      %v2490 = vadd.f32 %v2232, %v2400
      %v2491 = vadd.f32 %v2233, %v2403
      %v2492 = vadd.f32 %v2234, %v2408
      %v2493 = vadd.f32 %v2235, %v2411
      %v2494 = vadd.f32 %v2236, %v2416
      %v2495 = vadd.f32 %v2237, %v2419
      %v2496 = vadd.f32 %v2238, %v2424
      %v2497 = vadd.f32 %v2239, %v2427
      %v2498 = vadd.f32 %v2240, %v2432
      %v2499 = vadd.f32 %v2241, %v2435
      %v2500 = vadd.f32 %v2242, %v2440
      %v2501 = vadd.f32 %v2243, %v2443
      %v2502 = vadd.f32 %v2244, %v2448
      %v2503 = vadd.f32 %v2245, %v2451
      %v2504 = vadd.f32 %v2246, %v2456
      %v2505 = vadd.f32 %v2247, %v2459
      %v2506 = vadd.f32 %v2248, %v2464
      %v2507 = vadd.f32 %v2249, %v2467
      %v2508 = vadd.f32 %v2250, %v2472
      %v2509 = vadd.f32 %v2251, %v2475
      %s2510 = scalar_lea.vmem %s2, 384
      %v2511 = vld [vmem:[%s2510] sm:$0xf]
      %v2512 = vld [vmem:[%s2510 + $0x4] sm:$0xf]
      %v2513 = vld [vmem:[%s2510 + $0x8] sm:$0xf]
      %v2514 = vld [vmem:[%s2510 + $0xc] sm:$0xf]
      %v2515 = vld [vmem:[%s2510 + $0x10] sm:$0xf]
      %v2516 = vld [vmem:[%s2510 + $0x14] sm:$0xf]
      %v2517 = vld [vmem:[%s2510 + $0x18] sm:$0xf]
      %v2518 = vld [vmem:[%s2510 + $0x1c] sm:$0xf]
      %v2519 = vld [vmem:[%s2510 + $0x20] sm:$0xf]
      %v2520 = vld [vmem:[%s2510 + $0x24] sm:$0xf]
      %v2521 = vld [vmem:[%s2510 + $0x28] sm:$0xf]
      %v2522 = vld [vmem:[%s2510 + $0x2c] sm:$0xf]
      %v2523 = vld [vmem:[%s2510 + $0x30] sm:$0xf]
      %v2524 = vld [vmem:[%s2510 + $0x34] sm:$0xf]
      %v2525 = vld [vmem:[%s2510 + $0x38] sm:$0xf]
      %v2526 = vld [vmem:[%s2510 + $0x3c] sm:$0xf]
      %v2543 = vunpack.c.l.b16 %v2511
      %v2544 = vunpack.c.l.b16 %v2512
      %v2545 = vunpack.c.l.b16 %v2513
      %v2546 = vunpack.c.l.b16 %v2514
      %v2547 = vunpack.c.l.b16 %v2515
      %v2548 = vunpack.c.l.b16 %v2516
      %v2549 = vunpack.c.l.b16 %v2517
      %v2550 = vunpack.c.l.b16 %v2518
      %v2551 = vunpack.c.l.b16 %v2519
      %v2552 = vunpack.c.l.b16 %v2520
      %v2553 = vunpack.c.l.b16 %v2521
      %v2554 = vunpack.c.l.b16 %v2522
      %v2555 = vunpack.c.l.b16 %v2523
      %v2556 = vunpack.c.l.b16 %v2524
      %v2557 = vunpack.c.l.b16 %v2525
      %v2558 = vunpack.c.l.b16 %v2526
      %v2559 = vpack.c.b16 %v2544, %v2543
      %v2560 = vpack.c.b16 %v2546, %v2545
      %v2561 = vpack.c.b16 %v2548, %v2547
      %v2562 = vpack.c.b16 %v2550, %v2549
      %v2563 = vpack.c.b16 %v2552, %v2551
      %v2564 = vpack.c.b16 %v2554, %v2553
      %v2565 = vpack.c.b16 %v2556, %v2555
      %v2566 = vpack.c.b16 %v2558, %v2557
      %2575 = vmatprep.subr.bf16.mxu0 0
      %2576 = vmatpush1.bf16.msra.mxu0 %v2559
      %2577 = vmatprep.subr.bf16.mxu0 0
      %2578 = vmatpush1.bf16.msra.mxu0 %v2560
      %2579 = vmatprep.subr.bf16.mxu0 0
      %2580 = vmatpush1.bf16.msra.mxu0 %v2561
      %2581 = vmatprep.subr.bf16.mxu0 0
      %2582 = vmatpush1.bf16.msra.mxu0 %v2562
      %2583 = vmatprep.subr.bf16.mxu0 0
      %2584 = vmatpush1.bf16.msra.mxu0 %v2563
      %2585 = vmatprep.subr.bf16.mxu0 0
      %2586 = vmatpush1.bf16.msra.mxu0 %v2564
      %2587 = vmatprep.subr.bf16.mxu0 0
      %2588 = vmatpush1.bf16.msra.mxu0 %v2565
      %2589 = vmatprep.subr.bf16.mxu0 0
      %2590 = vmatpush1.bf16.msra.mxu0 %v2566
      %2591 = vmatprep.subr.bf16.mxu0 0
      %2592 = vmatpush1.bf16.msra.mxu0 0
      %2593 = vmatprep.subr.bf16.mxu0 0
      %2594 = vmatpush1.bf16.msra.mxu0 0
      %2595 = vmatprep.subr.bf16.mxu0 0
      %2596 = vmatpush1.bf16.msra.mxu0 0
      %2597 = vmatprep.subr.bf16.mxu0 0
      %2598 = vmatpush1.bf16.msra.mxu0 0
      %2599 = vmatprep.subr.bf16.mxu0 0
      %2600 = vmatpush1.bf16.msra.mxu0 0
      %2601 = vmatprep.subr.bf16.mxu0 0
      %2602 = vmatpush1.bf16.msra.mxu0 0
      %2603 = vmatprep.subr.bf16.mxu0 0
      %2604 = vmatpush1.bf16.msra.mxu0 0
      %2605 = vmatprep.subr.bf16.mxu0 0
      %2606 = vmatpush1.bf16.msra.mxu0 0
      %2607 = vmatprep.mubr.bf16.mxu0 0
      %2608 = vmatmul.mubr.bf16.gmra.mrb[0].mxu0 %v916
      %v2609 = vpop.f32.mrb[0].mxu0
      %v2610 = vadd.f32 0.0, %v2609
      %v2611 = vpop.f32.mrb[0].mxu0
      %v2612 = vpop.f32.mrb[0].mxu0
      %v2613 = vadd.f32 0.0, %v2612
      %v2614 = vpop.f32.mrb[0].mxu0
      %2615 = vmatprep.mubr.bf16.mxu0 0
      %2616 = vmatmul.mubr.bf16.gmra.mrb[0].mxu0 %v917
      %v2617 = vpop.f32.mrb[0].mxu0
      %v2618 = vadd.f32 0.0, %v2617
      %v2619 = vpop.f32.mrb[0].mxu0
      %v2620 = vpop.f32.mrb[0].mxu0
      %v2621 = vadd.f32 0.0, %v2620
      %v2622 = vpop.f32.mrb[0].mxu0
      %2623 = vmatprep.mubr.bf16.mxu0 0
      %2624 = vmatmul.mubr.bf16.gmra.mrb[0].mxu0 %v918
      %v2625 = vpop.f32.mrb[0].mxu0
      %v2626 = vadd.f32 0.0, %v2625
      %v2627 = vpop.f32.mrb[0].mxu0
      %v2628 = vpop.f32.mrb[0].mxu0
      %v2629 = vadd.f32 0.0, %v2628
      %v2630 = vpop.f32.mrb[0].mxu0
      %2631 = vmatprep.mubr.bf16.mxu0 0
      %2632 = vmatmul.mubr.bf16.gmra.mrb[0].mxu0 %v919
      %v2633 = vpop.f32.mrb[0].mxu0
      %v2634 = vadd.f32 0.0, %v2633
      %v2635 = vpop.f32.mrb[0].mxu0
      %v2636 = vpop.f32.mrb[0].mxu0
      %v2637 = vadd.f32 0.0, %v2636
      %v2638 = vpop.f32.mrb[0].mxu0
      %2639 = vmatprep.mubr.bf16.mxu0 0
      %2640 = vmatmul.mubr.bf16.gmra.mrb[0].mxu0 %v920
      %v2641 = vpop.f32.mrb[0].mxu0
      %v2642 = vadd.f32 0.0, %v2641
      %v2643 = vpop.f32.mrb[0].mxu0
      %v2644 = vpop.f32.mrb[0].mxu0
      %v2645 = vadd.f32 0.0, %v2644
      %v2646 = vpop.f32.mrb[0].mxu0
      %2647 = vmatprep.mubr.bf16.mxu0 0
      %2648 = vmatmul.mubr.bf16.gmra.mrb[0].mxu0 %v921
      %v2649 = vpop.f32.mrb[0].mxu0
      %v2650 = vadd.f32 0.0, %v2649
      %v2651 = vpop.f32.mrb[0].mxu0
      %v2652 = vpop.f32.mrb[0].mxu0
      %v2653 = vadd.f32 0.0, %v2652
      %v2654 = vpop.f32.mrb[0].mxu0
      %2655 = vmatprep.mubr.bf16.mxu0 0
      %2656 = vmatmul.mubr.bf16.gmra.mrb[0].mxu0 %v922
      %v2657 = vpop.f32.mrb[0].mxu0
      %v2658 = vadd.f32 0.0, %v2657
      %v2659 = vpop.f32.mrb[0].mxu0
      %v2660 = vpop.f32.mrb[0].mxu0
      %v2661 = vadd.f32 0.0, %v2660
      %v2662 = vpop.f32.mrb[0].mxu0
      %2663 = vmatprep.mubr.bf16.mxu0 0
      %2664 = vmatmul.mubr.bf16.gmra.mrb[0].mxu0 %v923
      %v2665 = vpop.f32.mrb[0].mxu0
      %v2666 = vadd.f32 0.0, %v2665
      %v2667 = vpop.f32.mrb[0].mxu0
      %v2668 = vpop.f32.mrb[0].mxu0
      %v2669 = vadd.f32 0.0, %v2668
      %v2670 = vpop.f32.mrb[0].mxu0
      %2671 = vmatprep.mubr.bf16.mxu0 0
      %2672 = vmatmul.mubr.bf16.gmra.mrb[0].mxu0 %v924
      %v2673 = vpop.f32.mrb[0].mxu0
      %v2674 = vadd.f32 0.0, %v2673
      %v2675 = vpop.f32.mrb[0].mxu0
      %v2676 = vpop.f32.mrb[0].mxu0
      %v2677 = vadd.f32 0.0, %v2676
      %v2678 = vpop.f32.mrb[0].mxu0
      %2679 = vmatprep.mubr.bf16.mxu0 0
      %2680 = vmatmul.mubr.bf16.gmra.mrb[0].mxu0 %v925
      %v2681 = vpop.f32.mrb[0].mxu0
      %v2682 = vadd.f32 0.0, %v2681
      %v2683 = vpop.f32.mrb[0].mxu0
      %v2684 = vpop.f32.mrb[0].mxu0
      %v2685 = vadd.f32 0.0, %v2684
      %v2686 = vpop.f32.mrb[0].mxu0
      %2687 = vmatprep.mubr.bf16.mxu0 0
      %2688 = vmatmul.mubr.bf16.gmra.mrb[0].mxu0 %v926
      %v2689 = vpop.f32.mrb[0].mxu0
      %v2690 = vadd.f32 0.0, %v2689
      %v2691 = vpop.f32.mrb[0].mxu0
      %v2692 = vpop.f32.mrb[0].mxu0
      %v2693 = vadd.f32 0.0, %v2692
      %v2694 = vpop.f32.mrb[0].mxu0
      %2695 = vmatprep.mubr.bf16.mxu0 0
      %2696 = vmatmul.mubr.bf16.gmra.mrb[0].mxu0 %v927
      %v2697 = vpop.f32.mrb[0].mxu0
      %v2698 = vadd.f32 0.0, %v2697
      %v2699 = vpop.f32.mrb[0].mxu0
      %v2700 = vpop.f32.mrb[0].mxu0
      %v2701 = vadd.f32 0.0, %v2700
      %v2702 = vpop.f32.mrb[0].mxu0
      %2703 = vmatprep.mubr.bf16.mxu0 0
      %2704 = vmatmul.mubr.bf16.gmra.mrb[0].mxu0 %v928
      %v2705 = vpop.f32.mrb[0].mxu0
      %v2706 = vadd.f32 0.0, %v2705
      %v2707 = vpop.f32.mrb[0].mxu0
      %v2708 = vpop.f32.mrb[0].mxu0
      %v2709 = vadd.f32 0.0, %v2708
      %v2710 = vpop.f32.mrb[0].mxu0
      %2711 = vmatprep.mubr.bf16.mxu0 0
      %2712 = vmatmul.mubr.bf16.gmra.mrb[0].mxu0 %v929
      %v2713 = vpop.f32.mrb[0].mxu0
      %v2714 = vadd.f32 0.0, %v2713
      %v2715 = vpop.f32.mrb[0].mxu0
      %v2716 = vpop.f32.mrb[0].mxu0
      %v2717 = vadd.f32 0.0, %v2716
      %v2718 = vpop.f32.mrb[0].mxu0
      %2719 = vmatprep.mubr.bf16.mxu0 0
      %2720 = vmatmul.mubr.bf16.gmra.mrb[0].mxu0 %v930
      %v2721 = vpop.f32.mrb[0].mxu0
      %v2722 = vadd.f32 0.0, %v2721
      %v2723 = vpop.f32.mrb[0].mxu0
      %v2724 = vpop.f32.mrb[0].mxu0
      %v2725 = vadd.f32 0.0, %v2724
      %v2726 = vpop.f32.mrb[0].mxu0
      %2727 = vmatprep.mubr.bf16.mxu0 0
      %2728 = vmatmul.mubr.bf16.gmra.mrb[0].mxu0 0
      %v2729 = vpop.f32.mrb[0].mxu0
      %v2730 = vadd.f32 0.0, %v2729
      %v2731 = vpop.f32.mrb[0].mxu0
      %v2732 = vpop.f32.mrb[0].mxu0
      %v2733 = vadd.f32 0.0, %v2732
      %v2734 = vpop.f32.mrb[0].mxu0
      %2735 = vdwg.mxu0
      %v2736 = vadd.f32 %v2478, %v2610
      %v2737 = vadd.f32 %v2479, %v2613
      %v2738 = vadd.f32 %v2480, %v2618
      %v2739 = vadd.f32 %v2481, %v2621
      %v2740 = vadd.f32 %v2482, %v2626
      %v2741 = vadd.f32 %v2483, %v2629
      %v2742 = vadd.f32 %v2484, %v2634
      %v2743 = vadd.f32 %v2485, %v2637
      %v2744 = vadd.f32 %v2486, %v2642
      %v2745 = vadd.f32 %v2487, %v2645
      %v2746 = vadd.f32 %v2488, %v2650
      %v2747 = vadd.f32 %v2489, %v2653
      %v2748 = vadd.f32 %v2490, %v2658
      %v2749 = vadd.f32 %v2491, %v2661
      %v2750 = vadd.f32 %v2492, %v2666
      %v2751 = vadd.f32 %v2493, %v2669
      %v2752 = vadd.f32 %v2494, %v2674
      %v2753 = vadd.f32 %v2495, %v2677
      %v2754 = vadd.f32 %v2496, %v2682
      %v2755 = vadd.f32 %v2497, %v2685
      %v2756 = vadd.f32 %v2498, %v2690
      %v2757 = vadd.f32 %v2499, %v2693
      %v2758 = vadd.f32 %v2500, %v2698
      %v2759 = vadd.f32 %v2501, %v2701
      %v2760 = vadd.f32 %v2502, %v2706
      %v2761 = vadd.f32 %v2503, %v2709
      %v2762 = vadd.f32 %v2504, %v2714
      %v2763 = vadd.f32 %v2505, %v2717
      %v2764 = vadd.f32 %v2506, %v2722
      %v2765 = vadd.f32 %v2507, %v2725
      %v2766 = vadd.f32 %v2508, %v2730
      %v2767 = vadd.f32 %v2509, %v2733
      %s2768 = scalar_lea.vmem %s2, 448
      %v2769 = vld [vmem:[%s2768] sm:$0xf]
      %v2770 = vld [vmem:[%s2768 + $0x4] sm:$0xf]
      %v2771 = vld [vmem:[%s2768 + $0x8] sm:$0xf]
      %v2772 = vld [vmem:[%s2768 + $0xc] sm:$0xf]
      %v2773 = vld [vmem:[%s2768 + $0x10] sm:$0xf]
      %v2774 = vld [vmem:[%s2768 + $0x14] sm:$0xf]
      %v2775 = vld [vmem:[%s2768 + $0x18] sm:$0xf]
      %v2776 = vld [vmem:[%s2768 + $0x1c] sm:$0xf]
      %v2777 = vld [vmem:[%s2768 + $0x20] sm:$0xf]
      %v2778 = vld [vmem:[%s2768 + $0x24] sm:$0xf]
      %v2779 = vld [vmem:[%s2768 + $0x28] sm:$0xf]
      %v2780 = vld [vmem:[%s2768 + $0x2c] sm:$0xf]
      %v2781 = vld [vmem:[%s2768 + $0x30] sm:$0xf]
      %v2782 = vld [vmem:[%s2768 + $0x34] sm:$0xf]
      %v2783 = vld [vmem:[%s2768 + $0x38] sm:$0xf]
      %v2784 = vld [vmem:[%s2768 + $0x3c] sm:$0xf]
      %v2801 = vunpack.c.l.b16 %v2769
      %v2802 = vunpack.c.l.b16 %v2770
      %v2803 = vunpack.c.l.b16 %v2771
      %v2804 = vunpack.c.l.b16 %v2772
      %v2805 = vunpack.c.l.b16 %v2773
      %v2806 = vunpack.c.l.b16 %v2774
      %v2807 = vunpack.c.l.b16 %v2775
      %v2808 = vunpack.c.l.b16 %v2776
      %v2809 = vunpack.c.l.b16 %v2777
      %v2810 = vunpack.c.l.b16 %v2778
      %v2811 = vunpack.c.l.b16 %v2779
      %v2812 = vunpack.c.l.b16 %v2780
      %v2813 = vunpack.c.l.b16 %v2781
      %v2814 = vunpack.c.l.b16 %v2782
      %v2815 = vunpack.c.l.b16 %v2783
      %v2816 = vunpack.c.l.b16 %v2784
      %v2817 = vpack.c.b16 %v2802, %v2801
      %v2818 = vpack.c.b16 %v2804, %v2803
      %v2819 = vpack.c.b16 %v2806, %v2805
      %v2820 = vpack.c.b16 %v2808, %v2807
      %v2821 = vpack.c.b16 %v2810, %v2809
      %v2822 = vpack.c.b16 %v2812, %v2811
      %v2823 = vpack.c.b16 %v2814, %v2813
      %v2824 = vpack.c.b16 %v2816, %v2815
      %2833 = vmatprep.subr.bf16.mxu0 0
      %2834 = vmatpush1.bf16.msra.mxu0 %v2817
      %2835 = vmatprep.subr.bf16.mxu0 0
      %2836 = vmatpush1.bf16.msra.mxu0 %v2818
      %2837 = vmatprep.subr.bf16.mxu0 0
      %2838 = vmatpush1.bf16.msra.mxu0 %v2819
      %2839 = vmatprep.subr.bf16.mxu0 0
      %2840 = vmatpush1.bf16.msra.mxu0 %v2820
      %2841 = vmatprep.subr.bf16.mxu0 0
      %2842 = vmatpush1.bf16.msra.mxu0 %v2821
      %2843 = vmatprep.subr.bf16.mxu0 0
      %2844 = vmatpush1.bf16.msra.mxu0 %v2822
      %2845 = vmatprep.subr.bf16.mxu0 0
      %2846 = vmatpush1.bf16.msra.mxu0 %v2823
      %2847 = vmatprep.subr.bf16.mxu0 0
      %2848 = vmatpush1.bf16.msra.mxu0 %v2824
      %2849 = vmatprep.subr.bf16.mxu0 0
      %2850 = vmatpush1.bf16.msra.mxu0 0
      %2851 = vmatprep.subr.bf16.mxu0 0
      %2852 = vmatpush1.bf16.msra.mxu0 0
      %2853 = vmatprep.subr.bf16.mxu0 0
      %2854 = vmatpush1.bf16.msra.mxu0 0
      %2855 = vmatprep.subr.bf16.mxu0 0
      %2856 = vmatpush1.bf16.msra.mxu0 0
      %2857 = vmatprep.subr.bf16.mxu0 0
      %2858 = vmatpush1.bf16.msra.mxu0 0
      %2859 = vmatprep.subr.bf16.mxu0 0
      %2860 = vmatpush1.bf16.msra.mxu0 0
      %2861 = vmatprep.subr.bf16.mxu0 0
      %2862 = vmatpush1.bf16.msra.mxu0 0
      %2863 = vmatprep.subr.bf16.mxu0 0
      %2864 = vmatpush1.bf16.msra.mxu0 0
      %2865 = vmatprep.mubr.bf16.mxu0 0
      %2866 = vmatmul.mubr.bf16.gmra.mrb[0].mxu0 %v932
      %v2867 = vpop.f32.mrb[0].mxu0
      %v2868 = vadd.f32 0.0, %v2867
      %v2869 = vpop.f32.mrb[0].mxu0
      %v2870 = vpop.f32.mrb[0].mxu0
      %v2871 = vadd.f32 0.0, %v2870
      %v2872 = vpop.f32.mrb[0].mxu0
      %2873 = vmatprep.mubr.bf16.mxu0 0
      %2874 = vmatmul.mubr.bf16.gmra.mrb[0].mxu0 %v933
      %v2875 = vpop.f32.mrb[0].mxu0
      %v2876 = vadd.f32 0.0, %v2875
      %v2877 = vpop.f32.mrb[0].mxu0
      %v2878 = vpop.f32.mrb[0].mxu0
      %v2879 = vadd.f32 0.0, %v2878
      %v2880 = vpop.f32.mrb[0].mxu0
      %2881 = vmatprep.mubr.bf16.mxu0 0
      %2882 = vmatmul.mubr.bf16.gmra.mrb[0].mxu0 %v934
      %v2883 = vpop.f32.mrb[0].mxu0
      %v2884 = vadd.f32 0.0, %v2883
      %v2885 = vpop.f32.mrb[0].mxu0
      %v2886 = vpop.f32.mrb[0].mxu0
      %v2887 = vadd.f32 0.0, %v2886
      %v2888 = vpop.f32.mrb[0].mxu0
      %2889 = vmatprep.mubr.bf16.mxu0 0
      %2890 = vmatmul.mubr.bf16.gmra.mrb[0].mxu0 %v935
      %v2891 = vpop.f32.mrb[0].mxu0
      %v2892 = vadd.f32 0.0, %v2891
      %v2893 = vpop.f32.mrb[0].mxu0
      %v2894 = vpop.f32.mrb[0].mxu0
      %v2895 = vadd.f32 0.0, %v2894
      %v2896 = vpop.f32.mrb[0].mxu0
      %2897 = vmatprep.mubr.bf16.mxu0 0
      %2898 = vmatmul.mubr.bf16.gmra.mrb[0].mxu0 %v936
      %v2899 = vpop.f32.mrb[0].mxu0
      %v2900 = vadd.f32 0.0, %v2899
      %v2901 = vpop.f32.mrb[0].mxu0
      %v2902 = vpop.f32.mrb[0].mxu0
      %v2903 = vadd.f32 0.0, %v2902
      %v2904 = vpop.f32.mrb[0].mxu0
      %2905 = vmatprep.mubr.bf16.mxu0 0
      %2906 = vmatmul.mubr.bf16.gmra.mrb[0].mxu0 %v937
      %v2907 = vpop.f32.mrb[0].mxu0
      %v2908 = vadd.f32 0.0, %v2907
      %v2909 = vpop.f32.mrb[0].mxu0
      %v2910 = vpop.f32.mrb[0].mxu0
      %v2911 = vadd.f32 0.0, %v2910
      %v2912 = vpop.f32.mrb[0].mxu0
      %2913 = vmatprep.mubr.bf16.mxu0 0
      %2914 = vmatmul.mubr.bf16.gmra.mrb[0].mxu0 %v938
      %v2915 = vpop.f32.mrb[0].mxu0
      %v2916 = vadd.f32 0.0, %v2915
      %v2917 = vpop.f32.mrb[0].mxu0
      %v2918 = vpop.f32.mrb[0].mxu0
      %v2919 = vadd.f32 0.0, %v2918
      %v2920 = vpop.f32.mrb[0].mxu0
      %2921 = vmatprep.mubr.bf16.mxu0 0
      %2922 = vmatmul.mubr.bf16.gmra.mrb[0].mxu0 %v939
      %v2923 = vpop.f32.mrb[0].mxu0
      %v2924 = vadd.f32 0.0, %v2923
      %v2925 = vpop.f32.mrb[0].mxu0
      %v2926 = vpop.f32.mrb[0].mxu0
      %v2927 = vadd.f32 0.0, %v2926
      %v2928 = vpop.f32.mrb[0].mxu0
      %2929 = vmatprep.mubr.bf16.mxu0 0
      %2930 = vmatmul.mubr.bf16.gmra.mrb[0].mxu0 %v940
      %v2931 = vpop.f32.mrb[0].mxu0
      %v2932 = vadd.f32 0.0, %v2931
      %v2933 = vpop.f32.mrb[0].mxu0
      %v2934 = vpop.f32.mrb[0].mxu0
      %v2935 = vadd.f32 0.0, %v2934
      %v2936 = vpop.f32.mrb[0].mxu0
      %2937 = vmatprep.mubr.bf16.mxu0 0
      %2938 = vmatmul.mubr.bf16.gmra.mrb[0].mxu0 %v941
      %v2939 = vpop.f32.mrb[0].mxu0
      %v2940 = vadd.f32 0.0, %v2939
      %v2941 = vpop.f32.mrb[0].mxu0
      %v2942 = vpop.f32.mrb[0].mxu0
      %v2943 = vadd.f32 0.0, %v2942
      %v2944 = vpop.f32.mrb[0].mxu0
      %2945 = vmatprep.mubr.bf16.mxu0 0
      %2946 = vmatmul.mubr.bf16.gmra.mrb[0].mxu0 %v942
      %v2947 = vpop.f32.mrb[0].mxu0
      %v2948 = vadd.f32 0.0, %v2947
      %v2949 = vpop.f32.mrb[0].mxu0
      %v2950 = vpop.f32.mrb[0].mxu0
      %v2951 = vadd.f32 0.0, %v2950
      %v2952 = vpop.f32.mrb[0].mxu0
      %2953 = vmatprep.mubr.bf16.mxu0 0
      %2954 = vmatmul.mubr.bf16.gmra.mrb[0].mxu0 %v943
      %v2955 = vpop.f32.mrb[0].mxu0
      %v2956 = vadd.f32 0.0, %v2955
      %v2957 = vpop.f32.mrb[0].mxu0
      %v2958 = vpop.f32.mrb[0].mxu0
      %v2959 = vadd.f32 0.0, %v2958
      %v2960 = vpop.f32.mrb[0].mxu0
      %2961 = vmatprep.mubr.bf16.mxu0 0
      %2962 = vmatmul.mubr.bf16.gmra.mrb[0].mxu0 %v944
      %v2963 = vpop.f32.mrb[0].mxu0
      %v2964 = vadd.f32 0.0, %v2963
      %v2965 = vpop.f32.mrb[0].mxu0
      %v2966 = vpop.f32.mrb[0].mxu0
      %v2967 = vadd.f32 0.0, %v2966
      %v2968 = vpop.f32.mrb[0].mxu0
      %2969 = vmatprep.mubr.bf16.mxu0 0
      %2970 = vmatmul.mubr.bf16.gmra.mrb[0].mxu0 %v945
      %v2971 = vpop.f32.mrb[0].mxu0
      %v2972 = vadd.f32 0.0, %v2971
      %v2973 = vpop.f32.mrb[0].mxu0
      %v2974 = vpop.f32.mrb[0].mxu0
      %v2975 = vadd.f32 0.0, %v2974
      %v2976 = vpop.f32.mrb[0].mxu0
      %2977 = vmatprep.mubr.bf16.mxu0 0
      %2978 = vmatmul.mubr.bf16.gmra.mrb[0].mxu0 %v946
      %v2979 = vpop.f32.mrb[0].mxu0
      %v2980 = vadd.f32 0.0, %v2979
      %v2981 = vpop.f32.mrb[0].mxu0
      %v2982 = vpop.f32.mrb[0].mxu0
      %v2983 = vadd.f32 0.0, %v2982
      %v2984 = vpop.f32.mrb[0].mxu0
      %2985 = vmatprep.mubr.bf16.mxu0 0
      %2986 = vmatmul.mubr.bf16.gmra.mrb[0].mxu0 0
      %v2987 = vpop.f32.mrb[0].mxu0
      %v2988 = vadd.f32 0.0, %v2987
      %v2989 = vpop.f32.mrb[0].mxu0
      %v2990 = vpop.f32.mrb[0].mxu0
      %v2991 = vadd.f32 0.0, %v2990
      %v2992 = vpop.f32.mrb[0].mxu0
      %2993 = vdwg.mxu0
      %v2994 = vadd.f32 %v2736, %v2868
      %v2995 = vadd.f32 %v2737, %v2871
      %v2996 = vadd.f32 %v2738, %v2876
      %v2997 = vadd.f32 %v2739, %v2879
      %v2998 = vadd.f32 %v2740, %v2884
      %v2999 = vadd.f32 %v2741, %v2887
      %v3000 = vadd.f32 %v2742, %v2892
      %v3001 = vadd.f32 %v2743, %v2895
      %v3002 = vadd.f32 %v2744, %v2900
      %v3003 = vadd.f32 %v2745, %v2903
      %v3004 = vadd.f32 %v2746, %v2908
      %v3005 = vadd.f32 %v2747, %v2911
      %v3006 = vadd.f32 %v2748, %v2916
      %v3007 = vadd.f32 %v2749, %v2919
      %v3008 = vadd.f32 %v2750, %v2924
      %v3009 = vadd.f32 %v2751, %v2927
      %v3010 = vadd.f32 %v2752, %v2932
      %v3011 = vadd.f32 %v2753, %v2935
      %v3012 = vadd.f32 %v2754, %v2940
      %v3013 = vadd.f32 %v2755, %v2943
      %v3014 = vadd.f32 %v2756, %v2948
      %v3015 = vadd.f32 %v2757, %v2951
      %v3016 = vadd.f32 %v2758, %v2956
      %v3017 = vadd.f32 %v2759, %v2959
      %v3018 = vadd.f32 %v2760, %v2964
      %v3019 = vadd.f32 %v2761, %v2967
      %v3020 = vadd.f32 %v2762, %v2972
      %v3021 = vadd.f32 %v2763, %v2975
      %v3022 = vadd.f32 %v2764, %v2980
      %v3023 = vadd.f32 %v2765, %v2983
      %v3024 = vadd.f32 %v2766, %v2988
      %v3025 = vadd.f32 %v2767, %v2991
      %s3026 = scalar_lea.vmem %s2, 512
      %v3027 = vld [vmem:[%s3026] sm:$0xf]
      %v3028 = vld [vmem:[%s3026 + $0x4] sm:$0xf]
      %v3029 = vld [vmem:[%s3026 + $0x8] sm:$0xf]
      %v3030 = vld [vmem:[%s3026 + $0xc] sm:$0xf]
      %v3031 = vld [vmem:[%s3026 + $0x10] sm:$0xf]
      %v3032 = vld [vmem:[%s3026 + $0x14] sm:$0xf]
      %v3033 = vld [vmem:[%s3026 + $0x18] sm:$0xf]
      %v3034 = vld [vmem:[%s3026 + $0x1c] sm:$0xf]
      %v3035 = vld [vmem:[%s3026 + $0x20] sm:$0xf]
      %v3036 = vld [vmem:[%s3026 + $0x24] sm:$0xf]
      %v3037 = vld [vmem:[%s3026 + $0x28] sm:$0xf]
      %v3038 = vld [vmem:[%s3026 + $0x2c] sm:$0xf]
      %v3039 = vld [vmem:[%s3026 + $0x30] sm:$0xf]
      %v3040 = vld [vmem:[%s3026 + $0x34] sm:$0xf]
      %v3041 = vld [vmem:[%s3026 + $0x38] sm:$0xf]
      %v3042 = vld [vmem:[%s3026 + $0x3c] sm:$0xf]
      %v3059 = vunpack.c.l.b16 %v3027
      %v3060 = vunpack.c.l.b16 %v3028
      %v3061 = vunpack.c.l.b16 %v3029
      %v3062 = vunpack.c.l.b16 %v3030
      %v3063 = vunpack.c.l.b16 %v3031
      %v3064 = vunpack.c.l.b16 %v3032
      %v3065 = vunpack.c.l.b16 %v3033
      %v3066 = vunpack.c.l.b16 %v3034
      %v3067 = vunpack.c.l.b16 %v3035
      %v3068 = vunpack.c.l.b16 %v3036
      %v3069 = vunpack.c.l.b16 %v3037
      %v3070 = vunpack.c.l.b16 %v3038
      %v3071 = vunpack.c.l.b16 %v3039
      %v3072 = vunpack.c.l.b16 %v3040
      %v3073 = vunpack.c.l.b16 %v3041
      %v3074 = vunpack.c.l.b16 %v3042
      %v3075 = vpack.c.b16 %v3060, %v3059
      %v3076 = vpack.c.b16 %v3062, %v3061
      %v3077 = vpack.c.b16 %v3064, %v3063
      %v3078 = vpack.c.b16 %v3066, %v3065
      %v3079 = vpack.c.b16 %v3068, %v3067
      %v3080 = vpack.c.b16 %v3070, %v3069
      %v3081 = vpack.c.b16 %v3072, %v3071
      %v3082 = vpack.c.b16 %v3074, %v3073
      %3091 = vmatprep.subr.bf16.mxu0 0
      %3092 = vmatpush1.bf16.msra.mxu0 %v3075
      %3093 = vmatprep.subr.bf16.mxu0 0
      %3094 = vmatpush1.bf16.msra.mxu0 %v3076
      %3095 = vmatprep.subr.bf16.mxu0 0
      %3096 = vmatpush1.bf16.msra.mxu0 %v3077
      %3097 = vmatprep.subr.bf16.mxu0 0
      %3098 = vmatpush1.bf16.msra.mxu0 %v3078
      %3099 = vmatprep.subr.bf16.mxu0 0
      %3100 = vmatpush1.bf16.msra.mxu0 %v3079
      %3101 = vmatprep.subr.bf16.mxu0 0
      %3102 = vmatpush1.bf16.msra.mxu0 %v3080
      %3103 = vmatprep.subr.bf16.mxu0 0
      %3104 = vmatpush1.bf16.msra.mxu0 %v3081
      %3105 = vmatprep.subr.bf16.mxu0 0
      %3106 = vmatpush1.bf16.msra.mxu0 %v3082
      %3107 = vmatprep.subr.bf16.mxu0 0
      %3108 = vmatpush1.bf16.msra.mxu0 0
      %3109 = vmatprep.subr.bf16.mxu0 0
      %3110 = vmatpush1.bf16.msra.mxu0 0
      %3111 = vmatprep.subr.bf16.mxu0 0
      %3112 = vmatpush1.bf16.msra.mxu0 0
      %3113 = vmatprep.subr.bf16.mxu0 0
      %3114 = vmatpush1.bf16.msra.mxu0 0
      %3115 = vmatprep.subr.bf16.mxu0 0
      %3116 = vmatpush1.bf16.msra.mxu0 0
      %3117 = vmatprep.subr.bf16.mxu0 0
      %3118 = vmatpush1.bf16.msra.mxu0 0
      %3119 = vmatprep.subr.bf16.mxu0 0
      %3120 = vmatpush1.bf16.msra.mxu0 0
      %3121 = vmatprep.subr.bf16.mxu0 0
      %3122 = vmatpush1.bf16.msra.mxu0 0
      %3123 = vmatprep.mubr.bf16.mxu0 0
      %3124 = vmatmul.mubr.bf16.gmra.mrb[0].mxu0 %v948
      %v3125 = vpop.f32.mrb[0].mxu0
      %v3126 = vadd.f32 0.0, %v3125
      %v3127 = vpop.f32.mrb[0].mxu0
      %v3128 = vpop.f32.mrb[0].mxu0
      %v3129 = vadd.f32 0.0, %v3128
      %v3130 = vpop.f32.mrb[0].mxu0
      %3131 = vmatprep.mubr.bf16.mxu0 0
      %3132 = vmatmul.mubr.bf16.gmra.mrb[0].mxu0 %v949
      %v3133 = vpop.f32.mrb[0].mxu0
      %v3134 = vadd.f32 0.0, %v3133
      %v3135 = vpop.f32.mrb[0].mxu0
      %v3136 = vpop.f32.mrb[0].mxu0
      %v3137 = vadd.f32 0.0, %v3136
      %v3138 = vpop.f32.mrb[0].mxu0
      %3139 = vmatprep.mubr.bf16.mxu0 0
      %3140 = vmatmul.mubr.bf16.gmra.mrb[0].mxu0 %v950
      %v3141 = vpop.f32.mrb[0].mxu0
      %v3142 = vadd.f32 0.0, %v3141
      %v3143 = vpop.f32.mrb[0].mxu0
      %v3144 = vpop.f32.mrb[0].mxu0
      %v3145 = vadd.f32 0.0, %v3144
      %v3146 = vpop.f32.mrb[0].mxu0
      %3147 = vmatprep.mubr.bf16.mxu0 0
      %3148 = vmatmul.mubr.bf16.gmra.mrb[0].mxu0 %v951
      %v3149 = vpop.f32.mrb[0].mxu0
      %v3150 = vadd.f32 0.0, %v3149
      %v3151 = vpop.f32.mrb[0].mxu0
      %v3152 = vpop.f32.mrb[0].mxu0
      %v3153 = vadd.f32 0.0, %v3152
      %v3154 = vpop.f32.mrb[0].mxu0
      %3155 = vmatprep.mubr.bf16.mxu0 0
      %3156 = vmatmul.mubr.bf16.gmra.mrb[0].mxu0 %v952
      %v3157 = vpop.f32.mrb[0].mxu0
      %v3158 = vadd.f32 0.0, %v3157
      %v3159 = vpop.f32.mrb[0].mxu0
      %v3160 = vpop.f32.mrb[0].mxu0
      %v3161 = vadd.f32 0.0, %v3160
      %v3162 = vpop.f32.mrb[0].mxu0
      %3163 = vmatprep.mubr.bf16.mxu0 0
      %3164 = vmatmul.mubr.bf16.gmra.mrb[0].mxu0 %v953
      %v3165 = vpop.f32.mrb[0].mxu0
      %v3166 = vadd.f32 0.0, %v3165
      %v3167 = vpop.f32.mrb[0].mxu0
      %v3168 = vpop.f32.mrb[0].mxu0
      %v3169 = vadd.f32 0.0, %v3168
      %v3170 = vpop.f32.mrb[0].mxu0
      %3171 = vmatprep.mubr.bf16.mxu0 0
      %3172 = vmatmul.mubr.bf16.gmra.mrb[0].mxu0 %v954
      %v3173 = vpop.f32.mrb[0].mxu0
      %v3174 = vadd.f32 0.0, %v3173
      %v3175 = vpop.f32.mrb[0].mxu0
      %v3176 = vpop.f32.mrb[0].mxu0
      %v3177 = vadd.f32 0.0, %v3176
      %v3178 = vpop.f32.mrb[0].mxu0
      %3179 = vmatprep.mubr.bf16.mxu0 0
      %3180 = vmatmul.mubr.bf16.gmra.mrb[0].mxu0 %v955
      %v3181 = vpop.f32.mrb[0].mxu0
      %v3182 = vadd.f32 0.0, %v3181
      %v3183 = vpop.f32.mrb[0].mxu0
      %v3184 = vpop.f32.mrb[0].mxu0
      %v3185 = vadd.f32 0.0, %v3184
      %v3186 = vpop.f32.mrb[0].mxu0
      %3187 = vmatprep.mubr.bf16.mxu0 0
      %3188 = vmatmul.mubr.bf16.gmra.mrb[0].mxu0 %v956
      %v3189 = vpop.f32.mrb[0].mxu0
      %v3190 = vadd.f32 0.0, %v3189
      %v3191 = vpop.f32.mrb[0].mxu0
      %v3192 = vpop.f32.mrb[0].mxu0
      %v3193 = vadd.f32 0.0, %v3192
      %v3194 = vpop.f32.mrb[0].mxu0
      %3195 = vmatprep.mubr.bf16.mxu0 0
      %3196 = vmatmul.mubr.bf16.gmra.mrb[0].mxu0 %v957
      %v3197 = vpop.f32.mrb[0].mxu0
      %v3198 = vadd.f32 0.0, %v3197
      %v3199 = vpop.f32.mrb[0].mxu0
      %v3200 = vpop.f32.mrb[0].mxu0
      %v3201 = vadd.f32 0.0, %v3200
      %v3202 = vpop.f32.mrb[0].mxu0
      %3203 = vmatprep.mubr.bf16.mxu0 0
      %3204 = vmatmul.mubr.bf16.gmra.mrb[0].mxu0 %v958
      %v3205 = vpop.f32.mrb[0].mxu0
      %v3206 = vadd.f32 0.0, %v3205
      %v3207 = vpop.f32.mrb[0].mxu0
      %v3208 = vpop.f32.mrb[0].mxu0
      %v3209 = vadd.f32 0.0, %v3208
      %v3210 = vpop.f32.mrb[0].mxu0
      %3211 = vmatprep.mubr.bf16.mxu0 0
      %3212 = vmatmul.mubr.bf16.gmra.mrb[0].mxu0 %v959
      %v3213 = vpop.f32.mrb[0].mxu0
      %v3214 = vadd.f32 0.0, %v3213
      %v3215 = vpop.f32.mrb[0].mxu0
      %v3216 = vpop.f32.mrb[0].mxu0
      %v3217 = vadd.f32 0.0, %v3216
      %v3218 = vpop.f32.mrb[0].mxu0
      %3219 = vmatprep.mubr.bf16.mxu0 0
      %3220 = vmatmul.mubr.bf16.gmra.mrb[0].mxu0 %v960
      %v3221 = vpop.f32.mrb[0].mxu0
      %v3222 = vadd.f32 0.0, %v3221
      %v3223 = vpop.f32.mrb[0].mxu0
      %v3224 = vpop.f32.mrb[0].mxu0
      %v3225 = vadd.f32 0.0, %v3224
      %v3226 = vpop.f32.mrb[0].mxu0
      %3227 = vmatprep.mubr.bf16.mxu0 0
      %3228 = vmatmul.mubr.bf16.gmra.mrb[0].mxu0 %v961
      %v3229 = vpop.f32.mrb[0].mxu0
      %v3230 = vadd.f32 0.0, %v3229
      %v3231 = vpop.f32.mrb[0].mxu0
      %v3232 = vpop.f32.mrb[0].mxu0
      %v3233 = vadd.f32 0.0, %v3232
      %v3234 = vpop.f32.mrb[0].mxu0
      %3235 = vmatprep.mubr.bf16.mxu0 0
      %3236 = vmatmul.mubr.bf16.gmra.mrb[0].mxu0 %v962
      %v3237 = vpop.f32.mrb[0].mxu0
      %v3238 = vadd.f32 0.0, %v3237
      %v3239 = vpop.f32.mrb[0].mxu0
      %v3240 = vpop.f32.mrb[0].mxu0
      %v3241 = vadd.f32 0.0, %v3240
      %v3242 = vpop.f32.mrb[0].mxu0
      %3243 = vmatprep.mubr.bf16.mxu0 0
      %3244 = vmatmul.mubr.bf16.gmra.mrb[0].mxu0 0
      %v3245 = vpop.f32.mrb[0].mxu0
      %v3246 = vadd.f32 0.0, %v3245
      %v3247 = vpop.f32.mrb[0].mxu0
      %v3248 = vpop.f32.mrb[0].mxu0
      %v3249 = vadd.f32 0.0, %v3248
      %v3250 = vpop.f32.mrb[0].mxu0
      %3251 = vdwg.mxu0
      %v3252 = vadd.f32 %v2994, %v3126
      %v3253 = vadd.f32 %v2995, %v3129
      %v3254 = vadd.f32 %v2996, %v3134
      %v3255 = vadd.f32 %v2997, %v3137
      %v3256 = vadd.f32 %v2998, %v3142
      %v3257 = vadd.f32 %v2999, %v3145
      %v3258 = vadd.f32 %v3000, %v3150
      %v3259 = vadd.f32 %v3001, %v3153
      %v3260 = vadd.f32 %v3002, %v3158
      %v3261 = vadd.f32 %v3003, %v3161
      %v3262 = vadd.f32 %v3004, %v3166
      %v3263 = vadd.f32 %v3005, %v3169
      %v3264 = vadd.f32 %v3006, %v3174
      %v3265 = vadd.f32 %v3007, %v3177
      %v3266 = vadd.f32 %v3008, %v3182
      %v3267 = vadd.f32 %v3009, %v3185
      %v3268 = vadd.f32 %v3010, %v3190
      %v3269 = vadd.f32 %v3011, %v3193
      %v3270 = vadd.f32 %v3012, %v3198
      %v3271 = vadd.f32 %v3013, %v3201
      %v3272 = vadd.f32 %v3014, %v3206
      %v3273 = vadd.f32 %v3015, %v3209
      %v3274 = vadd.f32 %v3016, %v3214
      %v3275 = vadd.f32 %v3017, %v3217
      %v3276 = vadd.f32 %v3018, %v3222
      %v3277 = vadd.f32 %v3019, %v3225
      %v3278 = vadd.f32 %v3020, %v3230
      %v3279 = vadd.f32 %v3021, %v3233
      %v3280 = vadd.f32 %v3022, %v3238
      %v3281 = vadd.f32 %v3023, %v3241
      %v3282 = vadd.f32 %v3024, %v3246
      %v3283 = vadd.f32 %v3025, %v3249
      %v3284 = vld [vmem:[%s4] sm:$0x1]
      %v3286 = vlaneseq
      %v3287 = vshrl.u32 %v3286, 7
      %v3288 = vsub.s32 0, %v3287
      %v3289 = vrot.slane %v3284, %v3288
      %v3291 = vadd.f32 %v3252, %v3289
      %v3292 = vadd.f32 %v3253, %v3289
      %v3293 = vadd.f32 %v3254, %v3289
      %v3294 = vadd.f32 %v3255, %v3289
      %v3295 = vadd.f32 %v3256, %v3289
      %v3296 = vadd.f32 %v3257, %v3289
      %v3297 = vadd.f32 %v3258, %v3289
      %v3298 = vadd.f32 %v3259, %v3289
      %v3299 = vadd.f32 %v3260, %v3289
      %v3300 = vadd.f32 %v3261, %v3289
      %v3301 = vadd.f32 %v3262, %v3289
      %v3302 = vadd.f32 %v3263, %v3289
      %v3303 = vadd.f32 %v3264, %v3289
      %v3304 = vadd.f32 %v3265, %v3289
      %v3305 = vadd.f32 %v3266, %v3289
      %v3306 = vadd.f32 %v3267, %v3289
      %v3307 = vadd.f32 %v3268, %v3289
      %v3308 = vadd.f32 %v3269, %v3289
      %v3309 = vadd.f32 %v3270, %v3289
      %v3310 = vadd.f32 %v3271, %v3289
      %v3311 = vadd.f32 %v3272, %v3289
      %v3312 = vadd.f32 %v3273, %v3289
      %v3313 = vadd.f32 %v3274, %v3289
      %v3314 = vadd.f32 %v3275, %v3289
      %v3315 = vadd.f32 %v3276, %v3289
      %v3316 = vadd.f32 %v3277, %v3289
      %v3317 = vadd.f32 %v3278, %v3289
      %v3318 = vadd.f32 %v3279, %v3289
      %v3319 = vadd.f32 %v3280, %v3289
      %v3320 = vadd.f32 %v3281, %v3289
      %v3321 = vadd.f32 %v3282, %v3289
      %v3322 = vadd.f32 %v3283, %v3289
      %v3323 = vmax.f32 %v3291, 0.0
      %v3324 = vmax.f32 %v3292, 0.0
      %v3325 = vmax.f32 %v3293, 0.0
      %v3326 = vmax.f32 %v3294, 0.0
      %v3327 = vmax.f32 %v3295, 0.0
      %v3328 = vmax.f32 %v3296, 0.0
      %v3329 = vmax.f32 %v3297, 0.0
      %v3330 = vmax.f32 %v3298, 0.0
      %v3331 = vmax.f32 %v3299, 0.0
      %v3332 = vmax.f32 %v3300, 0.0
      %v3333 = vmax.f32 %v3301, 0.0
      %v3334 = vmax.f32 %v3302, 0.0
      %v3335 = vmax.f32 %v3303, 0.0
      %v3336 = vmax.f32 %v3304, 0.0
      %v3337 = vmax.f32 %v3305, 0.0
      %v3338 = vmax.f32 %v3306, 0.0
      %v3339 = vmax.f32 %v3307, 0.0
      %v3340 = vmax.f32 %v3308, 0.0
      %v3341 = vmax.f32 %v3309, 0.0
      %v3342 = vmax.f32 %v3310, 0.0
      %v3343 = vmax.f32 %v3311, 0.0
      %v3344 = vmax.f32 %v3312, 0.0
      %v3345 = vmax.f32 %v3313, 0.0
      %v3346 = vmax.f32 %v3314, 0.0
      %v3347 = vmax.f32 %v3315, 0.0
      %v3348 = vmax.f32 %v3316, 0.0
      %v3349 = vmax.f32 %v3317, 0.0
      %v3350 = vmax.f32 %v3318, 0.0
      %v3351 = vmax.f32 %v3319, 0.0
      %v3352 = vmax.f32 %v3320, 0.0
      %v3353 = vmax.f32 %v3321, 0.0
      %v3354 = vmax.f32 %v3322, 0.0
      %3355 = vst [vmem:[%s224] sm:$0xff] %v3323
      %3356 = vst [vmem:[%s224 + $0x8] sm:$0xff] %v3324
      %3357 = vst [vmem:[%s224 + $0x10] sm:$0xff] %v3325
      %3358 = vst [vmem:[%s224 + $0x18] sm:$0xff] %v3326
      %3359 = vst [vmem:[%s224 + $0x20] sm:$0xff] %v3327
      %3360 = vst [vmem:[%s224 + $0x28] sm:$0xff] %v3328
      %3361 = vst [vmem:[%s224 + $0x30] sm:$0xff] %v3329
      %3362 = vst [vmem:[%s224 + $0x38] sm:$0xff] %v3330
      %3363 = vst [vmem:[%s224 + $0x40] sm:$0xff] %v3331
      %3364 = vst [vmem:[%s224 + $0x48] sm:$0xff] %v3332
      %3365 = vst [vmem:[%s224 + $0x50] sm:$0xff] %v3333
      %3366 = vst [vmem:[%s224 + $0x58] sm:$0xff] %v3334
      %3367 = vst [vmem:[%s224 + $0x60] sm:$0xff] %v3335
      %3368 = vst [vmem:[%s224 + $0x68] sm:$0xff] %v3336
      %3369 = vst [vmem:[%s224 + $0x70] sm:$0xff] %v3337
      %3370 = vst [vmem:[%s224 + $0x78] sm:$0xff] %v3338
      %3371 = vst [vmem:[%s224 + $0x80] sm:$0xff] %v3339
      %3372 = vst [vmem:[%s224 + $0x88] sm:$0xff] %v3340
      %3373 = vst [vmem:[%s224 + $0x90] sm:$0xff] %v3341
      %3374 = vst [vmem:[%s224 + $0x98] sm:$0xff] %v3342
      %3375 = vst [vmem:[%s224 + $0xa0] sm:$0xff] %v3343
      %3376 = vst [vmem:[%s224 + $0xa8] sm:$0xff] %v3344
      %3377 = vst [vmem:[%s224 + $0xb0] sm:$0xff] %v3345
      %3378 = vst [vmem:[%s224 + $0xb8] sm:$0xff] %v3346
      %3379 = vst [vmem:[%s224 + $0xc0] sm:$0xff] %v3347
      %3380 = vst [vmem:[%s224 + $0xc8] sm:$0xff] %v3348
      %3381 = vst [vmem:[%s224 + $0xd0] sm:$0xff] %v3349
      %3382 = vst [vmem:[%s224 + $0xd8] sm:$0xff] %v3350
      %3383 = vst [vmem:[%s224 + $0xe0] sm:$0xff] %v3351
      %3384 = vst [vmem:[%s224 + $0xe8] sm:$0xff] %v3352
      %3385 = vst [vmem:[%s224 + $0xf0] sm:$0xff] %v3353
      %3386 = vst [vmem:[%s224 + $0xf8] sm:$0xff] %v3354
      %p3387 = scmp.lt.s32.totalorder %s16, 1
      %s3388 = scalar_select %p3387, %s16, 1
      %s3389 = smul.addr %s3388, 32
      %s3390 = smul.addr %s3389, 8
      %s3391 = scalar_lea.vmem %s5, %s3390
      // Predicated region
      $region41: #{basic_block_pallas.1} parent=39 // pred_check
        %p3392 = pneg %p144
      $region42: #{basic_block_pallas.1} parent=39 // pred_check_branch
        %3394 = sbr.rel (%p3392) target = $region44
      $region43: #{basic_block_pallas.1} parent=39 // pred_region
        _
      $region44: #{basic_block_pallas.1} parent=39 // pred_fallthru
        _
    $region40: #{basic_block_pallas.1} parent=5 // pred_fallthru
      _
    %p3395 = scmp.le.s32.totalorder 2, %s11
    // Predicated region
    $region45: #{basic_block_pallas.1} parent=5 // pred_check
      %p3396 = pneg %p3395
    $region46: #{basic_block_pallas.1} parent=5 // pred_check_branch
      %3398 = sbr.rel (%p3396) target = $region48
    $region47: #{basic_block_pallas.1} parent=5 // pred_region
      %s3399 = ssub.s32 %s11, 2
      // Predicated region
      $region49: #{basic_block_pallas.1} parent=47 // pred_check
        %p3400 = pneg %p150
      $region50: #{basic_block_pallas.1} parent=47 // pred_check_branch
        %3402 = sbr.rel (%p3400) target = $region52
      $region51: #{basic_block_pallas.1} parent=47 // pred_region
        %p3403 = scmp.lt.s32.totalorder %s17, 1
        %s3404 = scalar_select %p3403, %s17, 1
        %s3405 = smul.addr %s3404, 32
        %s3406 = smul.addr %s3405, 8
        %s3407 = scalar_lea.vmem %s5, %s3406
      $region52: #{basic_block_pallas.1} parent=47 // pred_fallthru
        _
    $region48: #{basic_block_pallas.1} parent=5 // pred_fallthru
      _
  $region6: #{basic_block_pallas.1} parent=0 // loop_footer
    %s15 = sadd.s32 1, %s11
  $region7: #{basic_block_pallas.1} parent=0 // loop_footer_branch
    %10 = sbr.rel target = $region3
  $region8: #{basic_block_pallas.1} parent=0 // loop_exit
    _

</llo_original>
